<compile_context>
chip_gen: v6e
topology: v6e:2x2x1
jax: 0.10.0
libtpu: 0.0.40
codegen_flags: <defaults>
</compile_context>

<pallas_src>
import math

import jax
import jax.numpy as jnp
from jax.experimental import pallas as pl
from jax.experimental.pallas import tpu as pltpu


_INV_SQRT2 = 0.7071067811865476

# Abramowitz & Stegun 7.1.26 erf approximation constants (max abs error 1.5e-7).
_ERF_A1 = 0.254829592
_ERF_A2 = -0.284496736
_ERF_A3 = 1.421413741
_ERF_A4 = -1.453152027
_ERF_A5 = 1.061405429
_ERF_P = 0.3275911


def _erf_approx(x):
    """erf(x) via A&S 7.1.26 (exp + polynomial only; max abs error 1.5e-7)."""
    a = jnp.abs(x)
    t = 1.0 / (1.0 + _ERF_P * a)
    poly = t * (_ERF_A1 + t * (_ERF_A2 + t * (_ERF_A3 + t * (_ERF_A4 + t * _ERF_A5))))
    e = 1.0 - poly * jnp.exp(-(a * a))
    return jnp.where(x < 0.0, -e, e)


def _gelu_exact(x):
    # Matches torch.nn.GELU() default (erf-based, not the tanh approximation).
    return 0.5 * x * (1.0 + _erf_approx(x * _INV_SQRT2))


def _mlp_kernel(x_ref, w1_ref, b1_ref, w2_ref, b2_ref, o_ref, acc_ref):
    """One (token-tile, hidden-tile) grid step of fc1 -> GELU -> fc2."""
    j = pl.program_id(1)  # hidden-dim tile index (reduction axis, innermost)

    @pl.when(j == 0)
    def _init():
        acc_ref[...] = jnp.zeros_like(acc_ref)

    # fc1 slab: native-dtype operands on the MXU, f32 accumulation.
    h = jnp.dot(x_ref[...], w1_ref[...], preferred_element_type=jnp.float32)
    h = h + b1_ref[...].astype(jnp.float32)
    h = _gelu_exact(h)
    # drop1 / norm(None) / drop2 are identities (p=0.0, nn.Identity).

    # fc2 partial product accumulated into the (tm, Dout) f32 scratch.
    acc_ref[...] += jnp.dot(h.astype(w2_ref.dtype), w2_ref[...],
                            preferred_element_type=jnp.float32)

    @pl.when(j == pl.num_programs(1) - 1)
    def _finalize():
        o_ref[...] = (acc_ref[...] + b2_ref[...].astype(jnp.float32)).astype(o_ref.dtype)


def _round_up(v, m):
    return ((v + m - 1) // m) * m


def _physical_vmem_bytes():
    try:
        return int(pltpu.get_tpu_info().vmem_capacity_bytes)
    except Exception:
        return 64 * 1024 * 1024  # conservative (v7x-sized) fallback


def _block_spec(shape, index_map, *, single_buffer=False):
    """BlockSpec; force a single pipeline buffer for constant-index (resident) operands."""
    if single_buffer:
        try:
            return pl.BlockSpec(shape, index_map, pipeline_mode=pl.Buffered(1))
        except Exception:  # pipeline_mode / Buffered unavailable -> default buffering
            pass
    return pl.BlockSpec(shape, index_map)


def _vmem_needed(tm, th, din, dout, itemsize, weights_single_buffered):
    wbuf = 1 if weights_single_buffered else 2
    return (2 * tm * din * itemsize                           # x tile (double-buffered)
            + 2 * tm * dout * itemsize                        # out tile (double-buffered)
            + wbuf * (din * th + th + th * dout) * itemsize   # w1, b1, w2 slabs
            + dout * itemsize                                 # b2 (single-buffered)
            + tm * dout * 4                                   # f32 accumulator scratch
            + tm * th * 4)                                    # live f32 fc1/GELU slab


def _pick_h_tile(tm, din, hidden, dout, itemsize, budget):
    # Prefer fully resident weights (single H step, single-buffered weight specs).
    if _vmem_needed(tm, hidden, din, dout, itemsize, True) <= budget:
        return hidden
    if hidden % 128 != 0:
        return hidden  # no lane-aligned divisor; rely on the vmem limit instead
    best = 128
    th = 128
    while th < hidden:
        if hidden % th == 0 and _vmem_needed(tm, th, din, dout, itemsize, False) <= budget:
            best = th
        th += 128
    return best


def mlp_pallas(x, w1, b1, w2, b2, *, tm=None, th=None, cast_operands_to_bf16=False):
    """Vision-Transformer MLP forward: fc1 -> exact GELU -> fc2.

    x:  (..., Din)
    w1: (Din, H),  b1: (H,)     (fc1 nn.Linear weight stored pre-transposed)
    w2: (H, Dout), b2: (Dout,)  (fc2 nn.Linear weight stored pre-transposed)
    Returns (..., Dout) in x.dtype.
    """
    *lead, din = x.shape
    hidden = w1.shape[1]
    dout = w2.shape[1]
    m = int(math.prod(lead)) if lead else 1
    out_dtype = x.dtype

    if cast_operands_to_bf16 and x.dtype == jnp.float32:
        # Opt-in: bf16-native MXU throughput on v6e/v7x; f32 accumulation is kept.
        x, w1, b1, w2, b2 = (a.astype(jnp.bfloat16) for a in (x, w1, b1, w2, b2))

    itemsize = x.dtype.itemsize
    phys_vmem = _physical_vmem_bytes()
    budget = int(0.85 * phys_vmem)  # leave headroom for Mosaic internal scratch

    # Sublane packing alignment: 8 for f32, 16 for bf16, 32 for int8/fp8.
    align = 8 * max(1, 4 // itemsize)

    if tm is None:
        tm = 256 if phys_vmem <= 64 * 1024 * 1024 else 512  # v7x vs v5e/v6e default
    tm = max(align, _round_up(min(int(tm), _round_up(m, align)), align))
    num_m_tiles = pl.cdiv(m, tm)
    # Keep the token-tile count even so both v7x TensorCores stay busy.
    if num_m_tiles > 1 and num_m_tiles % 2 == 1:
        tm_alt = _round_up(pl.cdiv(m, num_m_tiles + 1), align)
        if tm_alt >= align and pl.cdiv(m, tm_alt) % 2 == 0:
            tm = tm_alt
            num_m_tiles = pl.cdiv(m, tm)

    if th is None:
        th = _pick_h_tile(tm, din, hidden, dout, itemsize, budget)
    th = int(min(th, hidden))
    if hidden % th != 0 or (th != hidden and th % 128 != 0):
        th = hidden  # the reduction axis must not have a ragged / unaligned tail
    num_h_tiles = hidden // th
    weights_resident = num_h_tiles == 1  # constant index_map -> safe to single-buffer

    x2d = x.reshape(m, din)
    b1_2d = b1.reshape(1, hidden)
    b2_2d = b2.reshape(1, dout)

    needed = _vmem_needed(tm, th, din, dout, itemsize, weights_resident)
    vmem_limit = int(min(budget, max(int(needed * 1.25) + (4 << 20), 32 << 20)))

    cost = pl.CostEstimate(
        flops=2 * m * (din * hidden + hidden * dout),
        transcendentals=m * hidden,  # one exp per GELU element
        bytes_accessed=itemsize * (
            m * din + m * dout
            + (1 if weights_resident else num_m_tiles) * (din * hidden + hidden + hidden * dout)
            + dout),
    )

    def _run(use_single_buffer):
        sb_weights = weights_resident and use_single_buffer
        grid_spec = pltpu.PrefetchScalarGridSpec(
            num_scalar_prefetch=0,
            grid=(num_m_tiles, num_h_tiles),  # H (reduction) axis last / innermost
            in_specs=[
                pl.BlockSpec((tm, din), lambda i, j: (i, 0)),                          # x tile
                _block_spec((din, th), lambda i, j: (0, j), single_buffer=sb_weights),  # w1
                _block_spec((1, th), lambda i, j: (0, j), single_buffer=sb_weights),    # b1
                _block_spec((th, dout), lambda i, j: (j, 0), single_buffer=sb_weights), # w2
                _block_spec((1, dout), lambda i, j: (0, 0),
                            single_buffer=use_single_buffer),                           # b2
            ],
            out_specs=pl.BlockSpec((tm, dout), lambda i, j: (i, 0)),
            scratch_shapes=[pltpu.VMEM((tm, dout), jnp.float32)],
        )
        return pl.pallas_call(
            _mlp_kernel,
            out_shape=jax.ShapeDtypeStruct((m, dout), out_dtype),
            grid_spec=grid_spec,
            compiler_params=pltpu.CompilerParams(
                dimension_semantics=("parallel", "arbitrary"),
                vmem_limit_bytes=vmem_limit,
            ),
            cost_estimate=cost,
        )(x2d, w1, b1_2d, w2, b2_2d)

    try:
        out2d = _run(True)
    except Exception:
        # If single-buffer pipeline_mode is rejected in this environment, fall back
        # to default (double) buffering — identical semantics.
        out2d = _run(False)

    return out2d.reshape(*lead, dout)


def mlp_reference(x, w1, b1, w2, b2):
    """Pure-JAX f32 reference matching torch Mlp forward (exact erf GELU)."""
    xf = x.astype(jnp.float32)
    h = xf @ w1.astype(jnp.float32) + b1.astype(jnp.float32)
    h = 0.5 * h * (1.0 + jax.lax.erf(h * _INV_SQRT2))
    return h @ w2.astype(jnp.float32) + b2.astype(jnp.float32)


if __name__ == "__main__":
    # Mlp(in_features=128, hidden_features=256, out_features=128, bias=True, drop=0.0)
    B, S = 2, 256
    Din, H, Dout = 128, 256, 128

    key = jax.random.PRNGKey(0)
    kx, kw1, kb1, kw2, kb2 = jax.random.split(key, 5)

    x = jax.random.normal(kx, (B, S, Din), dtype=jnp.float32)
    # nn.Linear weights (fc1: (H, Din), fc2: (Dout, H)) stored pre-transposed as
    # (Din, H) / (H, Dout) for row-major MXU matmuls.
    w1 = jax.random.normal(kw1, (Din, H), dtype=jnp.float32) * 0.05
    b1 = jax.random.normal(kb1, (H,), dtype=jnp.float32) * 0.05
    w2 = jax.random.normal(kw2, (H, Dout), dtype=jnp.float32) * 0.05
    b2 = jax.random.normal(kb2, (Dout,), dtype=jnp.float32) * 0.05

    ref = mlp_reference(x, w1, b1, w2, b2)

    # 1) f32 path, auto tiling (weights resident, single H tile).
    #    Tolerance allows for reduced internal MXU precision of f32 matmuls at
    #    default precision on some TPU generations.
    out = jax.block_until_ready(mlp_pallas(x, w1, b1, w2, b2))
    assert out.shape == (B, S, Dout)
    assert jnp.allclose(out, ref, atol=2e-2, rtol=2e-2), "f32 mismatch vs reference"

    # 2) Forced hidden-dim tiling (exercises the f32 accumulator / pl.when path).
    out_tiled = jax.block_until_ready(mlp_pallas(x, w1, b1, w2, b2, tm=128, th=128))
    assert out_tiled.shape == (B, S, Dout)
    assert jnp.allclose(out_tiled, ref, atol=2e-2, rtol=2e-2), "H-tiled mismatch vs reference"

    # 3) bf16 operands (MXU-native inputs, f32 accumulation).
    xb, w1b, b1b, w2b, b2b = (a.astype(jnp.bfloat16) for a in (x, w1, b1, w2, b2))
    out_bf16 = jax.block_until_ready(mlp_pallas(xb, w1b, b1b, w2b, b2b))
    assert out_bf16.shape == (B, S, Dout)
    assert jnp.allclose(out_bf16.astype(jnp.float32), ref, atol=6e-2, rtol=6e-2), \
        "bf16 mismatch vs reference"

    # 4) Opt-in bf16 cast of f32 operands (v6e/v7x throughput lever); output stays f32.
    out_cast = jax.block_until_ready(
        mlp_pallas(x, w1, b1, w2, b2, cast_operands_to_bf16=True))
    assert out_cast.dtype == x.dtype
    assert jnp.allclose(out_cast, ref, atol=6e-2, rtol=6e-2), "bf16-cast mismatch vs reference"

    print("KERNEL_OK")
</pallas_src>

<mosaic_0001>
module attributes {stable_mosaic.version = 11 : i64} {
  func.func @_mlp_kernel(%arg0: i32, %arg1: i32, %arg2: memref<256x128xf32, #tpu.memory_space<vmem>>, %arg3: memref<128x256xf32, #tpu.memory_space<vmem>>, %arg4: memref<1x256xf32, #tpu.memory_space<vmem>>, %arg5: memref<256x128xf32, #tpu.memory_space<vmem>>, %arg6: memref<1x128xf32, #tpu.memory_space<vmem>>, %arg7: memref<256x128xf32, #tpu.memory_space<vmem>>, %arg8: memref<256x128xf32, #tpu.memory_space<vmem>>) attributes {dimension_semantics = [#tpu.dimension_semantics<parallel>, #tpu.dimension_semantics<arbitrary>], iteration_bounds = array<i64: 2, 1>, scalar_prefetch = 0 : i64, scratch_operands = 1 : i64, tpu.core_type = #tpu.core_type<tc>, window_params = [{transform_indices = @transform_0, window_bounds = array<i64: 256, 128>}, {pipeline_mode = #tpu.pipeline_mode<synchronous>, transform_indices = @transform_1, window_bounds = array<i64: 128, 256>}, {pipeline_mode = #tpu.pipeline_mode<synchronous>, transform_indices = @transform_2, window_bounds = array<i64: 1, 256>}, {pipeline_mode = #tpu.pipeline_mode<synchronous>, transform_indices = @transform_3, window_bounds = array<i64: 256, 128>}, {pipeline_mode = #tpu.pipeline_mode<synchronous>, transform_indices = @transform_4, window_bounds = array<i64: 1, 128>}, {transform_indices = @transform_5, window_bounds = array<i64: 256, 128>}]} {
    %c0_i32 = arith.constant 0 : i32
    %0 = arith.cmpi eq, %arg1, %c0_i32 : i32
    %1 = arith.extui %0 : i1 to i32
    %c0_i32_0 = arith.constant 0 : i32
    %2 = arith.cmpi ne, %1, %c0_i32_0 : i32
    scf.if %2 {
      %cst_30 = arith.constant 0.000000e+00 : f32
      %57 = vector.broadcast %cst_30 : f32 to vector<256x128xf32>
      %c0_31 = arith.constant 0 : index
      %c0_32 = arith.constant 0 : index
      %58 = vector.load %arg8[%c0_31, %c0_32] : memref<256x128xf32, #tpu.memory_space<vmem>>, vector<256x128xf32>
      tpu.vector_store %arg8[%c0_31, %c0_32], %57 {strides = array<i32>} : memref<256x128xf32, #tpu.memory_space<vmem>>, vector<256x128xf32>,
    } else {
    }
    %c0 = arith.constant 0 : index
    %c0_1 = arith.constant 0 : index
    %3 = vector.load %arg2[%c0, %c0_1] : memref<256x128xf32, #tpu.memory_space<vmem>>, vector<256x128xf32>
    %c0_2 = arith.constant 0 : index
    %c0_3 = arith.constant 0 : index
    %4 = vector.load %arg3[%c0_2, %c0_3] : memref<128x256xf32, #tpu.memory_space<vmem>>, vector<128x256xf32>
    %cst = arith.constant dense<0.000000e+00> : vector<256x256xf32>
    %5 = tpu.matmul %3, %4, %cst {dimension_numbers = #tpu.dot_dimension_numbers<[1], [0], [0], [1], [0, 0, 1, 1], [], []>} : vector<256x128xf32>, vector<128x256xf32>, vector<256x256xf32> -> vector<256x256xf32>
    %c0_4 = arith.constant 0 : index
    %c0_5 = arith.constant 0 : index
    %6 = vector.load %arg4[%c0_4, %c0_5] : memref<1x256xf32, #tpu.memory_space<vmem>>, vector<1x256xf32>
    %7 = vector.broadcast %6 : vector<1x256xf32> to vector<256x256xf32>
    %8 = arith.addf %5, %7 : vector<256x256xf32>
    %cst_6 = arith.constant 5.000000e-01 : f32
    %9 = vector.broadcast %cst_6 : f32 to vector<256x256xf32>
    %10 = arith.mulf %9, %8 : vector<256x256xf32>
    %cst_7 = arith.constant 0.707106769 : f32
    %11 = vector.broadcast %cst_7 : f32 to vector<256x256xf32>
    %12 = arith.mulf %8, %11 : vector<256x256xf32>
    %13 = math.absf %12 : vector<256x256xf32>
    %cst_8 = arith.constant 0.327591091 : f32
    %14 = vector.broadcast %cst_8 : f32 to vector<256x256xf32>
    %15 = arith.mulf %14, %13 : vector<256x256xf32>
    %cst_9 = arith.constant 1.000000e+00 : f32
    %16 = vector.broadcast %cst_9 : f32 to vector<256x256xf32>
    %17 = arith.addf %16, %15 : vector<256x256xf32>
    %cst_10 = arith.constant 1.000000e+00 : f32
    %18 = vector.broadcast %cst_10 : f32 to vector<256x256xf32>
    %19 = arith.divf %18, %17 : vector<256x256xf32>
    %cst_11 = arith.constant 1.06140542 : f32
    %20 = vector.broadcast %cst_11 : f32 to vector<256x256xf32>
    %21 = arith.mulf %19, %20 : vector<256x256xf32>
    %cst_12 = arith.constant -1.45315206 : f32
    %22 = vector.broadcast %cst_12 : f32 to vector<256x256xf32>
    %23 = arith.addf %22, %21 : vector<256x256xf32>
    %24 = arith.mulf %19, %23 : vector<256x256xf32>
    %cst_13 = arith.constant 1.42141378 : f32
    %25 = vector.broadcast %cst_13 : f32 to vector<256x256xf32>
    %26 = arith.addf %25, %24 : vector<256x256xf32>
    %27 = arith.mulf %19, %26 : vector<256x256xf32>
    %cst_14 = arith.constant -0.284496725 : f32
    %28 = vector.broadcast %cst_14 : f32 to vector<256x256xf32>
    %29 = arith.addf %28, %27 : vector<256x256xf32>
    %30 = arith.mulf %19, %29 : vector<256x256xf32>
    %cst_15 = arith.constant 0.254829586 : f32
    %31 = vector.broadcast %cst_15 : f32 to vector<256x256xf32>
    %32 = arith.addf %31, %30 : vector<256x256xf32>
    %33 = arith.mulf %19, %32 : vector<256x256xf32>
    %34 = arith.mulf %13, %13 : vector<256x256xf32>
    %cst_16 = arith.constant 0.000000e+00 : f32
    %35 = vector.broadcast %cst_16 : f32 to vector<256x256xf32>
    %36 = arith.subf %35, %34 : vector<256x256xf32>
    %37 = math.exp %36 : vector<256x256xf32>
    %38 = arith.mulf %33, %37 : vector<256x256xf32>
    %cst_17 = arith.constant 1.000000e+00 : f32
    %39 = vector.broadcast %cst_17 : f32 to vector<256x256xf32>
    %40 = arith.subf %39, %38 : vector<256x256xf32>
    %cst_18 = arith.constant 0.000000e+00 : f32
    %41 = vector.broadcast %cst_18 : f32 to vector<256x256xf32>
    %42 = arith.cmpf olt, %12, %41 : vector<256x256xf32>
    %cst_19 = arith.constant 0.000000e+00 : f32
    %43 = vector.broadcast %cst_19 : f32 to vector<256x256xf32>
    %44 = arith.subf %43, %40 : vector<256x256xf32>
    %45 = arith.select %42, %44, %40 : vector<256x256xi1>, vector<256x256xf32>
    %cst_20 = arith.constant 1.000000e+00 : f32
    %46 = vector.broadcast %cst_20 : f32 to vector<256x256xf32>
    %47 = arith.addf %46, %45 : vector<256x256xf32>
    %48 = arith.mulf %10, %47 : vector<256x256xf32>
    %c0_21 = arith.constant 0 : index
    %c0_22 = arith.constant 0 : index
    %49 = vector.load %arg8[%c0_21, %c0_22] : memref<256x128xf32, #tpu.memory_space<vmem>>, vector<256x128xf32>
    %c0_23 = arith.constant 0 : index
    %c0_24 = arith.constant 0 : index
    %50 = vector.load %arg5[%c0_23, %c0_24] : memref<256x128xf32, #tpu.memory_space<vmem>>, vector<256x128xf32>
    %cst_25 = arith.constant dense<0.000000e+00> : vector<256x128xf32>
    %51 = tpu.matmul %48, %50, %cst_25 {dimension_numbers = #tpu.dot_dimension_numbers<[1], [0], [0], [1], [0, 0, 1, 1], [], []>} : vector<256x256xf32>, vector<256x128xf32>, vector<256x128xf32> -> vector<256x128xf32>
    %52 = arith.addf %49, %51 : vector<256x128xf32>
    %c0_26 = arith.constant 0 : index
    %c0_27 = arith.constant 0 : index
    %53 = vector.load %arg8[%c0_26, %c0_27] : memref<256x128xf32, #tpu.memory_space<vmem>>, vector<256x128xf32>
    tpu.vector_store %arg8[%c0_26, %c0_27], %52 {strides = array<i32>} : memref<256x128xf32, #tpu.memory_space<vmem>>, vector<256x128xf32>,
    %c0_i32_28 = arith.constant 0 : i32
    %54 = arith.cmpi eq, %arg1, %c0_i32_28 : i32
    %55 = arith.extui %54 : i1 to i32
    %c0_i32_29 = arith.constant 0 : i32
    %56 = arith.cmpi ne, %55, %c0_i32_29 : i32
    scf.if %56 {
      %c0_30 = arith.constant 0 : index
      %c0_31 = arith.constant 0 : index
      %57 = vector.load %arg8[%c0_30, %c0_31] : memref<256x128xf32, #tpu.memory_space<vmem>>, vector<256x128xf32>
      %c0_32 = arith.constant 0 : index
      %c0_33 = arith.constant 0 : index
      %58 = vector.load %arg6[%c0_32, %c0_33] : memref<1x128xf32, #tpu.memory_space<vmem>>, vector<1x128xf32>
      %59 = vector.broadcast %58 : vector<1x128xf32> to vector<256x128xf32>
      %60 = arith.addf %57, %59 : vector<256x128xf32>
      %c0_34 = arith.constant 0 : index
      %c0_35 = arith.constant 0 : index
      %61 = vector.load %arg7[%c0_34, %c0_35] : memref<256x128xf32, #tpu.memory_space<vmem>>, vector<256x128xf32>
      tpu.vector_store %arg7[%c0_34, %c0_35], %60 {strides = array<i32>} : memref<256x128xf32, #tpu.memory_space<vmem>>, vector<256x128xf32>,
    } else {
    }
    return
  }
  func.func @transform_0(%arg0: i32, %arg1: i32) -> (i32, i32) {
    %c0_i32 = arith.constant 0 : i32
    %c0_i32_0 = arith.constant 0 : i32
    return %arg0, %c0_i32 : i32, i32
  }
  func.func @transform_1(%arg0: i32, %arg1: i32) -> (i32, i32) {
    %c0_i32 = arith.constant 0 : i32
    %c0_i32_0 = arith.constant 0 : i32
    return %c0_i32, %arg1 : i32, i32
  }
  func.func @transform_2(%arg0: i32, %arg1: i32) -> (i32, i32) {
    %c0_i32 = arith.constant 0 : i32
    %c0_i32_0 = arith.constant 0 : i32
    return %c0_i32, %arg1 : i32, i32
  }
  func.func @transform_3(%arg0: i32, %arg1: i32) -> (i32, i32) {
    %c0_i32 = arith.constant 0 : i32
    %c0_i32_0 = arith.constant 0 : i32
    return %arg1, %c0_i32 : i32, i32
  }
  func.func @transform_4(%arg0: i32, %arg1: i32) -> (i32, i32) {
    %c0_i32 = arith.constant 0 : i32
    %c0_i32_0 = arith.constant 0 : i32
    %c0_i32_1 = arith.constant 0 : i32
    return %c0_i32, %c0_i32_0 : i32, i32
  }
  func.func @transform_5(%arg0: i32, %arg1: i32) -> (i32, i32) {
    %c0_i32 = arith.constant 0 : i32
    %c0_i32_0 = arith.constant 0 : i32
    return %arg0, %c0_i32 : i32, i32
  }
}

module attributes {stable_mosaic.version = 11 : i64} {
  func.func @_mlp_kernel(%arg0: i32, %arg1: i32, %arg2: memref<256x128xf32, #tpu.memory_space<vmem>>, %arg3: memref<128x256xf32, #tpu.memory_space<vmem>>, %arg4: memref<1x256xf32, #tpu.memory_space<vmem>>, %arg5: memref<256x128xf32, #tpu.memory_space<vmem>>, %arg6: memref<1x128xf32, #tpu.memory_space<vmem>>, %arg7: memref<256x128xf32, #tpu.memory_space<vmem>>, %arg8: memref<256x128xf32, #tpu.memory_space<vmem>>) attributes {dimension_semantics = [#tpu.dimension_semantics<parallel>, #tpu.dimension_semantics<arbitrary>], iteration_bounds = array<i64: 2, 1>, scalar_prefetch = 0 : i64, scratch_operands = 1 : i64, tpu.core_type = #tpu.core_type<tc>, window_params = [{transform_indices = @transform_0, window_bounds = array<i64: 256, 128>}, {transform_indices = @transform_1, window_bounds = array<i64: 128, 256>}, {transform_indices = @transform_2, window_bounds = array<i64: 1, 256>}, {transform_indices = @transform_3, window_bounds = array<i64: 256, 128>}, {pipeline_mode = #tpu.pipeline_mode<synchronous>, transform_indices = @transform_4, window_bounds = array<i64: 1, 128>}, {transform_indices = @transform_5, window_bounds = array<i64: 256, 128>}]} {
    %c0_i32 = arith.constant 0 : i32
    %0 = arith.cmpi eq, %arg1, %c0_i32 : i32
    %1 = arith.extui %0 : i1 to i32
    %c0_i32_0 = arith.constant 0 : i32
    %2 = arith.cmpi ne, %1, %c0_i32_0 : i32
    scf.if %2 {
      %cst_30 = arith.constant 0.000000e+00 : f32
      %57 = vector.broadcast %cst_30 : f32 to vector<256x128xf32>
      %c0_31 = arith.constant 0 : index
      %c0_32 = arith.constant 0 : index
      %58 = vector.load %arg8[%c0_31, %c0_32] : memref<256x128xf32, #tpu.memory_space<vmem>>, vector<256x128xf32>
      tpu.vector_store %arg8[%c0_31, %c0_32], %57 {strides = array<i32>} : memref<256x128xf32, #tpu.memory_space<vmem>>, vector<256x128xf32>,
    } else {
    }
    %c0 = arith.constant 0 : index
    %c0_1 = arith.constant 0 : index
    %3 = vector.load %arg2[%c0, %c0_1] : memref<256x128xf32, #tpu.memory_space<vmem>>, vector<256x128xf32>
    %c0_2 = arith.constant 0 : index
    %c0_3 = arith.constant 0 : index
    %4 = vector.load %arg3[%c0_2, %c0_3] : memref<128x256xf32, #tpu.memory_space<vmem>>, vector<128x256xf32>
    %cst = arith.constant dense<0.000000e+00> : vector<256x256xf32>
    %5 = tpu.matmul %3, %4, %cst {dimension_numbers = #tpu.dot_dimension_numbers<[1], [0], [0], [1], [0, 0, 1, 1], [], []>} : vector<256x128xf32>, vector<128x256xf32>, vector<256x256xf32> -> vector<256x256xf32>
    %c0_4 = arith.constant 0 : index
    %c0_5 = arith.constant 0 : index
    %6 = vector.load %arg4[%c0_4, %c0_5] : memref<1x256xf32, #tpu.memory_space<vmem>>, vector<1x256xf32>
    %7 = vector.broadcast %6 : vector<1x256xf32> to vector<256x256xf32>
    %8 = arith.addf %5, %7 : vector<256x256xf32>
    %cst_6 = arith.constant 5.000000e-01 : f32
    %9 = vector.broadcast %cst_6 : f32 to vector<256x256xf32>
    %10 = arith.mulf %9, %8 : vector<256x256xf32>
    %cst_7 = arith.constant 0.707106769 : f32
    %11 = vector.broadcast %cst_7 : f32 to vector<256x256xf32>
    %12 = arith.mulf %8, %11 : vector<256x256xf32>
    %13 = math.absf %12 : vector<256x256xf32>
    %cst_8 = arith.constant 0.327591091 : f32
    %14 = vector.broadcast %cst_8 : f32 to vector<256x256xf32>
    %15 = arith.mulf %14, %13 : vector<256x256xf32>
    %cst_9 = arith.constant 1.000000e+00 : f32
    %16 = vector.broadcast %cst_9 : f32 to vector<256x256xf32>
    %17 = arith.addf %16, %15 : vector<256x256xf32>
    %cst_10 = arith.constant 1.000000e+00 : f32
    %18 = vector.broadcast %cst_10 : f32 to vector<256x256xf32>
    %19 = arith.divf %18, %17 : vector<256x256xf32>
    %cst_11 = arith.constant 1.06140542 : f32
    %20 = vector.broadcast %cst_11 : f32 to vector<256x256xf32>
    %21 = arith.mulf %19, %20 : vector<256x256xf32>
    %cst_12 = arith.constant -1.45315206 : f32
    %22 = vector.broadcast %cst_12 : f32 to vector<256x256xf32>
    %23 = arith.addf %22, %21 : vector<256x256xf32>
    %24 = arith.mulf %19, %23 : vector<256x256xf32>
    %cst_13 = arith.constant 1.42141378 : f32
    %25 = vector.broadcast %cst_13 : f32 to vector<256x256xf32>
    %26 = arith.addf %25, %24 : vector<256x256xf32>
    %27 = arith.mulf %19, %26 : vector<256x256xf32>
    %cst_14 = arith.constant -0.284496725 : f32
    %28 = vector.broadcast %cst_14 : f32 to vector<256x256xf32>
    %29 = arith.addf %28, %27 : vector<256x256xf32>
    %30 = arith.mulf %19, %29 : vector<256x256xf32>
    %cst_15 = arith.constant 0.254829586 : f32
    %31 = vector.broadcast %cst_15 : f32 to vector<256x256xf32>
    %32 = arith.addf %31, %30 : vector<256x256xf32>
    %33 = arith.mulf %19, %32 : vector<256x256xf32>
    %34 = arith.mulf %13, %13 : vector<256x256xf32>
    %cst_16 = arith.constant 0.000000e+00 : f32
    %35 = vector.broadcast %cst_16 : f32 to vector<256x256xf32>
    %36 = arith.subf %35, %34 : vector<256x256xf32>
    %37 = math.exp %36 : vector<256x256xf32>
    %38 = arith.mulf %33, %37 : vector<256x256xf32>
    %cst_17 = arith.constant 1.000000e+00 : f32
    %39 = vector.broadcast %cst_17 : f32 to vector<256x256xf32>
    %40 = arith.subf %39, %38 : vector<256x256xf32>
    %cst_18 = arith.constant 0.000000e+00 : f32
    %41 = vector.broadcast %cst_18 : f32 to vector<256x256xf32>
    %42 = arith.cmpf olt, %12, %41 : vector<256x256xf32>
    %cst_19 = arith.constant 0.000000e+00 : f32
    %43 = vector.broadcast %cst_19 : f32 to vector<256x256xf32>
    %44 = arith.subf %43, %40 : vector<256x256xf32>
    %45 = arith.select %42, %44, %40 : vector<256x256xi1>, vector<256x256xf32>
    %cst_20 = arith.constant 1.000000e+00 : f32
    %46 = vector.broadcast %cst_20 : f32 to vector<256x256xf32>
    %47 = arith.addf %46, %45 : vector<256x256xf32>
    %48 = arith.mulf %10, %47 : vector<256x256xf32>
    %c0_21 = arith.constant 0 : index
    %c0_22 = arith.constant 0 : index
    %49 = vector.load %arg8[%c0_21, %c0_22] : memref<256x128xf32, #tpu.memory_space<vmem>>, vector<256x128xf32>
    %c0_23 = arith.constant 0 : index
    %c0_24 = arith.constant 0 : index
    %50 = vector.load %arg5[%c0_23, %c0_24] : memref<256x128xf32, #tpu.memory_space<vmem>>, vector<256x128xf32>
    %cst_25 = arith.constant dense<0.000000e+00> : vector<256x128xf32>
    %51 = tpu.matmul %48, %50, %cst_25 {dimension_numbers = #tpu.dot_dimension_numbers<[1], [0], [0], [1], [0, 0, 1, 1], [], []>} : vector<256x256xf32>, vector<256x128xf32>, vector<256x128xf32> -> vector<256x128xf32>
    %52 = arith.addf %49, %51 : vector<256x128xf32>
    %c0_26 = arith.constant 0 : index
    %c0_27 = arith.constant 0 : index
    %53 = vector.load %arg8[%c0_26, %c0_27] : memref<256x128xf32, #tpu.memory_space<vmem>>, vector<256x128xf32>
    tpu.vector_store %arg8[%c0_26, %c0_27], %52 {strides = array<i32>} : memref<256x128xf32, #tpu.memory_space<vmem>>, vector<256x128xf32>,
    %c0_i32_28 = arith.constant 0 : i32
    %54 = arith.cmpi eq, %arg1, %c0_i32_28 : i32
    %55 = arith.extui %54 : i1 to i32
    %c0_i32_29 = arith.constant 0 : i32
    %56 = arith.cmpi ne, %55, %c0_i32_29 : i32
    scf.if %56 {
      %c0_30 = arith.constant 0 : index
      %c0_31 = arith.constant 0 : index
      %57 = vector.load %arg8[%c0_30, %c0_31] : memref<256x128xf32, #tpu.memory_space<vmem>>, vector<256x128xf32>
      %c0_32 = arith.constant 0 : index
      %c0_33 = arith.constant 0 : index
      %58 = vector.load %arg6[%c0_32, %c0_33] : memref<1x128xf32, #tpu.memory_space<vmem>>, vector<1x128xf32>
      %59 = vector.broadcast %58 : vector<1x128xf32> to vector<256x128xf32>
      %60 = arith.addf %57, %59 : vector<256x128xf32>
      %c0_34 = arith.constant 0 : index
      %c0_35 = arith.constant 0 : index
      %61 = vector.load %arg7[%c0_34, %c0_35] : memref<256x128xf32, #tpu.memory_space<vmem>>, vector<256x128xf32>
      tpu.vector_store %arg7[%c0_34, %c0_35], %60 {strides = array<i32>} : memref<256x128xf32, #tpu.memory_space<vmem>>, vector<256x128xf32>,
    } else {
    }
    return
  }
  func.func @transform_0(%arg0: i32, %arg1: i32) -> (i32, i32) {
    %c0_i32 = arith.constant 0 : i32
    %c0_i32_0 = arith.constant 0 : i32
    return %arg0, %c0_i32 : i32, i32
  }
  func.func @transform_1(%arg0: i32, %arg1: i32) -> (i32, i32) {
    %c0_i32 = arith.constant 0 : i32
    %c0_i32_0 = arith.constant 0 : i32
    return %c0_i32, %arg1 : i32, i32
  }
  func.func @transform_2(%arg0: i32, %arg1: i32) -> (i32, i32) {
    %c0_i32 = arith.constant 0 : i32
    %c0_i32_0 = arith.constant 0 : i32
    return %c0_i32, %arg1 : i32, i32
  }
  func.func @transform_3(%arg0: i32, %arg1: i32) -> (i32, i32) {
    %c0_i32 = arith.constant 0 : i32
    %c0_i32_0 = arith.constant 0 : i32
    return %arg1, %c0_i32 : i32, i32
  }
  func.func @transform_4(%arg0: i32, %arg1: i32) -> (i32, i32) {
    %c0_i32 = arith.constant 0 : i32
    %c0_i32_0 = arith.constant 0 : i32
    %c0_i32_1 = arith.constant 0 : i32
    return %c0_i32, %c0_i32_0 : i32, i32
  }
  func.func @transform_5(%arg0: i32, %arg1: i32) -> (i32, i32) {
    %c0_i32 = arith.constant 0 : i32
    %c0_i32_0 = arith.constant 0 : i32
    return %arg0, %c0_i32 : i32, i32
  }
}

</mosaic_0001>

<llo_original>
// kernel: tpu_custom_call.1
$region0: #{tpu_custom_call.1}
  #allocation0 [shape = 'u32[]', space=smem, size = 0x4, offset = 0x4, fixed_abs, tag = 'smem constant byte address 0x4 - core index']
  #allocation1 [shape = 'u32[144,128]{1,0:T(1,128)}', space=vmem, size = 0x12000, scoped, tag = 'internal scratch']
  #allocation2 [shape = 'f32[256,128]{1,0:T(8,128)}', space=vmem, size = 0x20000, scoped, tag = 'scratch operand']
  %s0 = inlined_call_operand.hbm [shape: f32[512,128], index: 0, kind: input, shape index: {}]
  %s1 = inlined_call_operand.hbm [shape: f32[128,256], index: 1, kind: input, shape index: {}]
  %s2 = inlined_call_operand.vmem [shape: f32[1,256], index: 2, kind: input, shape index: {}]
  %s3 = inlined_call_operand.hbm [shape: f32[256,128], index: 3, kind: input, shape index: {}]
  %s4 = inlined_call_operand.vmem [shape: f32[1,128], index: 4, kind: input, shape index: {}]
  %s5 = inlined_call_operand.hbm [shape: f32[512,128], index: 5, kind: output, shape index: {}]
  %s6 = sld [smem:[#allocation0]]
  $region73: #{tpu_custom_call.1} parent=0
    _
  %s8 = ssub.s32 1, %s6
  %s9 = scalar_select 0, %s8, %s6
  $region1: #{tpu_custom_call.1} parent=0
    #allocation3 [shape = 'u8[262144]{0}', space=vmem, size = 0x40000, scoped, tag = 'input window, operand 0']
    #allocation4 [shape = 's32[2]{0}', space=sflag, size = 0x8, scoped, tag = 'scoped memory for tpu_custom_call.1']
    #allocation5 [shape = 's32[2]{0}', space=sflag, size = 0x8, scoped, tag = 'scoped memory for tpu_custom_call.1']
    #allocation6 [shape = 'u8[131072]{0}', space=vmem, size = 0x20000, scoped, tag = 'input window, operand 1, single buffered']
    #allocation7 [shape = 's32[1]{0}', space=sflag, size = 0x4, scoped, tag = 'scoped memory for tpu_custom_call.1']
    #allocation8 [shape = 'u8[131072]{0}', space=vmem, size = 0x20000, scoped, tag = 'input window, operand 3, single buffered']
    #allocation9 [shape = 'u8[262144]{0}', space=vmem, size = 0x40000, scoped, tag = 'output window, operand 0']
    %10 = vsyncpa [#allocation4], 0
    %s11 = scalar_lea.sflag [#allocation4], 1
    %12 = vsyncpa %s11, 0
    %13 = vsyncpa [#allocation7], 0
    %14 = vsyncpa [#allocation5], 0
    %s15 = scalar_lea.sflag [#allocation5], 1
    %16 = vsyncpa %s15, 0
    loop: start=0, step=1, limit=4
    $region2: #{tpu_custom_call.1} parent=1 // loop_pre_header
      _
    $region3: #{tpu_custom_call.1} parent=1 // loop_header
      %s18 = sphi 0, %s22
      %p19 = scmp.ge.s32.totalorder %s18, 4
      %s25 = sphi 0, %s37
      %s26 = sphi 0, %s33
      %s27 = sphi 0, %s25
      %s28 = sphi 0, %s26
      %s29 = sphi 0, %s27
      %s30 = sphi 0, %s28
      %s40 = sphi 0, %s42
      %s43 = sphi 0, %s40
      %s44 = sphi 0, %s43
      %s60 = sphi 0, %s44
      %s66 = sphi 0, %s68
      %s69 = sphi 0, %s66
      %s70 = sphi 0, %s69
      %s86 = sphi 0, %s70
      %s92 = sphi 0, %s94
      %s95 = sphi 0, %s92
      %s96 = sphi 0, %s95
      %s112 = sphi 0, %s96
      %s118 = sphi 0, %s120
      %s121 = sphi 0, %s118
      %s122 = sphi 0, %s121
      %s138 = sphi 0, %s122
      %s142 = sphi 0, %s142
      %s144 = sphi 0, %s142
      %s145 = sphi 0, %s144
      %s159 = sphi 0, %s145
      %s165 = sphi 0, %s167
      %s168 = sphi 0, %s165
      %s169 = sphi 0, %s168
      %s185 = sphi 0, %s169
    $region4: #{tpu_custom_call.1} parent=1 // loop_header_branch
      %21 = sbr.rel (%p19) target = $region8
    $region5: #{tpu_custom_call.1} parent=1 // loop_body
      %s23 = ssub.s32 %s18, 1
      %s24 = ssub.s32 %s18, 2
      %s31 = sadd.s32 1, %s26
      %p32 = scmp.ge.s32.totalorder %s31, 1
      %s33 = scalar_select %p32, 0, %s31
      %s34 = sadd.s32 1, %s25
      %s35 = scalar_select %p32, %s34, %s25
      %p36 = scmp.ge.s32.totalorder %s35, 2
      %s37 = scalar_select %p36, 0, %s35
      %s38 = ssub.s32 %s25, %s37
      %p39 = scmp.eq.s32.totalorder %s38, 0
      %s41 = sadd.s32 %s40, 1
      %s42 = scalar_select %p39, %s40, %s41
      %p45 = pneg %p39
      %p46 = scmp.eq.s32.totalorder %s18, 1
      %p47 = por %p45, %p46
      %p48 = scmp.ne.s32.totalorder %s40, %s43
      %p49 = scmp.eq.s32.totalorder %s18, 0
      %p50 = por %p48, %p49
      %p51 = scmp.ne.s32.totalorder %s40, %s43
      %p52 = scmp.eq.s32.totalorder %s23, 1
      %p53 = por %p51, %p52
      %p54 = scmp.ne.s32.totalorder %s43, %s44
      %p55 = scmp.eq.s32.totalorder %s23, 0
      %p56 = por %p54, %p55
      %p57 = scmp.ne.s32.totalorder %s43, %s44
      %p58 = scmp.eq.s32.totalorder %s24, 1
      %p59 = por %p57, %p58
      %p61 = scmp.ne.s32.totalorder %s44, %s60
      %p62 = scmp.eq.s32.totalorder %s24, 0
      %p63 = por %p61, %p62
      %s64 = ssub.s32 %s26, %s33
      %p65 = scmp.eq.s32.totalorder %s64, 0
      %s67 = sadd.s32 %s66, 1
      %s68 = scalar_select %p65, %s66, %s67
      %p71 = pneg %p65
      %p72 = scmp.eq.s32.totalorder %s18, 1
      %p73 = por %p71, %p72
      %p74 = scmp.ne.s32.totalorder %s66, %s69
      %p75 = scmp.eq.s32.totalorder %s18, 0
      %p76 = por %p74, %p75
      %p77 = scmp.ne.s32.totalorder %s66, %s69
      %p78 = scmp.eq.s32.totalorder %s23, 1
      %p79 = por %p77, %p78
      %p80 = scmp.ne.s32.totalorder %s69, %s70
      %p81 = scmp.eq.s32.totalorder %s23, 0
      %p82 = por %p80, %p81
      %p83 = scmp.ne.s32.totalorder %s69, %s70
      %p84 = scmp.eq.s32.totalorder %s24, 1
      %p85 = por %p83, %p84
      %p87 = scmp.ne.s32.totalorder %s70, %s86
      %p88 = scmp.eq.s32.totalorder %s24, 0
      %p89 = por %p87, %p88
      %s90 = ssub.s32 %s26, %s33
      %p91 = scmp.eq.s32.totalorder %s90, 0
      %s93 = sadd.s32 %s92, 1
      %s94 = scalar_select %p91, %s92, %s93
      %p97 = pneg %p91
      %p98 = scmp.eq.s32.totalorder %s18, 1
      %p99 = por %p97, %p98
      %p100 = scmp.ne.s32.totalorder %s92, %s95
      %p101 = scmp.eq.s32.totalorder %s18, 0
      %p102 = por %p100, %p101
      %p103 = scmp.ne.s32.totalorder %s92, %s95
      %p104 = scmp.eq.s32.totalorder %s23, 1
      %p105 = por %p103, %p104
      %p106 = scmp.ne.s32.totalorder %s95, %s96
      %p107 = scmp.eq.s32.totalorder %s23, 0
      %p108 = por %p106, %p107
      %p109 = scmp.ne.s32.totalorder %s95, %s96
      %p110 = scmp.eq.s32.totalorder %s24, 1
      %p111 = por %p109, %p110
      %p113 = scmp.ne.s32.totalorder %s96, %s112
      %p114 = scmp.eq.s32.totalorder %s24, 0
      %p115 = por %p113, %p114
      %s116 = ssub.s32 %s26, %s33
      %p117 = scmp.eq.s32.totalorder %s116, 0
      %s119 = sadd.s32 %s118, 1
      %s120 = scalar_select %p117, %s118, %s119
      %p123 = pneg %p117
      %p124 = scmp.eq.s32.totalorder %s18, 1
      %p125 = por %p123, %p124
      %p126 = scmp.ne.s32.totalorder %s118, %s121
      %p127 = scmp.eq.s32.totalorder %s18, 0
      %p128 = por %p126, %p127
      %p129 = scmp.ne.s32.totalorder %s118, %s121
      %p130 = scmp.eq.s32.totalorder %s23, 1
      %p131 = por %p129, %p130
      %p132 = scmp.ne.s32.totalorder %s121, %s122
      %p133 = scmp.eq.s32.totalorder %s23, 0
      %p134 = por %p132, %p133
      %p135 = scmp.ne.s32.totalorder %s121, %s122
      %p136 = scmp.eq.s32.totalorder %s24, 1
      %p137 = por %p135, %p136
      %p139 = scmp.ne.s32.totalorder %s122, %s138
      %p140 = scmp.eq.s32.totalorder %s24, 0
      %p141 = por %p139, %p140
      %s143 = sadd.s32 %s142, 1
      %p146 = scmp.eq.s32.totalorder %s18, 1
      %p147 = scmp.ne.s32.totalorder %s142, %s144
      %p148 = scmp.eq.s32.totalorder %s18, 0
      %p149 = por %p147, %p148
      %p150 = scmp.ne.s32.totalorder %s142, %s144
      %p151 = scmp.eq.s32.totalorder %s23, 1
      %p152 = por %p150, %p151
      %p153 = scmp.ne.s32.totalorder %s144, %s145
      %p154 = scmp.eq.s32.totalorder %s23, 0
      %p155 = por %p153, %p154
      %p156 = scmp.ne.s32.totalorder %s144, %s145
      %p157 = scmp.eq.s32.totalorder %s24, 1
      %p158 = por %p156, %p157
      %p160 = scmp.ne.s32.totalorder %s145, %s159
      %p161 = scmp.eq.s32.totalorder %s24, 0
      %p162 = por %p160, %p161
      %s163 = ssub.s32 %s25, %s37
      %p164 = scmp.eq.s32.totalorder %s163, 0
      %s166 = sadd.s32 %s165, 1
      %s167 = scalar_select %p164, %s165, %s166
      %p170 = pneg %p164
      %p171 = scmp.eq.s32.totalorder %s18, 1
      %p172 = por %p170, %p171
      %p173 = scmp.ne.s32.totalorder %s165, %s168
      %p174 = scmp.eq.s32.totalorder %s18, 0
      %p175 = por %p173, %p174
      %p176 = scmp.ne.s32.totalorder %s165, %s168
      %p177 = scmp.eq.s32.totalorder %s23, 1
      %p178 = por %p176, %p177
      %p179 = scmp.ne.s32.totalorder %s168, %s169
      %p180 = scmp.eq.s32.totalorder %s23, 0
      %p181 = por %p179, %p180
      %p182 = scmp.ne.s32.totalorder %s168, %s169
      %p183 = scmp.eq.s32.totalorder %s24, 1
      %p184 = por %p182, %p183
      %p186 = scmp.ne.s32.totalorder %s169, %s185
      %p187 = scmp.eq.s32.totalorder %s24, 0
      %p188 = por %p186, %p187
      %p189 = scmp.le.s32.totalorder 1, %s18
      %p190 = scmp.lt.s32.totalorder %s18, 3
      %p191 = pnand %p189, %p190
      %p192 = pneg %p191
      // Predicated region
      $region9: #{tpu_custom_call.1} parent=5 // pred_check
        _
      $region10: #{tpu_custom_call.1} parent=5 // pred_check_branch
        %194 = sbr.rel (%p191) target = $region12
      $region11: #{tpu_custom_call.1} parent=5 // pred_region
        %s195 = ssub.s32 %s18, 1
        // Predicated region
        $region13: #{tpu_custom_call.1} parent=11 // pred_check
          %p196 = pneg %p82
        $region14: #{tpu_custom_call.1} parent=11 // pred_check_branch
          %198 = sbr.rel (%p196) target = $region16
        $region15: #{tpu_custom_call.1} parent=11 // pred_region
          %s199 = smul.u32 2, %s28
          %s201 = ssub.s32 4096, 4096
          %202 = vsyncadd [#allocation7], %s201
          %s203 = smul.addr %s199, 128
          %s204 = scalar_lea.hbm %s1, %s203
          %s205 = sshll.u32 [#allocation6], 4
          %s206 = int_to_ptr.vmem [resolvable:$true] %s205
          %211 = dma.hbm_to_vmem [thread:$0]  %s204, 4096, %s206, [#allocation7], 256, 256, 16
        $region16: #{tpu_custom_call.1} parent=11 // pred_fallthru
          _
        // Predicated region
        $region17: #{tpu_custom_call.1} parent=11 // pred_check
          %p212 = pneg %p108
        $region18: #{tpu_custom_call.1} parent=11 // pred_check_branch
          %214 = sbr.rel (%p212) target = $region20
        $region19: #{tpu_custom_call.1} parent=11 // pred_region
          %s215 = smul.u32 2, %s28
          %p216 = scmp.lt.s32.totalorder %s215, 1
          %s217 = scalar_select %p216, %s215, 1
          %s218 = scalar_lea.vmem %s2, %s217
          %s219 = smul.u32 2, %s28
        $region20: #{tpu_custom_call.1} parent=11 // pred_fallthru
          _
        // Predicated region
        $region21: #{tpu_custom_call.1} parent=11 // pred_check
          %p220 = pneg %p134
        $region22: #{tpu_custom_call.1} parent=11 // pred_check_branch
          %222 = sbr.rel (%p220) target = $region24
        $region23: #{tpu_custom_call.1} parent=11 // pred_region
          %s223 = smul.u32 32, %s28
          %s225 = ssub.s32 4096, 4096
          %226 = vsyncadd [#allocation7], %s225
          %s227 = smul.addr %s223, 128
          %s228 = scalar_lea.hbm %s3, %s227
          %s229 = sshll.u32 [#allocation8], 4
          %s230 = int_to_ptr.vmem [resolvable:$true] %s229
          %235 = dma.hbm_to_vmem [thread:$0]  %s228, 4096, %s230, [#allocation7], 128, 128, 8
        $region24: #{tpu_custom_call.1} parent=11 // pred_fallthru
          _
        // Predicated region
        $region25: #{tpu_custom_call.1} parent=11 // pred_check
          %p236 = pneg %p155
        $region26: #{tpu_custom_call.1} parent=11 // pred_check_branch
          %238 = sbr.rel (%p236) target = $region28
        $region27: #{tpu_custom_call.1} parent=11 // pred_region
          _
        $region28: #{tpu_custom_call.1} parent=11 // pred_fallthru
          _
      $region12: #{tpu_custom_call.1} parent=5 // pred_fallthru
        _
      %p239 = scmp.lt.s32.totalorder %s18, 2
      // Predicated region
      $region29: #{tpu_custom_call.1} parent=5 // pred_check
        %p240 = pneg %p239
      $region30: #{tpu_custom_call.1} parent=5 // pred_check_branch
        %242 = sbr.rel (%p240) target = $region32
      $region31: #{tpu_custom_call.1} parent=5 // pred_region
        // Predicated region
        $region33: #{tpu_custom_call.1} parent=31 // pred_check
          %p243 = pneg %p50
        $region34: #{tpu_custom_call.1} parent=31 // pred_check_branch
          %245 = sbr.rel (%p243) target = $region36
        $region35: #{tpu_custom_call.1} parent=31 // pred_region
          %s246 = sand.u32 %s40, 1
          %s247 = scalar_lea.sflag [#allocation4], %s246
          %s248 = sand.u32 %s40, 1
          %s249 = smul.addr %s248, 256
          %s250 = scalar_lea.vmem [#allocation3], %s249
          %s251 = smul.u32 32, %s25
          %s253 = ssub.s32 4096, 4096
          %254 = vsyncadd %s247, %s253
          %s255 = smul.addr %s251, 128
          %s256 = scalar_lea.hbm %s0, %s255
          %s257 = sshll.u32 %s250, 4
          %s258 = int_to_ptr.vmem [resolvable:$true] %s257
          %263 = dma.hbm_to_vmem [thread:$0]  %s256, 4096, %s258, %s247, 128, 128, 8
        $region36: #{tpu_custom_call.1} parent=31 // pred_fallthru
          _
      $region32: #{tpu_custom_call.1} parent=5 // pred_fallthru
        _
      %p264 = scmp.le.s32.totalorder 1, %s18
      %p265 = scmp.lt.s32.totalorder %s18, 3
      %p266 = pnand %p264, %p265
      %p267 = pneg %p266
      // Predicated region
      $region37: #{tpu_custom_call.1} parent=5 // pred_check
        _
      $region38: #{tpu_custom_call.1} parent=5 // pred_check_branch
        %269 = sbr.rel (%p266) target = $region40
      $region39: #{tpu_custom_call.1} parent=5 // pred_region
        %s270 = ssub.s32 %s18, 1
        %s271 = sand.u32 %s43, 1
        %s272 = scalar_lea.sflag [#allocation4], %s271
        %s273 = sand.u32 %s43, 1
        %s274 = smul.addr %s273, 256
        %s275 = scalar_lea.vmem [#allocation3], %s274
        // Predicated region
        $region41: #{tpu_custom_call.1} parent=39 // pred_check
          %p276 = pneg %p56
        $region42: #{tpu_custom_call.1} parent=39 // pred_check_branch
          %278 = sbr.rel (%p276) target = $region44
        $region43: #{tpu_custom_call.1} parent=39 // pred_region
          %279 = dma.done %s272, 4096
        $region44: #{tpu_custom_call.1} parent=39 // pred_fallthru
          _
        // Predicated region
        $region45: #{tpu_custom_call.1} parent=39 // pred_check
          %p280 = pneg %p82
        $region46: #{tpu_custom_call.1} parent=39 // pred_check_branch
          %282 = sbr.rel (%p280) target = $region48
        $region47: #{tpu_custom_call.1} parent=39 // pred_region
          %283 = dma.done [#allocation7], 4096
        $region48: #{tpu_custom_call.1} parent=39 // pred_fallthru
          _
        // Predicated region
        $region49: #{tpu_custom_call.1} parent=39 // pred_check
          %p284 = pneg %p134
        $region50: #{tpu_custom_call.1} parent=39 // pred_check_branch
          %286 = sbr.rel (%p284) target = $region52
        $region51: #{tpu_custom_call.1} parent=39 // pred_region
          %287 = dma.done [#allocation7], 4096
        $region52: #{tpu_custom_call.1} parent=39 // pred_fallthru
          _
        %s288 = sand.u32 %s43, 1
        %s289 = scalar_lea.sflag [#allocation4], %s288
        %s290 = sand.u32 %s43, 1
        %s291 = smul.addr %s290, 256
        %s292 = scalar_lea.vmem [#allocation3], %s291
        %p293 = pneg %p56
        %p294 = pneg %p53
        %p295 = pneg %p82
        %p296 = pneg %p79
        %s297 = smul.u32 2, %s28
        %p298 = scmp.lt.s32.totalorder %s297, 1
        %s299 = scalar_select %p298, %s297, 1
        %s300 = scalar_lea.vmem %s2, %s299
        %p301 = pneg %p108
        %p302 = pneg %p105
        %p303 = pneg %p134
        %p304 = pneg %p131
        %p305 = pneg %p155
        %p306 = pneg %p152
        %p307 = pneg %p181
        %p308 = pneg %p178
        %s309 = sand.u32 %s168, 1
        %s310 = scalar_lea.sflag [#allocation5], %s309
        %s311 = sand.u32 %s168, 1
        %s312 = smul.addr %s311, 256
        %s313 = scalar_lea.vmem [#allocation9], %s312
        %s314 = smul.u32 32, %s27
        %s315 = smul.u32 2, %s28
        %s316 = smul.u32 2, %s28
        %p317 = scmp.lt.s32.totalorder %s316, 1
        %s318 = scalar_select %p317, %s316, 1
        %s319 = scalar_lea.vmem %s2, %s318
        %s320 = smul.u32 2, %s28
        %s321 = smul.u32 32, %s28
        %s322 = smul.u32 32, %s27
        %p323 = scmp.eq.s32.totalorder %s28, 0
        // Predicated region
        $region53: #{tpu_custom_call.1} parent=39 // pred_check
          %p324 = pneg %p323
        $region54: #{tpu_custom_call.1} parent=39 // pred_check_branch
          %326 = sbr.rel (%p324) target = $region56
        $region55: #{tpu_custom_call.1} parent=39 // pred_region
          %327 = vst [vmem:[#allocation2] sm:$0xff] 0.0
          %328 = vst [vmem:[#allocation2 + $0x8] sm:$0xff] 0.0
          %329 = vst [vmem:[#allocation2 + $0x10] sm:$0xff] 0.0
          %330 = vst [vmem:[#allocation2 + $0x18] sm:$0xff] 0.0
          %331 = vst [vmem:[#allocation2 + $0x20] sm:$0xff] 0.0
          %332 = vst [vmem:[#allocation2 + $0x28] sm:$0xff] 0.0
          %333 = vst [vmem:[#allocation2 + $0x30] sm:$0xff] 0.0
          %334 = vst [vmem:[#allocation2 + $0x38] sm:$0xff] 0.0
          %335 = vst [vmem:[#allocation2 + $0x40] sm:$0xff] 0.0
          %336 = vst [vmem:[#allocation2 + $0x48] sm:$0xff] 0.0
          %337 = vst [vmem:[#allocation2 + $0x50] sm:$0xff] 0.0
          %338 = vst [vmem:[#allocation2 + $0x58] sm:$0xff] 0.0
          %339 = vst [vmem:[#allocation2 + $0x60] sm:$0xff] 0.0
          %340 = vst [vmem:[#allocation2 + $0x68] sm:$0xff] 0.0
          %341 = vst [vmem:[#allocation2 + $0x70] sm:$0xff] 0.0
          %342 = vst [vmem:[#allocation2 + $0x78] sm:$0xff] 0.0
          %343 = vst [vmem:[#allocation2 + $0x80] sm:$0xff] 0.0
          %344 = vst [vmem:[#allocation2 + $0x88] sm:$0xff] 0.0
          %345 = vst [vmem:[#allocation2 + $0x90] sm:$0xff] 0.0
          %346 = vst [vmem:[#allocation2 + $0x98] sm:$0xff] 0.0
          %347 = vst [vmem:[#allocation2 + $0xa0] sm:$0xff] 0.0
          %348 = vst [vmem:[#allocation2 + $0xa8] sm:$0xff] 0.0
          %349 = vst [vmem:[#allocation2 + $0xb0] sm:$0xff] 0.0
          %350 = vst [vmem:[#allocation2 + $0xb8] sm:$0xff] 0.0
          %351 = vst [vmem:[#allocation2 + $0xc0] sm:$0xff] 0.0
          %352 = vst [vmem:[#allocation2 + $0xc8] sm:$0xff] 0.0
          %353 = vst [vmem:[#allocation2 + $0xd0] sm:$0xff] 0.0
          %354 = vst [vmem:[#allocation2 + $0xd8] sm:$0xff] 0.0
          %355 = vst [vmem:[#allocation2 + $0xe0] sm:$0xff] 0.0
          %356 = vst [vmem:[#allocation2 + $0xe8] sm:$0xff] 0.0
          %357 = vst [vmem:[#allocation2 + $0xf0] sm:$0xff] 0.0
          %358 = vst [vmem:[#allocation2 + $0xf8] sm:$0xff] 0.0
        $region56: #{tpu_custom_call.1} parent=39 // pred_fallthru
          _
        %v359 = vld [vmem:[%s275] sm:$0xff]
        %v360 = vld [vmem:[%s275 + $0x8] sm:$0xff]
        %v361 = vld [vmem:[%s275 + $0x10] sm:$0xff]
        %v362 = vld [vmem:[%s275 + $0x18] sm:$0xff]
        %v363 = vld [vmem:[%s275 + $0x20] sm:$0xff]
        %v364 = vld [vmem:[%s275 + $0x28] sm:$0xff]
        %v365 = vld [vmem:[%s275 + $0x30] sm:$0xff]
        %v366 = vld [vmem:[%s275 + $0x38] sm:$0xff]
        %v367 = vld [vmem:[%s275 + $0x40] sm:$0xff]
        %v368 = vld [vmem:[%s275 + $0x48] sm:$0xff]
        %v369 = vld [vmem:[%s275 + $0x50] sm:$0xff]
        %v370 = vld [vmem:[%s275 + $0x58] sm:$0xff]
        %v371 = vld [vmem:[%s275 + $0x60] sm:$0xff]
        %v372 = vld [vmem:[%s275 + $0x68] sm:$0xff]
        %v373 = vld [vmem:[%s275 + $0x70] sm:$0xff]
        %v374 = vld [vmem:[%s275 + $0x78] sm:$0xff]
        %v375 = vld [vmem:[%s275 + $0x80] sm:$0xff]
        %v376 = vld [vmem:[%s275 + $0x88] sm:$0xff]
        %v377 = vld [vmem:[%s275 + $0x90] sm:$0xff]
        %v378 = vld [vmem:[%s275 + $0x98] sm:$0xff]
        %v379 = vld [vmem:[%s275 + $0xa0] sm:$0xff]
        %v380 = vld [vmem:[%s275 + $0xa8] sm:$0xff]
        %v381 = vld [vmem:[%s275 + $0xb0] sm:$0xff]
        %v382 = vld [vmem:[%s275 + $0xb8] sm:$0xff]
        %v383 = vld [vmem:[%s275 + $0xc0] sm:$0xff]
        %v384 = vld [vmem:[%s275 + $0xc8] sm:$0xff]
        %v385 = vld [vmem:[%s275 + $0xd0] sm:$0xff]
        %v386 = vld [vmem:[%s275 + $0xd8] sm:$0xff]
        %v387 = vld [vmem:[%s275 + $0xe0] sm:$0xff]
        %v388 = vld [vmem:[%s275 + $0xe8] sm:$0xff]
        %v389 = vld [vmem:[%s275 + $0xf0] sm:$0xff]
        %v390 = vld [vmem:[%s275 + $0xf8] sm:$0xff]
        %v391 = vld [vmem:[#allocation6] sm:$0xff]
        %v392 = vld [vmem:[#allocation6 + $0x8] sm:$0xff]
        %v393 = vld [vmem:[#allocation6 + $0x10] sm:$0xff]
        %v394 = vld [vmem:[#allocation6 + $0x18] sm:$0xff]
        %v395 = vld [vmem:[#allocation6 + $0x20] sm:$0xff]
        %v396 = vld [vmem:[#allocation6 + $0x28] sm:$0xff]
        %v397 = vld [vmem:[#allocation6 + $0x30] sm:$0xff]
        %v398 = vld [vmem:[#allocation6 + $0x38] sm:$0xff]
        %v399 = vld [vmem:[#allocation6 + $0x40] sm:$0xff]
        %v400 = vld [vmem:[#allocation6 + $0x48] sm:$0xff]
        %v401 = vld [vmem:[#allocation6 + $0x50] sm:$0xff]
        %v402 = vld [vmem:[#allocation6 + $0x58] sm:$0xff]
        %v403 = vld [vmem:[#allocation6 + $0x60] sm:$0xff]
        %v404 = vld [vmem:[#allocation6 + $0x68] sm:$0xff]
        %v405 = vld [vmem:[#allocation6 + $0x70] sm:$0xff]
        %v406 = vld [vmem:[#allocation6 + $0x78] sm:$0xff]
        %v407 = vld [vmem:[#allocation6 + $0x80] sm:$0xff]
        %v408 = vld [vmem:[#allocation6 + $0x88] sm:$0xff]
        %v409 = vld [vmem:[#allocation6 + $0x90] sm:$0xff]
        %v410 = vld [vmem:[#allocation6 + $0x98] sm:$0xff]
        %v411 = vld [vmem:[#allocation6 + $0xa0] sm:$0xff]
        %v412 = vld [vmem:[#allocation6 + $0xa8] sm:$0xff]
        %v413 = vld [vmem:[#allocation6 + $0xb0] sm:$0xff]
        %v414 = vld [vmem:[#allocation6 + $0xb8] sm:$0xff]
        %v415 = vld [vmem:[#allocation6 + $0xc0] sm:$0xff]
        %v416 = vld [vmem:[#allocation6 + $0xc8] sm:$0xff]
        %v417 = vld [vmem:[#allocation6 + $0xd0] sm:$0xff]
        %v418 = vld [vmem:[#allocation6 + $0xd8] sm:$0xff]
        %v419 = vld [vmem:[#allocation6 + $0xe0] sm:$0xff]
        %v420 = vld [vmem:[#allocation6 + $0xe8] sm:$0xff]
        %v421 = vld [vmem:[#allocation6 + $0xf0] sm:$0xff]
        %v422 = vld [vmem:[#allocation6 + $0xf8] sm:$0xff]
        %v423 = vld [vmem:[%s319] sm:$0x3]
        %v425 = vlaneseq
        %v426 = vshrl.u32 %v425, 7
        %v427 = vsub.s32 0, %v426
        %v428 = vrot.slane %v423, %v427
        %v429 = vlaneseq
        %v430 = vshrl.u32 %v429, 7
        %v431 = vsub.s32 1, %v430
        %v432 = vrot.slane %v423, %v431
        %435 = vmatprep.subr.mxu0 %v422
        %436 = vmatpush1.msra.mxu0 %v421
        %437 = vmatprep.subr.mxu0 %v420
        %438 = vmatpush1.msra.mxu0 %v419
        %439 = vmatprep.subr.mxu0 %v418
        %440 = vmatpush1.msra.mxu0 %v417
        %441 = vmatprep.subr.mxu0 %v416
        %442 = vmatpush1.msra.mxu0 %v415
        %443 = vmatprep.subr.mxu0 %v414
        %444 = vmatpush1.msra.mxu0 %v413
        %445 = vmatprep.subr.mxu0 %v412
        %446 = vmatpush1.msra.mxu0 %v411
        %447 = vmatprep.subr.mxu0 %v410
        %448 = vmatpush1.msra.mxu0 %v409
        %449 = vmatprep.subr.mxu0 %v408
        %450 = vmatpush1.msra.mxu0 %v407
        %451 = vmatprep.subr.mxu0 %v406
        %452 = vmatpush1.msra.mxu0 %v405
        %453 = vmatprep.subr.mxu0 %v404
        %454 = vmatpush1.msra.mxu0 %v403
        %455 = vmatprep.subr.mxu0 %v402
        %456 = vmatpush1.msra.mxu0 %v401
        %457 = vmatprep.subr.mxu0 %v400
        %458 = vmatpush1.msra.mxu0 %v399
        %459 = vmatprep.subr.mxu0 %v398
        %460 = vmatpush1.msra.mxu0 %v397
        %461 = vmatprep.subr.mxu0 %v396
        %462 = vmatpush1.msra.mxu0 %v395
        %463 = vmatprep.subr.mxu0 %v394
        %464 = vmatpush1.msra.mxu0 %v393
        %465 = vmatprep.subr.mxu0 %v392
        %466 = vmatpush1.msra.mxu0 %v391
        %467 = vmatprep.subr.mxu0 0.0
        %468 = vmatpush2.msra.mxu0 0.0
        %469 = vmatprep.subr.mxu0 0.0
        %470 = vmatpush2.msra.mxu0 0.0
        %471 = vmatprep.subr.mxu0 0.0
        %472 = vmatpush2.msra.mxu0 0.0
        %473 = vmatprep.subr.mxu0 0.0
        %474 = vmatpush2.msra.mxu0 0.0
        %475 = vmatprep.subr.mxu0 0.0
        %476 = vmatpush2.msra.mxu0 0.0
        %477 = vmatprep.subr.mxu0 0.0
        %478 = vmatpush2.msra.mxu0 0.0
        %479 = vmatprep.subr.mxu0 0.0
        %480 = vmatpush2.msra.mxu0 0.0
        %481 = vmatprep.subr.mxu0 0.0
        %482 = vmatpush2.msra.mxu0 0.0
        %483 = vmatprep.subr.mxu0 0.0
        %484 = vmatpush2.msra.mxu0 0.0
        %485 = vmatprep.subr.mxu0 0.0
        %486 = vmatpush2.msra.mxu0 0.0
        %487 = vmatprep.subr.mxu0 0.0
        %488 = vmatpush2.msra.mxu0 0.0
        %489 = vmatprep.subr.mxu0 0.0
        %490 = vmatpush2.msra.mxu0 0.0
        %491 = vmatprep.subr.mxu0 0.0
        %492 = vmatpush2.msra.mxu0 0.0
        %493 = vmatprep.subr.mxu0 0.0
        %494 = vmatpush2.msra.mxu0 0.0
        %495 = vmatprep.subr.mxu0 0.0
        %496 = vmatpush2.msra.mxu0 0.0
        %497 = vmatprep.subr.mxu0 0.0
        %498 = vmatpush2.msra.mxu0 0.0
        %499 = vmatprep.mubr.f32.mxu0 0.0
        %500 = vmatmul.mubr.f32.gmra.mxu0 %v359
        %v501 = vpop.f32.mrf.mxu0
        %v502 = vadd.f32 %v428, %v501
        %v503 = vpop.f32.mrf.mxu0
        %v504 = vadd.f32 %v432, %v503
        %505 = vmatprep.mubr.f32.mxu0 0.0
        %506 = vmatmul.mubr.f32.gmra.mxu0 %v360
        %v507 = vpop.f32.mrf.mxu0
        %v508 = vadd.f32 %v428, %v507
        %v509 = vpop.f32.mrf.mxu0
        %v510 = vadd.f32 %v432, %v509
        %511 = vmatprep.mubr.f32.mxu0 0.0
        %512 = vmatmul.mubr.f32.gmra.mxu0 %v361
        %v513 = vpop.f32.mrf.mxu0
        %v514 = vadd.f32 %v428, %v513
        %v515 = vpop.f32.mrf.mxu0
        %v516 = vadd.f32 %v432, %v515
        %517 = vmatprep.mubr.f32.mxu0 0.0
        %518 = vmatmul.mubr.f32.gmra.mxu0 %v362
        %v519 = vpop.f32.mrf.mxu0
        %v520 = vadd.f32 %v428, %v519
        %v521 = vpop.f32.mrf.mxu0
        %v522 = vadd.f32 %v432, %v521
        %523 = vmatprep.mubr.f32.mxu0 0.0
        %524 = vmatmul.mubr.f32.gmra.mxu0 %v363
        %v525 = vpop.f32.mrf.mxu0
        %v526 = vadd.f32 %v428, %v525
        %v527 = vpop.f32.mrf.mxu0
        %v528 = vadd.f32 %v432, %v527
        %529 = vmatprep.mubr.f32.mxu0 0.0
        %530 = vmatmul.mubr.f32.gmra.mxu0 %v364
        %v531 = vpop.f32.mrf.mxu0
        %v532 = vadd.f32 %v428, %v531
        %v533 = vpop.f32.mrf.mxu0
        %v534 = vadd.f32 %v432, %v533
        %535 = vmatprep.mubr.f32.mxu0 0.0
        %536 = vmatmul.mubr.f32.gmra.mxu0 %v365
        %v537 = vpop.f32.mrf.mxu0
        %v538 = vadd.f32 %v428, %v537
        %v539 = vpop.f32.mrf.mxu0
        %v540 = vadd.f32 %v432, %v539
        %541 = vmatprep.mubr.f32.mxu0 0.0
        %542 = vmatmul.mubr.f32.gmra.mxu0 %v366
        %v543 = vpop.f32.mrf.mxu0
        %v544 = vadd.f32 %v428, %v543
        %v545 = vpop.f32.mrf.mxu0
        %v546 = vadd.f32 %v432, %v545
        %547 = vmatprep.mubr.f32.mxu0 0.0
        %548 = vmatmul.mubr.f32.gmra.mxu0 %v367
        %v549 = vpop.f32.mrf.mxu0
        %v550 = vadd.f32 %v428, %v549
        %v551 = vpop.f32.mrf.mxu0
        %v552 = vadd.f32 %v432, %v551
        %553 = vmatprep.mubr.f32.mxu0 0.0
        %554 = vmatmul.mubr.f32.gmra.mxu0 %v368
        %v555 = vpop.f32.mrf.mxu0
        %v556 = vadd.f32 %v428, %v555
        %v557 = vpop.f32.mrf.mxu0
        %v558 = vadd.f32 %v432, %v557
        %559 = vmatprep.mubr.f32.mxu0 0.0
        %560 = vmatmul.mubr.f32.gmra.mxu0 %v369
        %v561 = vpop.f32.mrf.mxu0
        %v562 = vadd.f32 %v428, %v561
        %v563 = vpop.f32.mrf.mxu0
        %v564 = vadd.f32 %v432, %v563
        %565 = vmatprep.mubr.f32.mxu0 0.0
        %566 = vmatmul.mubr.f32.gmra.mxu0 %v370
        %v567 = vpop.f32.mrf.mxu0
        %v568 = vadd.f32 %v428, %v567
        %v569 = vpop.f32.mrf.mxu0
        %v570 = vadd.f32 %v432, %v569
        %571 = vmatprep.mubr.f32.mxu0 0.0
        %572 = vmatmul.mubr.f32.gmra.mxu0 %v371
        %v573 = vpop.f32.mrf.mxu0
        %v574 = vadd.f32 %v428, %v573
        %v575 = vpop.f32.mrf.mxu0
        %v576 = vadd.f32 %v432, %v575
        %577 = vmatprep.mubr.f32.mxu0 0.0
        %578 = vmatmul.mubr.f32.gmra.mxu0 %v372
        %v579 = vpop.f32.mrf.mxu0
        %v580 = vadd.f32 %v428, %v579
        %v581 = vpop.f32.mrf.mxu0
        %v582 = vadd.f32 %v432, %v581
        %583 = vmatprep.mubr.f32.mxu0 0.0
        %584 = vmatmul.mubr.f32.gmra.mxu0 %v373
        %v585 = vpop.f32.mrf.mxu0
        %v586 = vadd.f32 %v428, %v585
        %v587 = vpop.f32.mrf.mxu0
        %v588 = vadd.f32 %v432, %v587
        %589 = vmatprep.mubr.f32.mxu0 0.0
        %590 = vmatmul.mubr.f32.gmra.mxu0 %v374
        %v591 = vpop.f32.mrf.mxu0
        %v592 = vadd.f32 %v428, %v591
        %v593 = vpop.f32.mrf.mxu0
        %v594 = vadd.f32 %v432, %v593
        %595 = vmatprep.mubr.f32.mxu0 0.0
        %596 = vmatmul.mubr.f32.gmra.mxu0 %v375
        %v597 = vpop.f32.mrf.mxu0
        %v598 = vadd.f32 %v428, %v597
        %v599 = vpop.f32.mrf.mxu0
        %v600 = vadd.f32 %v432, %v599
        %601 = vmatprep.mubr.f32.mxu0 0.0
        %602 = vmatmul.mubr.f32.gmra.mxu0 %v376
        %v603 = vpop.f32.mrf.mxu0
        %v604 = vadd.f32 %v428, %v603
        %v605 = vpop.f32.mrf.mxu0
        %v606 = vadd.f32 %v432, %v605
        %607 = vmatprep.mubr.f32.mxu0 0.0
        %608 = vmatmul.mubr.f32.gmra.mxu0 %v377
        %v609 = vpop.f32.mrf.mxu0
        %v610 = vadd.f32 %v428, %v609
        %v611 = vpop.f32.mrf.mxu0
        %v612 = vadd.f32 %v432, %v611
        %613 = vmatprep.mubr.f32.mxu0 0.0
        %614 = vmatmul.mubr.f32.gmra.mxu0 %v378
        %v615 = vpop.f32.mrf.mxu0
        %v616 = vadd.f32 %v428, %v615
        %v617 = vpop.f32.mrf.mxu0
        %v618 = vadd.f32 %v432, %v617
        %619 = vmatprep.mubr.f32.mxu0 0.0
        %620 = vmatmul.mubr.f32.gmra.mxu0 %v379
        %v621 = vpop.f32.mrf.mxu0
        %v622 = vadd.f32 %v428, %v621
        %v623 = vpop.f32.mrf.mxu0
        %v624 = vadd.f32 %v432, %v623
        %625 = vmatprep.mubr.f32.mxu0 0.0
        %626 = vmatmul.mubr.f32.gmra.mxu0 %v380
        %v627 = vpop.f32.mrf.mxu0
        %v628 = vadd.f32 %v428, %v627
        %v629 = vpop.f32.mrf.mxu0
        %v630 = vadd.f32 %v432, %v629
        %631 = vmatprep.mubr.f32.mxu0 0.0
        %632 = vmatmul.mubr.f32.gmra.mxu0 %v381
        %v633 = vpop.f32.mrf.mxu0
        %v634 = vadd.f32 %v428, %v633
        %v635 = vpop.f32.mrf.mxu0
        %v636 = vadd.f32 %v432, %v635
        %637 = vmatprep.mubr.f32.mxu0 0.0
        %638 = vmatmul.mubr.f32.gmra.mxu0 %v382
        %v639 = vpop.f32.mrf.mxu0
        %v640 = vadd.f32 %v428, %v639
        %v641 = vpop.f32.mrf.mxu0
        %v642 = vadd.f32 %v432, %v641
        %643 = vmatprep.mubr.f32.mxu0 0.0
        %644 = vmatmul.mubr.f32.gmra.mxu0 %v383
        %v645 = vpop.f32.mrf.mxu0
        %v646 = vadd.f32 %v428, %v645
        %v647 = vpop.f32.mrf.mxu0
        %v648 = vadd.f32 %v432, %v647
        %649 = vmatprep.mubr.f32.mxu0 0.0
        %650 = vmatmul.mubr.f32.gmra.mxu0 %v384
        %v651 = vpop.f32.mrf.mxu0
        %v652 = vadd.f32 %v428, %v651
        %v653 = vpop.f32.mrf.mxu0
        %v654 = vadd.f32 %v432, %v653
        %655 = vmatprep.mubr.f32.mxu0 0.0
        %656 = vmatmul.mubr.f32.gmra.mxu0 %v385
        %v657 = vpop.f32.mrf.mxu0
        %v658 = vadd.f32 %v428, %v657
        %v659 = vpop.f32.mrf.mxu0
        %v660 = vadd.f32 %v432, %v659
        %661 = vmatprep.mubr.f32.mxu0 0.0
        %662 = vmatmul.mubr.f32.gmra.mxu0 %v386
        %v663 = vpop.f32.mrf.mxu0
        %v664 = vadd.f32 %v428, %v663
        %v665 = vpop.f32.mrf.mxu0
        %v666 = vadd.f32 %v432, %v665
        %667 = vmatprep.mubr.f32.mxu0 0.0
        %668 = vmatmul.mubr.f32.gmra.mxu0 %v387
        %v669 = vpop.f32.mrf.mxu0
        %v670 = vadd.f32 %v428, %v669
        %v671 = vpop.f32.mrf.mxu0
        %v672 = vadd.f32 %v432, %v671
        %673 = vmatprep.mubr.f32.mxu0 0.0
        %674 = vmatmul.mubr.f32.gmra.mxu0 %v388
        %v675 = vpop.f32.mrf.mxu0
        %v676 = vadd.f32 %v428, %v675
        %v677 = vpop.f32.mrf.mxu0
        %v678 = vadd.f32 %v432, %v677
        %679 = vmatprep.mubr.f32.mxu0 0.0
        %680 = vmatmul.mubr.f32.gmra.mxu0 %v389
        %v681 = vpop.f32.mrf.mxu0
        %v682 = vadd.f32 %v428, %v681
        %v683 = vpop.f32.mrf.mxu0
        %v684 = vadd.f32 %v432, %v683
        %685 = vmatprep.mubr.f32.mxu0 0.0
        %686 = vmatmul.mubr.f32.gmra.mxu0 %v390
        %v687 = vpop.f32.mrf.mxu0
        %v688 = vadd.f32 %v428, %v687
        %v689 = vpop.f32.mrf.mxu0
        %v690 = vadd.f32 %v432, %v689
        %691 = vdwg.mxu0
        %v692 = vmul.f32 %v502, 0.5
        %v693 = vmul.f32 %v504, 0.5
        %v694 = vmul.f32 %v508, 0.5
        %v695 = vmul.f32 %v510, 0.5
        %v696 = vmul.f32 %v514, 0.5
        %v697 = vmul.f32 %v516, 0.5
        %v698 = vmul.f32 %v520, 0.5
        %v699 = vmul.f32 %v522, 0.5
        %v700 = vmul.f32 %v526, 0.5
        %v701 = vmul.f32 %v528, 0.5
        %v702 = vmul.f32 %v532, 0.5
        %v703 = vmul.f32 %v534, 0.5
        %v704 = vmul.f32 %v538, 0.5
        %v705 = vmul.f32 %v540, 0.5
        %v706 = vmul.f32 %v544, 0.5
        %v707 = vmul.f32 %v546, 0.5
        %v708 = vmul.f32 %v550, 0.5
        %v709 = vmul.f32 %v552, 0.5
        %v710 = vmul.f32 %v556, 0.5
        %v711 = vmul.f32 %v558, 0.5
        %v712 = vmul.f32 %v562, 0.5
        %v713 = vmul.f32 %v564, 0.5
        %v714 = vmul.f32 %v568, 0.5
        %v715 = vmul.f32 %v570, 0.5
        %v716 = vmul.f32 %v574, 0.5
        %v717 = vmul.f32 %v576, 0.5
        %v718 = vmul.f32 %v580, 0.5
        %v719 = vmul.f32 %v582, 0.5
        %v720 = vmul.f32 %v586, 0.5
        %v721 = vmul.f32 %v588, 0.5
        %v722 = vmul.f32 %v592, 0.5
        %v723 = vmul.f32 %v594, 0.5
        %v724 = vmul.f32 %v598, 0.5
        %v725 = vmul.f32 %v600, 0.5
        %v726 = vmul.f32 %v604, 0.5
        %v727 = vmul.f32 %v606, 0.5
        %v728 = vmul.f32 %v610, 0.5
        %v729 = vmul.f32 %v612, 0.5
        %v730 = vmul.f32 %v616, 0.5
        %v731 = vmul.f32 %v618, 0.5
        %v732 = vmul.f32 %v622, 0.5
        %v733 = vmul.f32 %v624, 0.5
        %v734 = vmul.f32 %v628, 0.5
        %v735 = vmul.f32 %v630, 0.5
        %v736 = vmul.f32 %v634, 0.5
        %v737 = vmul.f32 %v636, 0.5
        %v738 = vmul.f32 %v640, 0.5
        %v739 = vmul.f32 %v642, 0.5
        %v740 = vmul.f32 %v646, 0.5
        %v741 = vmul.f32 %v648, 0.5
        %v742 = vmul.f32 %v652, 0.5
        %v743 = vmul.f32 %v654, 0.5
        %v744 = vmul.f32 %v658, 0.5
        %v745 = vmul.f32 %v660, 0.5
        %v746 = vmul.f32 %v664, 0.5
        %v747 = vmul.f32 %v666, 0.5
        %v748 = vmul.f32 %v670, 0.5
        %v749 = vmul.f32 %v672, 0.5
        %v750 = vmul.f32 %v676, 0.5
        %v751 = vmul.f32 %v678, 0.5
        %v752 = vmul.f32 %v682, 0.5
        %v753 = vmul.f32 %v684, 0.5
        %v754 = vmul.f32 %v688, 0.5
        %v755 = vmul.f32 %v690, 0.5
        %v756 = vmul.f32 %v502, 0.70710677
        %v757 = vmul.f32 %v504, 0.70710677
        %v758 = vmul.f32 %v508, 0.70710677
        %v759 = vmul.f32 %v510, 0.70710677
        %v760 = vmul.f32 %v514, 0.70710677
        %v761 = vmul.f32 %v516, 0.70710677
        %v762 = vmul.f32 %v520, 0.70710677
        %v763 = vmul.f32 %v522, 0.70710677
        %v764 = vmul.f32 %v526, 0.70710677
        %v765 = vmul.f32 %v528, 0.70710677
        %v766 = vmul.f32 %v532, 0.70710677
        %v767 = vmul.f32 %v534, 0.70710677
        %v768 = vmul.f32 %v538, 0.70710677
        %v769 = vmul.f32 %v540, 0.70710677
        %v770 = vmul.f32 %v544, 0.70710677
        %v771 = vmul.f32 %v546, 0.70710677
        %v772 = vmul.f32 %v550, 0.70710677
        %v773 = vmul.f32 %v552, 0.70710677
        %v774 = vmul.f32 %v556, 0.70710677
        %v775 = vmul.f32 %v558, 0.70710677
        %v776 = vmul.f32 %v562, 0.70710677
        %v777 = vmul.f32 %v564, 0.70710677
        %v778 = vmul.f32 %v568, 0.70710677
        %v779 = vmul.f32 %v570, 0.70710677
        %v780 = vmul.f32 %v574, 0.70710677
        %v781 = vmul.f32 %v576, 0.70710677
        %v782 = vmul.f32 %v580, 0.70710677
        %v783 = vmul.f32 %v582, 0.70710677
        %v784 = vmul.f32 %v586, 0.70710677
        %v785 = vmul.f32 %v588, 0.70710677
        %v786 = vmul.f32 %v592, 0.70710677
        %v787 = vmul.f32 %v594, 0.70710677
        %v788 = vmul.f32 %v598, 0.70710677
        %v789 = vmul.f32 %v600, 0.70710677
        %v790 = vmul.f32 %v604, 0.70710677
        %v791 = vmul.f32 %v606, 0.70710677
        %v792 = vmul.f32 %v610, 0.70710677
        %v793 = vmul.f32 %v612, 0.70710677
        %v794 = vmul.f32 %v616, 0.70710677
        %v795 = vmul.f32 %v618, 0.70710677
        %v796 = vmul.f32 %v622, 0.70710677
        %v797 = vmul.f32 %v624, 0.70710677
        %v798 = vmul.f32 %v628, 0.70710677
        %v799 = vmul.f32 %v630, 0.70710677
        %v800 = vmul.f32 %v634, 0.70710677
        %v801 = vmul.f32 %v636, 0.70710677
        %v802 = vmul.f32 %v640, 0.70710677
        %v803 = vmul.f32 %v642, 0.70710677
        %v804 = vmul.f32 %v646, 0.70710677
        %v805 = vmul.f32 %v648, 0.70710677
        %v806 = vmul.f32 %v652, 0.70710677
        %v807 = vmul.f32 %v654, 0.70710677
        %v808 = vmul.f32 %v658, 0.70710677
        %v809 = vmul.f32 %v660, 0.70710677
        %v810 = vmul.f32 %v664, 0.70710677
        %v811 = vmul.f32 %v666, 0.70710677
        %v812 = vmul.f32 %v670, 0.70710677
        %v813 = vmul.f32 %v672, 0.70710677
        %v814 = vmul.f32 %v676, 0.70710677
        %v815 = vmul.f32 %v678, 0.70710677
        %v816 = vmul.f32 %v682, 0.70710677
        %v817 = vmul.f32 %v684, 0.70710677
        %v818 = vmul.f32 %v688, 0.70710677
        %v819 = vmul.f32 %v690, 0.70710677
        %v820 = vand.u32 2147483647, %v756
        %v821 = vand.u32 2147483647, %v757
        %v822 = vand.u32 2147483647, %v758
        %v823 = vand.u32 2147483647, %v759
        %v824 = vand.u32 2147483647, %v760
        %v825 = vand.u32 2147483647, %v761
        %v826 = vand.u32 2147483647, %v762
        %v827 = vand.u32 2147483647, %v763
        %v828 = vand.u32 2147483647, %v764
        %v829 = vand.u32 2147483647, %v765
        %v830 = vand.u32 2147483647, %v766
        %v831 = vand.u32 2147483647, %v767
        %v832 = vand.u32 2147483647, %v768
        %v833 = vand.u32 2147483647, %v769
        %v834 = vand.u32 2147483647, %v770
        %v835 = vand.u32 2147483647, %v771
        %v836 = vand.u32 2147483647, %v772
        %v837 = vand.u32 2147483647, %v773
        %v838 = vand.u32 2147483647, %v774
        %v839 = vand.u32 2147483647, %v775
        %v840 = vand.u32 2147483647, %v776
        %v841 = vand.u32 2147483647, %v777
        %v842 = vand.u32 2147483647, %v778
        %v843 = vand.u32 2147483647, %v779
        %v844 = vand.u32 2147483647, %v780
        %v845 = vand.u32 2147483647, %v781
        %v846 = vand.u32 2147483647, %v782
        %v847 = vand.u32 2147483647, %v783
        %v848 = vand.u32 2147483647, %v784
        %v849 = vand.u32 2147483647, %v785
        %v850 = vand.u32 2147483647, %v786
        %v851 = vand.u32 2147483647, %v787
        %v852 = vand.u32 2147483647, %v788
        %v853 = vand.u32 2147483647, %v789
        %v854 = vand.u32 2147483647, %v790
        %v855 = vand.u32 2147483647, %v791
        %v856 = vand.u32 2147483647, %v792
        %v857 = vand.u32 2147483647, %v793
        %v858 = vand.u32 2147483647, %v794
        %v859 = vand.u32 2147483647, %v795
        %v860 = vand.u32 2147483647, %v796
        %v861 = vand.u32 2147483647, %v797
        %v862 = vand.u32 2147483647, %v798
        %v863 = vand.u32 2147483647, %v799
        %v864 = vand.u32 2147483647, %v800
        %v865 = vand.u32 2147483647, %v801
        %v866 = vand.u32 2147483647, %v802
        %v867 = vand.u32 2147483647, %v803
        %v868 = vand.u32 2147483647, %v804
        %v869 = vand.u32 2147483647, %v805
        %v870 = vand.u32 2147483647, %v806
        %v871 = vand.u32 2147483647, %v807
        %v872 = vand.u32 2147483647, %v808
        %v873 = vand.u32 2147483647, %v809
        %v874 = vand.u32 2147483647, %v810
        %v875 = vand.u32 2147483647, %v811
        %v876 = vand.u32 2147483647, %v812
        %v877 = vand.u32 2147483647, %v813
        %v878 = vand.u32 2147483647, %v814
        %v879 = vand.u32 2147483647, %v815
        %v880 = vand.u32 2147483647, %v816
        %v881 = vand.u32 2147483647, %v817
        %v882 = vand.u32 2147483647, %v818
        %v883 = vand.u32 2147483647, %v819
        %v884 = vmul.f32 %v820, 0.3275911
        %v885 = vmul.f32 %v821, 0.3275911
        %v886 = vmul.f32 %v822, 0.3275911
        %v887 = vmul.f32 %v823, 0.3275911
        %v888 = vmul.f32 %v824, 0.3275911
        %v889 = vmul.f32 %v825, 0.3275911
        %v890 = vmul.f32 %v826, 0.3275911
        %v891 = vmul.f32 %v827, 0.3275911
        %v892 = vmul.f32 %v828, 0.3275911
        %v893 = vmul.f32 %v829, 0.3275911
        %v894 = vmul.f32 %v830, 0.3275911
        %v895 = vmul.f32 %v831, 0.3275911
        %v896 = vmul.f32 %v832, 0.3275911
        %v897 = vmul.f32 %v833, 0.3275911
        %v898 = vmul.f32 %v834, 0.3275911
        %v899 = vmul.f32 %v835, 0.3275911
        %v900 = vmul.f32 %v836, 0.3275911
        %v901 = vmul.f32 %v837, 0.3275911
        %v902 = vmul.f32 %v838, 0.3275911
        %v903 = vmul.f32 %v839, 0.3275911
        %v904 = vmul.f32 %v840, 0.3275911
        %v905 = vmul.f32 %v841, 0.3275911
        %v906 = vmul.f32 %v842, 0.3275911
        %v907 = vmul.f32 %v843, 0.3275911
        %v908 = vmul.f32 %v844, 0.3275911
        %v909 = vmul.f32 %v845, 0.3275911
        %v910 = vmul.f32 %v846, 0.3275911
        %v911 = vmul.f32 %v847, 0.3275911
        %v912 = vmul.f32 %v848, 0.3275911
        %v913 = vmul.f32 %v849, 0.3275911
        %v914 = vmul.f32 %v850, 0.3275911
        %v915 = vmul.f32 %v851, 0.3275911
        %v916 = vmul.f32 %v852, 0.3275911
        %v917 = vmul.f32 %v853, 0.3275911
        %v918 = vmul.f32 %v854, 0.3275911
        %v919 = vmul.f32 %v855, 0.3275911
        %v920 = vmul.f32 %v856, 0.3275911
        %v921 = vmul.f32 %v857, 0.3275911
        %v922 = vmul.f32 %v858, 0.3275911
        %v923 = vmul.f32 %v859, 0.3275911
        %v924 = vmul.f32 %v860, 0.3275911
        %v925 = vmul.f32 %v861, 0.3275911
        %v926 = vmul.f32 %v862, 0.3275911
        %v927 = vmul.f32 %v863, 0.3275911
        %v928 = vmul.f32 %v864, 0.3275911
        %v929 = vmul.f32 %v865, 0.3275911
        %v930 = vmul.f32 %v866, 0.3275911
        %v931 = vmul.f32 %v867, 0.3275911
        %v932 = vmul.f32 %v868, 0.3275911
        %v933 = vmul.f32 %v869, 0.3275911
        %v934 = vmul.f32 %v870, 0.3275911
        %v935 = vmul.f32 %v871, 0.3275911
        %v936 = vmul.f32 %v872, 0.3275911
        %v937 = vmul.f32 %v873, 0.3275911
        %v938 = vmul.f32 %v874, 0.3275911
        %v939 = vmul.f32 %v875, 0.3275911
        %v940 = vmul.f32 %v876, 0.3275911
        %v941 = vmul.f32 %v877, 0.3275911
        %v942 = vmul.f32 %v878, 0.3275911
        %v943 = vmul.f32 %v879, 0.3275911
        %v944 = vmul.f32 %v880, 0.3275911
        %v945 = vmul.f32 %v881, 0.3275911
        %v946 = vmul.f32 %v882, 0.3275911
        %v947 = vmul.f32 %v883, 0.3275911
        %v948 = vadd.f32 %v884, 1.0
        %v949 = vadd.f32 %v885, 1.0
        %v950 = vadd.f32 %v886, 1.0
        %v951 = vadd.f32 %v887, 1.0
        %v952 = vadd.f32 %v888, 1.0
        %v953 = vadd.f32 %v889, 1.0
        %v954 = vadd.f32 %v890, 1.0
        %v955 = vadd.f32 %v891, 1.0
        %v956 = vadd.f32 %v892, 1.0
        %v957 = vadd.f32 %v893, 1.0
        %v958 = vadd.f32 %v894, 1.0
        %v959 = vadd.f32 %v895, 1.0
        %v960 = vadd.f32 %v896, 1.0
        %v961 = vadd.f32 %v897, 1.0
        %v962 = vadd.f32 %v898, 1.0
        %v963 = vadd.f32 %v899, 1.0
        %v964 = vadd.f32 %v900, 1.0
        %v965 = vadd.f32 %v901, 1.0
        %v966 = vadd.f32 %v902, 1.0
        %v967 = vadd.f32 %v903, 1.0
        %v968 = vadd.f32 %v904, 1.0
        %v969 = vadd.f32 %v905, 1.0
        %v970 = vadd.f32 %v906, 1.0
        %v971 = vadd.f32 %v907, 1.0
        %v972 = vadd.f32 %v908, 1.0
        %v973 = vadd.f32 %v909, 1.0
        %v974 = vadd.f32 %v910, 1.0
        %v975 = vadd.f32 %v911, 1.0
        %v976 = vadd.f32 %v912, 1.0
        %v977 = vadd.f32 %v913, 1.0
        %v978 = vadd.f32 %v914, 1.0
        %v979 = vadd.f32 %v915, 1.0
        %v980 = vadd.f32 %v916, 1.0
        %v981 = vadd.f32 %v917, 1.0
        %v982 = vadd.f32 %v918, 1.0
        %v983 = vadd.f32 %v919, 1.0
        %v984 = vadd.f32 %v920, 1.0
        %v985 = vadd.f32 %v921, 1.0
        %v986 = vadd.f32 %v922, 1.0
        %v987 = vadd.f32 %v923, 1.0
        %v988 = vadd.f32 %v924, 1.0
        %v989 = vadd.f32 %v925, 1.0
        %v990 = vadd.f32 %v926, 1.0
        %v991 = vadd.f32 %v927, 1.0
        %v992 = vadd.f32 %v928, 1.0
        %v993 = vadd.f32 %v929, 1.0
        %v994 = vadd.f32 %v930, 1.0
        %v995 = vadd.f32 %v931, 1.0
        %v996 = vadd.f32 %v932, 1.0
        %v997 = vadd.f32 %v933, 1.0
        %v998 = vadd.f32 %v934, 1.0
        %v999 = vadd.f32 %v935, 1.0
        %v1000 = vadd.f32 %v936, 1.0
        %v1001 = vadd.f32 %v937, 1.0
        %v1002 = vadd.f32 %v938, 1.0
        %v1003 = vadd.f32 %v939, 1.0
        %v1004 = vadd.f32 %v940, 1.0
        %v1005 = vadd.f32 %v941, 1.0
        %v1006 = vadd.f32 %v942, 1.0
        %v1007 = vadd.f32 %v943, 1.0
        %v1008 = vadd.f32 %v944, 1.0
        %v1009 = vadd.f32 %v945, 1.0
        %v1010 = vadd.f32 %v946, 1.0
        %v1011 = vadd.f32 %v947, 1.0
        %v1012 = vrcp.pop %v948
        %v1013 = vmul.f32 1.0, %v1012
        %v1014 = vrcp.pop %v949
        %v1015 = vmul.f32 1.0, %v1014
        %v1016 = vrcp.pop %v950
        %v1017 = vmul.f32 1.0, %v1016
        %v1018 = vrcp.pop %v951
        %v1019 = vmul.f32 1.0, %v1018
        %v1020 = vrcp.pop %v952
        %v1021 = vmul.f32 1.0, %v1020
        %v1022 = vrcp.pop %v953
        %v1023 = vmul.f32 1.0, %v1022
        %v1024 = vrcp.pop %v954
        %v1025 = vmul.f32 1.0, %v1024
        %v1026 = vrcp.pop %v955
        %v1027 = vmul.f32 1.0, %v1026
        %v1028 = vrcp.pop %v956
        %v1029 = vmul.f32 1.0, %v1028
        %v1030 = vrcp.pop %v957
        %v1031 = vmul.f32 1.0, %v1030
        %v1032 = vrcp.pop %v958
        %v1033 = vmul.f32 1.0, %v1032
        %v1034 = vrcp.pop %v959
        %v1035 = vmul.f32 1.0, %v1034
        %v1036 = vrcp.pop %v960
        %v1037 = vmul.f32 1.0, %v1036
        %v1038 = vrcp.pop %v961
        %v1039 = vmul.f32 1.0, %v1038
        %v1040 = vrcp.pop %v962
        %v1041 = vmul.f32 1.0, %v1040
        %v1042 = vrcp.pop %v963
        %v1043 = vmul.f32 1.0, %v1042
        %v1044 = vrcp.pop %v964
        %v1045 = vmul.f32 1.0, %v1044
        %v1046 = vrcp.pop %v965
        %v1047 = vmul.f32 1.0, %v1046
        %v1048 = vrcp.pop %v966
        %v1049 = vmul.f32 1.0, %v1048
        %v1050 = vrcp.pop %v967
        %v1051 = vmul.f32 1.0, %v1050
        %v1052 = vrcp.pop %v968
        %v1053 = vmul.f32 1.0, %v1052
        %v1054 = vrcp.pop %v969
        %v1055 = vmul.f32 1.0, %v1054
        %v1056 = vrcp.pop %v970
        %v1057 = vmul.f32 1.0, %v1056
        %v1058 = vrcp.pop %v971
        %v1059 = vmul.f32 1.0, %v1058
        %v1060 = vrcp.pop %v972
        %v1061 = vmul.f32 1.0, %v1060
        %v1062 = vrcp.pop %v973
        %v1063 = vmul.f32 1.0, %v1062
        %v1064 = vrcp.pop %v974
        %v1065 = vmul.f32 1.0, %v1064
        %v1066 = vrcp.pop %v975
        %v1067 = vmul.f32 1.0, %v1066
        %v1068 = vrcp.pop %v976
        %v1069 = vmul.f32 1.0, %v1068
        %v1070 = vrcp.pop %v977
        %v1071 = vmul.f32 1.0, %v1070
        %v1072 = vrcp.pop %v978
        %v1073 = vmul.f32 1.0, %v1072
        %v1074 = vrcp.pop %v979
        %v1075 = vmul.f32 1.0, %v1074
        %v1076 = vrcp.pop %v980
        %v1077 = vmul.f32 1.0, %v1076
        %v1078 = vrcp.pop %v981
        %v1079 = vmul.f32 1.0, %v1078
        %v1080 = vrcp.pop %v982
        %v1081 = vmul.f32 1.0, %v1080
        %v1082 = vrcp.pop %v983
        %v1083 = vmul.f32 1.0, %v1082
        %v1084 = vrcp.pop %v984
        %v1085 = vmul.f32 1.0, %v1084
        %v1086 = vrcp.pop %v985
        %v1087 = vmul.f32 1.0, %v1086
        %v1088 = vrcp.pop %v986
        %v1089 = vmul.f32 1.0, %v1088
        %v1090 = vrcp.pop %v987
        %v1091 = vmul.f32 1.0, %v1090
        %v1092 = vrcp.pop %v988
        %v1093 = vmul.f32 1.0, %v1092
        %v1094 = vrcp.pop %v989
        %v1095 = vmul.f32 1.0, %v1094
        %v1096 = vrcp.pop %v990
        %v1097 = vmul.f32 1.0, %v1096
        %v1098 = vrcp.pop %v991
        %v1099 = vmul.f32 1.0, %v1098
        %v1100 = vrcp.pop %v992
        %v1101 = vmul.f32 1.0, %v1100
        %v1102 = vrcp.pop %v993
        %v1103 = vmul.f32 1.0, %v1102
        %v1104 = vrcp.pop %v994
        %v1105 = vmul.f32 1.0, %v1104
        %v1106 = vrcp.pop %v995
        %v1107 = vmul.f32 1.0, %v1106
        %v1108 = vrcp.pop %v996
        %v1109 = vmul.f32 1.0, %v1108
        %v1110 = vrcp.pop %v997
        %v1111 = vmul.f32 1.0, %v1110
        %v1112 = vrcp.pop %v998
        %v1113 = vmul.f32 1.0, %v1112
        %v1114 = vrcp.pop %v999
        %v1115 = vmul.f32 1.0, %v1114
        %v1116 = vrcp.pop %v1000
        %v1117 = vmul.f32 1.0, %v1116
        %v1118 = vrcp.pop %v1001
        %v1119 = vmul.f32 1.0, %v1118
        %v1120 = vrcp.pop %v1002
        %v1121 = vmul.f32 1.0, %v1120
        %v1122 = vrcp.pop %v1003
        %v1123 = vmul.f32 1.0, %v1122
        %v1124 = vrcp.pop %v1004
        %v1125 = vmul.f32 1.0, %v1124
        %v1126 = vrcp.pop %v1005
        %v1127 = vmul.f32 1.0, %v1126
        %v1128 = vrcp.pop %v1006
        %v1129 = vmul.f32 1.0, %v1128
        %v1130 = vrcp.pop %v1007
        %v1131 = vmul.f32 1.0, %v1130
        %v1132 = vrcp.pop %v1008
        %v1133 = vmul.f32 1.0, %v1132
        %v1134 = vrcp.pop %v1009
        %v1135 = vmul.f32 1.0, %v1134
        %v1136 = vrcp.pop %v1010
        %v1137 = vmul.f32 1.0, %v1136
        %v1138 = vrcp.pop %v1011
        %v1139 = vmul.f32 1.0, %v1138
        %v1140 = vmul.f32 %v1013, 1.0614054
        %v1141 = vmul.f32 %v1015, 1.0614054
        %v1142 = vmul.f32 %v1017, 1.0614054
        %v1143 = vmul.f32 %v1019, 1.0614054
        %v1144 = vmul.f32 %v1021, 1.0614054
        %v1145 = vmul.f32 %v1023, 1.0614054
        %v1146 = vmul.f32 %v1025, 1.0614054
        %v1147 = vmul.f32 %v1027, 1.0614054
        %v1148 = vmul.f32 %v1029, 1.0614054
        %v1149 = vmul.f32 %v1031, 1.0614054
        %v1150 = vmul.f32 %v1033, 1.0614054
        %v1151 = vmul.f32 %v1035, 1.0614054
        %v1152 = vmul.f32 %v1037, 1.0614054
        %v1153 = vmul.f32 %v1039, 1.0614054
        %v1154 = vmul.f32 %v1041, 1.0614054
        %v1155 = vmul.f32 %v1043, 1.0614054
        %v1156 = vmul.f32 %v1045, 1.0614054
        %v1157 = vmul.f32 %v1047, 1.0614054
        %v1158 = vmul.f32 %v1049, 1.0614054
        %v1159 = vmul.f32 %v1051, 1.0614054
        %v1160 = vmul.f32 %v1053, 1.0614054
        %v1161 = vmul.f32 %v1055, 1.0614054
        %v1162 = vmul.f32 %v1057, 1.0614054
        %v1163 = vmul.f32 %v1059, 1.0614054
        %v1164 = vmul.f32 %v1061, 1.0614054
        %v1165 = vmul.f32 %v1063, 1.0614054
        %v1166 = vmul.f32 %v1065, 1.0614054
        %v1167 = vmul.f32 %v1067, 1.0614054
        %v1168 = vmul.f32 %v1069, 1.0614054
        %v1169 = vmul.f32 %v1071, 1.0614054
        %v1170 = vmul.f32 %v1073, 1.0614054
        %v1171 = vmul.f32 %v1075, 1.0614054
        %v1172 = vmul.f32 %v1077, 1.0614054
        %v1173 = vmul.f32 %v1079, 1.0614054
        %v1174 = vmul.f32 %v1081, 1.0614054
        %v1175 = vmul.f32 %v1083, 1.0614054
        %v1176 = vmul.f32 %v1085, 1.0614054
        %v1177 = vmul.f32 %v1087, 1.0614054
        %v1178 = vmul.f32 %v1089, 1.0614054
        %v1179 = vmul.f32 %v1091, 1.0614054
        %v1180 = vmul.f32 %v1093, 1.0614054
        %v1181 = vmul.f32 %v1095, 1.0614054
        %v1182 = vmul.f32 %v1097, 1.0614054
        %v1183 = vmul.f32 %v1099, 1.0614054
        %v1184 = vmul.f32 %v1101, 1.0614054
        %v1185 = vmul.f32 %v1103, 1.0614054
        %v1186 = vmul.f32 %v1105, 1.0614054
        %v1187 = vmul.f32 %v1107, 1.0614054
        %v1188 = vmul.f32 %v1109, 1.0614054
        %v1189 = vmul.f32 %v1111, 1.0614054
        %v1190 = vmul.f32 %v1113, 1.0614054
        %v1191 = vmul.f32 %v1115, 1.0614054
        %v1192 = vmul.f32 %v1117, 1.0614054
        %v1193 = vmul.f32 %v1119, 1.0614054
        %v1194 = vmul.f32 %v1121, 1.0614054
        %v1195 = vmul.f32 %v1123, 1.0614054
        %v1196 = vmul.f32 %v1125, 1.0614054
        %v1197 = vmul.f32 %v1127, 1.0614054
        %v1198 = vmul.f32 %v1129, 1.0614054
        %v1199 = vmul.f32 %v1131, 1.0614054
        %v1200 = vmul.f32 %v1133, 1.0614054
        %v1201 = vmul.f32 %v1135, 1.0614054
        %v1202 = vmul.f32 %v1137, 1.0614054
        %v1203 = vmul.f32 %v1139, 1.0614054
        %v1204 = vadd.f32 %v1140, -1.4531521
        %v1205 = vadd.f32 %v1141, -1.4531521
        %v1206 = vadd.f32 %v1142, -1.4531521
        %v1207 = vadd.f32 %v1143, -1.4531521
        %v1208 = vadd.f32 %v1144, -1.4531521
        %v1209 = vadd.f32 %v1145, -1.4531521
        %v1210 = vadd.f32 %v1146, -1.4531521
        %v1211 = vadd.f32 %v1147, -1.4531521
        %v1212 = vadd.f32 %v1148, -1.4531521
        %v1213 = vadd.f32 %v1149, -1.4531521
        %v1214 = vadd.f32 %v1150, -1.4531521
        %v1215 = vadd.f32 %v1151, -1.4531521
        %v1216 = vadd.f32 %v1152, -1.4531521
        %v1217 = vadd.f32 %v1153, -1.4531521
        %v1218 = vadd.f32 %v1154, -1.4531521
        %v1219 = vadd.f32 %v1155, -1.4531521
        %v1220 = vadd.f32 %v1156, -1.4531521
        %v1221 = vadd.f32 %v1157, -1.4531521
        %v1222 = vadd.f32 %v1158, -1.4531521
        %v1223 = vadd.f32 %v1159, -1.4531521
        %v1224 = vadd.f32 %v1160, -1.4531521
        %v1225 = vadd.f32 %v1161, -1.4531521
        %v1226 = vadd.f32 %v1162, -1.4531521
        %v1227 = vadd.f32 %v1163, -1.4531521
        %v1228 = vadd.f32 %v1164, -1.4531521
        %v1229 = vadd.f32 %v1165, -1.4531521
        %v1230 = vadd.f32 %v1166, -1.4531521
        %v1231 = vadd.f32 %v1167, -1.4531521
        %v1232 = vadd.f32 %v1168, -1.4531521
        %v1233 = vadd.f32 %v1169, -1.4531521
        %v1234 = vadd.f32 %v1170, -1.4531521
        %v1235 = vadd.f32 %v1171, -1.4531521
        %v1236 = vadd.f32 %v1172, -1.4531521
        %v1237 = vadd.f32 %v1173, -1.4531521
        %v1238 = vadd.f32 %v1174, -1.4531521
        %v1239 = vadd.f32 %v1175, -1.4531521
        %v1240 = vadd.f32 %v1176, -1.4531521
        %v1241 = vadd.f32 %v1177, -1.4531521
        %v1242 = vadd.f32 %v1178, -1.4531521
        %v1243 = vadd.f32 %v1179, -1.4531521
        %v1244 = vadd.f32 %v1180, -1.4531521
        %v1245 = vadd.f32 %v1181, -1.4531521
        %v1246 = vadd.f32 %v1182, -1.4531521
        %v1247 = vadd.f32 %v1183, -1.4531521
        %v1248 = vadd.f32 %v1184, -1.4531521
        %v1249 = vadd.f32 %v1185, -1.4531521
        %v1250 = vadd.f32 %v1186, -1.4531521
        %v1251 = vadd.f32 %v1187, -1.4531521
        %v1252 = vadd.f32 %v1188, -1.4531521
        %v1253 = vadd.f32 %v1189, -1.4531521
        %v1254 = vadd.f32 %v1190, -1.4531521
        %v1255 = vadd.f32 %v1191, -1.4531521
        %v1256 = vadd.f32 %v1192, -1.4531521
        %v1257 = vadd.f32 %v1193, -1.4531521
        %v1258 = vadd.f32 %v1194, -1.4531521
        %v1259 = vadd.f32 %v1195, -1.4531521
        %v1260 = vadd.f32 %v1196, -1.4531521
        %v1261 = vadd.f32 %v1197, -1.4531521
        %v1262 = vadd.f32 %v1198, -1.4531521
        %v1263 = vadd.f32 %v1199, -1.4531521
        %v1264 = vadd.f32 %v1200, -1.4531521
        %v1265 = vadd.f32 %v1201, -1.4531521
        %v1266 = vadd.f32 %v1202, -1.4531521
        %v1267 = vadd.f32 %v1203, -1.4531521
        %v1268 = vmul.f32 %v1013, %v1204
        %v1269 = vmul.f32 %v1015, %v1205
        %v1270 = vmul.f32 %v1017, %v1206
        %v1271 = vmul.f32 %v1019, %v1207
        %v1272 = vmul.f32 %v1021, %v1208
        %v1273 = vmul.f32 %v1023, %v1209
        %v1274 = vmul.f32 %v1025, %v1210
        %v1275 = vmul.f32 %v1027, %v1211
        %v1276 = vmul.f32 %v1029, %v1212
        %v1277 = vmul.f32 %v1031, %v1213
        %v1278 = vmul.f32 %v1033, %v1214
        %v1279 = vmul.f32 %v1035, %v1215
        %v1280 = vmul.f32 %v1037, %v1216
        %v1281 = vmul.f32 %v1039, %v1217
        %v1282 = vmul.f32 %v1041, %v1218
        %v1283 = vmul.f32 %v1043, %v1219
        %v1284 = vmul.f32 %v1045, %v1220
        %v1285 = vmul.f32 %v1047, %v1221
        %v1286 = vmul.f32 %v1049, %v1222
        %v1287 = vmul.f32 %v1051, %v1223
        %v1288 = vmul.f32 %v1053, %v1224
        %v1289 = vmul.f32 %v1055, %v1225
        %v1290 = vmul.f32 %v1057, %v1226
        %v1291 = vmul.f32 %v1059, %v1227
        %v1292 = vmul.f32 %v1061, %v1228
        %v1293 = vmul.f32 %v1063, %v1229
        %v1294 = vmul.f32 %v1065, %v1230
        %v1295 = vmul.f32 %v1067, %v1231
        %v1296 = vmul.f32 %v1069, %v1232
        %v1297 = vmul.f32 %v1071, %v1233
        %v1298 = vmul.f32 %v1073, %v1234
        %v1299 = vmul.f32 %v1075, %v1235
        %v1300 = vmul.f32 %v1077, %v1236
        %v1301 = vmul.f32 %v1079, %v1237
        %v1302 = vmul.f32 %v1081, %v1238
        %v1303 = vmul.f32 %v1083, %v1239
        %v1304 = vmul.f32 %v1085, %v1240
        %v1305 = vmul.f32 %v1087, %v1241
        %v1306 = vmul.f32 %v1089, %v1242
        %v1307 = vmul.f32 %v1091, %v1243
        %v1308 = vmul.f32 %v1093, %v1244
        %v1309 = vmul.f32 %v1095, %v1245
        %v1310 = vmul.f32 %v1097, %v1246
        %v1311 = vmul.f32 %v1099, %v1247
        %v1312 = vmul.f32 %v1101, %v1248
        %v1313 = vmul.f32 %v1103, %v1249
        %v1314 = vmul.f32 %v1105, %v1250
        %v1315 = vmul.f32 %v1107, %v1251
        %v1316 = vmul.f32 %v1109, %v1252
        %v1317 = vmul.f32 %v1111, %v1253
        %v1318 = vmul.f32 %v1113, %v1254
        %v1319 = vmul.f32 %v1115, %v1255
        %v1320 = vmul.f32 %v1117, %v1256
        %v1321 = vmul.f32 %v1119, %v1257
        %v1322 = vmul.f32 %v1121, %v1258
        %v1323 = vmul.f32 %v1123, %v1259
        %v1324 = vmul.f32 %v1125, %v1260
        %v1325 = vmul.f32 %v1127, %v1261
        %v1326 = vmul.f32 %v1129, %v1262
        %v1327 = vmul.f32 %v1131, %v1263
        %v1328 = vmul.f32 %v1133, %v1264
        %v1329 = vmul.f32 %v1135, %v1265
        %v1330 = vmul.f32 %v1137, %v1266
        %v1331 = vmul.f32 %v1139, %v1267
        %v1332 = vadd.f32 %v1268, 1.4214138
        %v1333 = vadd.f32 %v1269, 1.4214138
        %v1334 = vadd.f32 %v1270, 1.4214138
        %v1335 = vadd.f32 %v1271, 1.4214138
        %v1336 = vadd.f32 %v1272, 1.4214138
        %v1337 = vadd.f32 %v1273, 1.4214138
        %v1338 = vadd.f32 %v1274, 1.4214138
        %v1339 = vadd.f32 %v1275, 1.4214138
        %v1340 = vadd.f32 %v1276, 1.4214138
        %v1341 = vadd.f32 %v1277, 1.4214138
        %v1342 = vadd.f32 %v1278, 1.4214138
        %v1343 = vadd.f32 %v1279, 1.4214138
        %v1344 = vadd.f32 %v1280, 1.4214138
        %v1345 = vadd.f32 %v1281, 1.4214138
        %v1346 = vadd.f32 %v1282, 1.4214138
        %v1347 = vadd.f32 %v1283, 1.4214138
        %v1348 = vadd.f32 %v1284, 1.4214138
        %v1349 = vadd.f32 %v1285, 1.4214138
        %v1350 = vadd.f32 %v1286, 1.4214138
        %v1351 = vadd.f32 %v1287, 1.4214138
        %v1352 = vadd.f32 %v1288, 1.4214138
        %v1353 = vadd.f32 %v1289, 1.4214138
        %v1354 = vadd.f32 %v1290, 1.4214138
        %v1355 = vadd.f32 %v1291, 1.4214138
        %v1356 = vadd.f32 %v1292, 1.4214138
        %v1357 = vadd.f32 %v1293, 1.4214138
        %v1358 = vadd.f32 %v1294, 1.4214138
        %v1359 = vadd.f32 %v1295, 1.4214138
        %v1360 = vadd.f32 %v1296, 1.4214138
        %v1361 = vadd.f32 %v1297, 1.4214138
        %v1362 = vadd.f32 %v1298, 1.4214138
        %v1363 = vadd.f32 %v1299, 1.4214138
        %v1364 = vadd.f32 %v1300, 1.4214138
        %v1365 = vadd.f32 %v1301, 1.4214138
        %v1366 = vadd.f32 %v1302, 1.4214138
        %v1367 = vadd.f32 %v1303, 1.4214138
        %v1368 = vadd.f32 %v1304, 1.4214138
        %v1369 = vadd.f32 %v1305, 1.4214138
        %v1370 = vadd.f32 %v1306, 1.4214138
        %v1371 = vadd.f32 %v1307, 1.4214138
        %v1372 = vadd.f32 %v1308, 1.4214138
        %v1373 = vadd.f32 %v1309, 1.4214138
        %v1374 = vadd.f32 %v1310, 1.4214138
        %v1375 = vadd.f32 %v1311, 1.4214138
        %v1376 = vadd.f32 %v1312, 1.4214138
        %v1377 = vadd.f32 %v1313, 1.4214138
        %v1378 = vadd.f32 %v1314, 1.4214138
        %v1379 = vadd.f32 %v1315, 1.4214138
        %v1380 = vadd.f32 %v1316, 1.4214138
        %v1381 = vadd.f32 %v1317, 1.4214138
        %v1382 = vadd.f32 %v1318, 1.4214138
        %v1383 = vadd.f32 %v1319, 1.4214138
        %v1384 = vadd.f32 %v1320, 1.4214138
        %v1385 = vadd.f32 %v1321, 1.4214138
        %v1386 = vadd.f32 %v1322, 1.4214138
        %v1387 = vadd.f32 %v1323, 1.4214138
        %v1388 = vadd.f32 %v1324, 1.4214138
        %v1389 = vadd.f32 %v1325, 1.4214138
        %v1390 = vadd.f32 %v1326, 1.4214138
        %v1391 = vadd.f32 %v1327, 1.4214138
        %v1392 = vadd.f32 %v1328, 1.4214138
        %v1393 = vadd.f32 %v1329, 1.4214138
        %v1394 = vadd.f32 %v1330, 1.4214138
        %v1395 = vadd.f32 %v1331, 1.4214138
        %v1396 = vmul.f32 %v1013, %v1332
        %v1397 = vmul.f32 %v1015, %v1333
        %v1398 = vmul.f32 %v1017, %v1334
        %v1399 = vmul.f32 %v1019, %v1335
        %v1400 = vmul.f32 %v1021, %v1336
        %v1401 = vmul.f32 %v1023, %v1337
        %v1402 = vmul.f32 %v1025, %v1338
        %v1403 = vmul.f32 %v1027, %v1339
        %v1404 = vmul.f32 %v1029, %v1340
        %v1405 = vmul.f32 %v1031, %v1341
        %v1406 = vmul.f32 %v1033, %v1342
        %v1407 = vmul.f32 %v1035, %v1343
        %v1408 = vmul.f32 %v1037, %v1344
        %v1409 = vmul.f32 %v1039, %v1345
        %v1410 = vmul.f32 %v1041, %v1346
        %v1411 = vmul.f32 %v1043, %v1347
        %v1412 = vmul.f32 %v1045, %v1348
        %v1413 = vmul.f32 %v1047, %v1349
        %v1414 = vmul.f32 %v1049, %v1350
        %v1415 = vmul.f32 %v1051, %v1351
        %v1416 = vmul.f32 %v1053, %v1352
        %v1417 = vmul.f32 %v1055, %v1353
        %v1418 = vmul.f32 %v1057, %v1354
        %v1419 = vmul.f32 %v1059, %v1355
        %v1420 = vmul.f32 %v1061, %v1356
        %v1421 = vmul.f32 %v1063, %v1357
        %v1422 = vmul.f32 %v1065, %v1358
        %v1423 = vmul.f32 %v1067, %v1359
        %v1424 = vmul.f32 %v1069, %v1360
        %v1425 = vmul.f32 %v1071, %v1361
        %v1426 = vmul.f32 %v1073, %v1362
        %v1427 = vmul.f32 %v1075, %v1363
        %v1428 = vmul.f32 %v1077, %v1364
        %v1429 = vmul.f32 %v1079, %v1365
        %v1430 = vmul.f32 %v1081, %v1366
        %v1431 = vmul.f32 %v1083, %v1367
        %v1432 = vmul.f32 %v1085, %v1368
        %v1433 = vmul.f32 %v1087, %v1369
        %v1434 = vmul.f32 %v1089, %v1370
        %v1435 = vmul.f32 %v1091, %v1371
        %v1436 = vmul.f32 %v1093, %v1372
        %v1437 = vmul.f32 %v1095, %v1373
        %v1438 = vmul.f32 %v1097, %v1374
        %v1439 = vmul.f32 %v1099, %v1375
        %v1440 = vmul.f32 %v1101, %v1376
        %v1441 = vmul.f32 %v1103, %v1377
        %v1442 = vmul.f32 %v1105, %v1378
        %v1443 = vmul.f32 %v1107, %v1379
        %v1444 = vmul.f32 %v1109, %v1380
        %v1445 = vmul.f32 %v1111, %v1381
        %v1446 = vmul.f32 %v1113, %v1382
        %v1447 = vmul.f32 %v1115, %v1383
        %v1448 = vmul.f32 %v1117, %v1384
        %v1449 = vmul.f32 %v1119, %v1385
        %v1450 = vmul.f32 %v1121, %v1386
        %v1451 = vmul.f32 %v1123, %v1387
        %v1452 = vmul.f32 %v1125, %v1388
        %v1453 = vmul.f32 %v1127, %v1389
        %v1454 = vmul.f32 %v1129, %v1390
        %v1455 = vmul.f32 %v1131, %v1391
        %v1456 = vmul.f32 %v1133, %v1392
        %v1457 = vmul.f32 %v1135, %v1393
        %v1458 = vmul.f32 %v1137, %v1394
        %v1459 = vmul.f32 %v1139, %v1395
        %v1460 = vadd.f32 %v1396, -0.28449672
        %v1461 = vadd.f32 %v1397, -0.28449672
        %v1462 = vadd.f32 %v1398, -0.28449672
        %v1463 = vadd.f32 %v1399, -0.28449672
        %v1464 = vadd.f32 %v1400, -0.28449672
        %v1465 = vadd.f32 %v1401, -0.28449672
        %v1466 = vadd.f32 %v1402, -0.28449672
        %v1467 = vadd.f32 %v1403, -0.28449672
        %v1468 = vadd.f32 %v1404, -0.28449672
        %v1469 = vadd.f32 %v1405, -0.28449672
        %v1470 = vadd.f32 %v1406, -0.28449672
        %v1471 = vadd.f32 %v1407, -0.28449672
        %v1472 = vadd.f32 %v1408, -0.28449672
        %v1473 = vadd.f32 %v1409, -0.28449672
        %v1474 = vadd.f32 %v1410, -0.28449672
        %v1475 = vadd.f32 %v1411, -0.28449672
        %v1476 = vadd.f32 %v1412, -0.28449672
        %v1477 = vadd.f32 %v1413, -0.28449672
        %v1478 = vadd.f32 %v1414, -0.28449672
        %v1479 = vadd.f32 %v1415, -0.28449672
        %v1480 = vadd.f32 %v1416, -0.28449672
        %v1481 = vadd.f32 %v1417, -0.28449672
        %v1482 = vadd.f32 %v1418, -0.28449672
        %v1483 = vadd.f32 %v1419, -0.28449672
        %v1484 = vadd.f32 %v1420, -0.28449672
        %v1485 = vadd.f32 %v1421, -0.28449672
        %v1486 = vadd.f32 %v1422, -0.28449672
        %v1487 = vadd.f32 %v1423, -0.28449672
        %v1488 = vadd.f32 %v1424, -0.28449672
        %v1489 = vadd.f32 %v1425, -0.28449672
        %v1490 = vadd.f32 %v1426, -0.28449672
        %v1491 = vadd.f32 %v1427, -0.28449672
        %v1492 = vadd.f32 %v1428, -0.28449672
        %v1493 = vadd.f32 %v1429, -0.28449672
        %v1494 = vadd.f32 %v1430, -0.28449672
        %v1495 = vadd.f32 %v1431, -0.28449672
        %v1496 = vadd.f32 %v1432, -0.28449672
        %v1497 = vadd.f32 %v1433, -0.28449672
        %v1498 = vadd.f32 %v1434, -0.28449672
        %v1499 = vadd.f32 %v1435, -0.28449672
        %v1500 = vadd.f32 %v1436, -0.28449672
        %v1501 = vadd.f32 %v1437, -0.28449672
        %v1502 = vadd.f32 %v1438, -0.28449672
        %v1503 = vadd.f32 %v1439, -0.28449672
        %v1504 = vadd.f32 %v1440, -0.28449672
        %v1505 = vadd.f32 %v1441, -0.28449672
        %v1506 = vadd.f32 %v1442, -0.28449672
        %v1507 = vadd.f32 %v1443, -0.28449672
        %v1508 = vadd.f32 %v1444, -0.28449672
        %v1509 = vadd.f32 %v1445, -0.28449672
        %v1510 = vadd.f32 %v1446, -0.28449672
        %v1511 = vadd.f32 %v1447, -0.28449672
        %v1512 = vadd.f32 %v1448, -0.28449672
        %v1513 = vadd.f32 %v1449, -0.28449672
        %v1514 = vadd.f32 %v1450, -0.28449672
        %v1515 = vadd.f32 %v1451, -0.28449672
        %v1516 = vadd.f32 %v1452, -0.28449672
        %v1517 = vadd.f32 %v1453, -0.28449672
        %v1518 = vadd.f32 %v1454, -0.28449672
        %v1519 = vadd.f32 %v1455, -0.28449672
        %v1520 = vadd.f32 %v1456, -0.28449672
        %v1521 = vadd.f32 %v1457, -0.28449672
        %v1522 = vadd.f32 %v1458, -0.28449672
        %v1523 = vadd.f32 %v1459, -0.28449672
        %v1524 = vmul.f32 %v1013, %v1460
        %v1525 = vmul.f32 %v1015, %v1461
        %v1526 = vmul.f32 %v1017, %v1462
        %v1527 = vmul.f32 %v1019, %v1463
        %v1528 = vmul.f32 %v1021, %v1464
        %v1529 = vmul.f32 %v1023, %v1465
        %v1530 = vmul.f32 %v1025, %v1466
        %v1531 = vmul.f32 %v1027, %v1467
        %v1532 = vmul.f32 %v1029, %v1468
        %v1533 = vmul.f32 %v1031, %v1469
        %v1534 = vmul.f32 %v1033, %v1470
        %v1535 = vmul.f32 %v1035, %v1471
        %v1536 = vmul.f32 %v1037, %v1472
        %v1537 = vmul.f32 %v1039, %v1473
        %v1538 = vmul.f32 %v1041, %v1474
        %v1539 = vmul.f32 %v1043, %v1475
        %v1540 = vmul.f32 %v1045, %v1476
        %v1541 = vmul.f32 %v1047, %v1477
        %v1542 = vmul.f32 %v1049, %v1478
        %v1543 = vmul.f32 %v1051, %v1479
        %v1544 = vmul.f32 %v1053, %v1480
        %v1545 = vmul.f32 %v1055, %v1481
        %v1546 = vmul.f32 %v1057, %v1482
        %v1547 = vmul.f32 %v1059, %v1483
        %v1548 = vmul.f32 %v1061, %v1484
        %v1549 = vmul.f32 %v1063, %v1485
        %v1550 = vmul.f32 %v1065, %v1486
        %v1551 = vmul.f32 %v1067, %v1487
        %v1552 = vmul.f32 %v1069, %v1488
        %v1553 = vmul.f32 %v1071, %v1489
        %v1554 = vmul.f32 %v1073, %v1490
        %v1555 = vmul.f32 %v1075, %v1491
        %v1556 = vmul.f32 %v1077, %v1492
        %v1557 = vmul.f32 %v1079, %v1493
        %v1558 = vmul.f32 %v1081, %v1494
        %v1559 = vmul.f32 %v1083, %v1495
        %v1560 = vmul.f32 %v1085, %v1496
        %v1561 = vmul.f32 %v1087, %v1497
        %v1562 = vmul.f32 %v1089, %v1498
        %v1563 = vmul.f32 %v1091, %v1499
        %v1564 = vmul.f32 %v1093, %v1500
        %v1565 = vmul.f32 %v1095, %v1501
        %v1566 = vmul.f32 %v1097, %v1502
        %v1567 = vmul.f32 %v1099, %v1503
        %v1568 = vmul.f32 %v1101, %v1504
        %v1569 = vmul.f32 %v1103, %v1505
        %v1570 = vmul.f32 %v1105, %v1506
        %v1571 = vmul.f32 %v1107, %v1507
        %v1572 = vmul.f32 %v1109, %v1508
        %v1573 = vmul.f32 %v1111, %v1509
        %v1574 = vmul.f32 %v1113, %v1510
        %v1575 = vmul.f32 %v1115, %v1511
        %v1576 = vmul.f32 %v1117, %v1512
        %v1577 = vmul.f32 %v1119, %v1513
        %v1578 = vmul.f32 %v1121, %v1514
        %v1579 = vmul.f32 %v1123, %v1515
        %v1580 = vmul.f32 %v1125, %v1516
        %v1581 = vmul.f32 %v1127, %v1517
        %v1582 = vmul.f32 %v1129, %v1518
        %v1583 = vmul.f32 %v1131, %v1519
        %v1584 = vmul.f32 %v1133, %v1520
        %v1585 = vmul.f32 %v1135, %v1521
        %v1586 = vmul.f32 %v1137, %v1522
        %v1587 = vmul.f32 %v1139, %v1523
        %v1588 = vadd.f32 %v1524, 0.2548296
        %v1589 = vadd.f32 %v1525, 0.2548296
        %v1590 = vadd.f32 %v1526, 0.2548296
        %v1591 = vadd.f32 %v1527, 0.2548296
        %v1592 = vadd.f32 %v1528, 0.2548296
        %v1593 = vadd.f32 %v1529, 0.2548296
        %v1594 = vadd.f32 %v1530, 0.2548296
        %v1595 = vadd.f32 %v1531, 0.2548296
        %v1596 = vadd.f32 %v1532, 0.2548296
        %v1597 = vadd.f32 %v1533, 0.2548296
        %v1598 = vadd.f32 %v1534, 0.2548296
        %v1599 = vadd.f32 %v1535, 0.2548296
        %v1600 = vadd.f32 %v1536, 0.2548296
        %v1601 = vadd.f32 %v1537, 0.2548296
        %v1602 = vadd.f32 %v1538, 0.2548296
        %v1603 = vadd.f32 %v1539, 0.2548296
        %v1604 = vadd.f32 %v1540, 0.2548296
        %v1605 = vadd.f32 %v1541, 0.2548296
        %v1606 = vadd.f32 %v1542, 0.2548296
        %v1607 = vadd.f32 %v1543, 0.2548296
        %v1608 = vadd.f32 %v1544, 0.2548296
        %v1609 = vadd.f32 %v1545, 0.2548296
        %v1610 = vadd.f32 %v1546, 0.2548296
        %v1611 = vadd.f32 %v1547, 0.2548296
        %v1612 = vadd.f32 %v1548, 0.2548296
        %v1613 = vadd.f32 %v1549, 0.2548296
        %v1614 = vadd.f32 %v1550, 0.2548296
        %v1615 = vadd.f32 %v1551, 0.2548296
        %v1616 = vadd.f32 %v1552, 0.2548296
        %v1617 = vadd.f32 %v1553, 0.2548296
        %v1618 = vadd.f32 %v1554, 0.2548296
        %v1619 = vadd.f32 %v1555, 0.2548296
        %v1620 = vadd.f32 %v1556, 0.2548296
        %v1621 = vadd.f32 %v1557, 0.2548296
        %v1622 = vadd.f32 %v1558, 0.2548296
        %v1623 = vadd.f32 %v1559, 0.2548296
        %v1624 = vadd.f32 %v1560, 0.2548296
        %v1625 = vadd.f32 %v1561, 0.2548296
        %v1626 = vadd.f32 %v1562, 0.2548296
        %v1627 = vadd.f32 %v1563, 0.2548296
        %v1628 = vadd.f32 %v1564, 0.2548296
        %v1629 = vadd.f32 %v1565, 0.2548296
        %v1630 = vadd.f32 %v1566, 0.2548296
        %v1631 = vadd.f32 %v1567, 0.2548296
        %v1632 = vadd.f32 %v1568, 0.2548296
        %v1633 = vadd.f32 %v1569, 0.2548296
        %v1634 = vadd.f32 %v1570, 0.2548296
        %v1635 = vadd.f32 %v1571, 0.2548296
        %v1636 = vadd.f32 %v1572, 0.2548296
        %v1637 = vadd.f32 %v1573, 0.2548296
        %v1638 = vadd.f32 %v1574, 0.2548296
        %v1639 = vadd.f32 %v1575, 0.2548296
        %v1640 = vadd.f32 %v1576, 0.2548296
        %v1641 = vadd.f32 %v1577, 0.2548296
        %v1642 = vadd.f32 %v1578, 0.2548296
        %v1643 = vadd.f32 %v1579, 0.2548296
        %v1644 = vadd.f32 %v1580, 0.2548296
        %v1645 = vadd.f32 %v1581, 0.2548296
        %v1646 = vadd.f32 %v1582, 0.2548296
        %v1647 = vadd.f32 %v1583, 0.2548296
        %v1648 = vadd.f32 %v1584, 0.2548296
        %v1649 = vadd.f32 %v1585, 0.2548296
        %v1650 = vadd.f32 %v1586, 0.2548296
        %v1651 = vadd.f32 %v1587, 0.2548296
        %v1652 = vmul.f32 %v1013, %v1588
        %v1653 = vmul.f32 %v1015, %v1589
        %v1654 = vmul.f32 %v1017, %v1590
        %v1655 = vmul.f32 %v1019, %v1591
        %v1656 = vmul.f32 %v1021, %v1592
        %v1657 = vmul.f32 %v1023, %v1593
        %v1658 = vmul.f32 %v1025, %v1594
        %v1659 = vmul.f32 %v1027, %v1595
        %v1660 = vmul.f32 %v1029, %v1596
        %v1661 = vmul.f32 %v1031, %v1597
        %v1662 = vmul.f32 %v1033, %v1598
        %v1663 = vmul.f32 %v1035, %v1599
        %v1664 = vmul.f32 %v1037, %v1600
        %v1665 = vmul.f32 %v1039, %v1601
        %v1666 = vmul.f32 %v1041, %v1602
        %v1667 = vmul.f32 %v1043, %v1603
        %v1668 = vmul.f32 %v1045, %v1604
        %v1669 = vmul.f32 %v1047, %v1605
        %v1670 = vmul.f32 %v1049, %v1606
        %v1671 = vmul.f32 %v1051, %v1607
        %v1672 = vmul.f32 %v1053, %v1608
        %v1673 = vmul.f32 %v1055, %v1609
        %v1674 = vmul.f32 %v1057, %v1610
        %v1675 = vmul.f32 %v1059, %v1611
        %v1676 = vmul.f32 %v1061, %v1612
        %v1677 = vmul.f32 %v1063, %v1613
        %v1678 = vmul.f32 %v1065, %v1614
        %v1679 = vmul.f32 %v1067, %v1615
        %v1680 = vmul.f32 %v1069, %v1616
        %v1681 = vmul.f32 %v1071, %v1617
        %v1682 = vmul.f32 %v1073, %v1618
        %v1683 = vmul.f32 %v1075, %v1619
        %v1684 = vmul.f32 %v1077, %v1620
        %v1685 = vmul.f32 %v1079, %v1621
        %v1686 = vmul.f32 %v1081, %v1622
        %v1687 = vmul.f32 %v1083, %v1623
        %v1688 = vmul.f32 %v1085, %v1624
        %v1689 = vmul.f32 %v1087, %v1625
        %v1690 = vmul.f32 %v1089, %v1626
        %v1691 = vmul.f32 %v1091, %v1627
        %v1692 = vmul.f32 %v1093, %v1628
        %v1693 = vmul.f32 %v1095, %v1629
        %v1694 = vmul.f32 %v1097, %v1630
        %v1695 = vmul.f32 %v1099, %v1631
        %v1696 = vmul.f32 %v1101, %v1632
        %v1697 = vmul.f32 %v1103, %v1633
        %v1698 = vmul.f32 %v1105, %v1634
        %v1699 = vmul.f32 %v1107, %v1635
        %v1700 = vmul.f32 %v1109, %v1636
        %v1701 = vmul.f32 %v1111, %v1637
        %v1702 = vmul.f32 %v1113, %v1638
        %v1703 = vmul.f32 %v1115, %v1639
        %v1704 = vmul.f32 %v1117, %v1640
        %v1705 = vmul.f32 %v1119, %v1641
        %v1706 = vmul.f32 %v1121, %v1642
        %v1707 = vmul.f32 %v1123, %v1643
        %v1708 = vmul.f32 %v1125, %v1644
        %v1709 = vmul.f32 %v1127, %v1645
        %v1710 = vmul.f32 %v1129, %v1646
        %v1711 = vmul.f32 %v1131, %v1647
        %v1712 = vmul.f32 %v1133, %v1648
        %v1713 = vmul.f32 %v1135, %v1649
        %v1714 = vmul.f32 %v1137, %v1650
        %v1715 = vmul.f32 %v1139, %v1651
        %v1716 = vmul.f32 %v820, %v820
        %v1717 = vmul.f32 %v821, %v821
        %v1718 = vmul.f32 %v822, %v822
        %v1719 = vmul.f32 %v823, %v823
        %v1720 = vmul.f32 %v824, %v824
        %v1721 = vmul.f32 %v825, %v825
        %v1722 = vmul.f32 %v826, %v826
        %v1723 = vmul.f32 %v827, %v827
        %v1724 = vmul.f32 %v828, %v828
        %v1725 = vmul.f32 %v829, %v829
        %v1726 = vmul.f32 %v830, %v830
        %v1727 = vmul.f32 %v831, %v831
        %v1728 = vmul.f32 %v832, %v832
        %v1729 = vmul.f32 %v833, %v833
        %v1730 = vmul.f32 %v834, %v834
        %v1731 = vmul.f32 %v835, %v835
        %v1732 = vmul.f32 %v836, %v836
        %v1733 = vmul.f32 %v837, %v837
        %v1734 = vmul.f32 %v838, %v838
        %v1735 = vmul.f32 %v839, %v839
        %v1736 = vmul.f32 %v840, %v840
        %v1737 = vmul.f32 %v841, %v841
        %v1738 = vmul.f32 %v842, %v842
        %v1739 = vmul.f32 %v843, %v843
        %v1740 = vmul.f32 %v844, %v844
        %v1741 = vmul.f32 %v845, %v845
        %v1742 = vmul.f32 %v846, %v846
        %v1743 = vmul.f32 %v847, %v847
        %v1744 = vmul.f32 %v848, %v848
        %v1745 = vmul.f32 %v849, %v849
        %v1746 = vmul.f32 %v850, %v850
        %v1747 = vmul.f32 %v851, %v851
        %v1748 = vmul.f32 %v852, %v852
        %v1749 = vmul.f32 %v853, %v853
        %v1750 = vmul.f32 %v854, %v854
        %v1751 = vmul.f32 %v855, %v855
        %v1752 = vmul.f32 %v856, %v856
        %v1753 = vmul.f32 %v857, %v857
        %v1754 = vmul.f32 %v858, %v858
        %v1755 = vmul.f32 %v859, %v859
        %v1756 = vmul.f32 %v860, %v860
        %v1757 = vmul.f32 %v861, %v861
        %v1758 = vmul.f32 %v862, %v862
        %v1759 = vmul.f32 %v863, %v863
        %v1760 = vmul.f32 %v864, %v864
        %v1761 = vmul.f32 %v865, %v865
        %v1762 = vmul.f32 %v866, %v866
        %v1763 = vmul.f32 %v867, %v867
        %v1764 = vmul.f32 %v868, %v868
        %v1765 = vmul.f32 %v869, %v869
        %v1766 = vmul.f32 %v870, %v870
        %v1767 = vmul.f32 %v871, %v871
        %v1768 = vmul.f32 %v872, %v872
        %v1769 = vmul.f32 %v873, %v873
        %v1770 = vmul.f32 %v874, %v874
        %v1771 = vmul.f32 %v875, %v875
        %v1772 = vmul.f32 %v876, %v876
        %v1773 = vmul.f32 %v877, %v877
        %v1774 = vmul.f32 %v878, %v878
        %v1775 = vmul.f32 %v879, %v879
        %v1776 = vmul.f32 %v880, %v880
        %v1777 = vmul.f32 %v881, %v881
        %v1778 = vmul.f32 %v882, %v882
        %v1779 = vmul.f32 %v883, %v883
        %v1780 = vsub.f32 0.0, %v1716
        %v1781 = vsub.f32 0.0, %v1717
        %v1782 = vsub.f32 0.0, %v1718
        %v1783 = vsub.f32 0.0, %v1719
        %v1784 = vsub.f32 0.0, %v1720
        %v1785 = vsub.f32 0.0, %v1721
        %v1786 = vsub.f32 0.0, %v1722
        %v1787 = vsub.f32 0.0, %v1723
        %v1788 = vsub.f32 0.0, %v1724
        %v1789 = vsub.f32 0.0, %v1725
        %v1790 = vsub.f32 0.0, %v1726
        %v1791 = vsub.f32 0.0, %v1727
        %v1792 = vsub.f32 0.0, %v1728
        %v1793 = vsub.f32 0.0, %v1729
        %v1794 = vsub.f32 0.0, %v1730
        %v1795 = vsub.f32 0.0, %v1731
        %v1796 = vsub.f32 0.0, %v1732
        %v1797 = vsub.f32 0.0, %v1733
        %v1798 = vsub.f32 0.0, %v1734
        %v1799 = vsub.f32 0.0, %v1735
        %v1800 = vsub.f32 0.0, %v1736
        %v1801 = vsub.f32 0.0, %v1737
        %v1802 = vsub.f32 0.0, %v1738
        %v1803 = vsub.f32 0.0, %v1739
        %v1804 = vsub.f32 0.0, %v1740
        %v1805 = vsub.f32 0.0, %v1741
        %v1806 = vsub.f32 0.0, %v1742
        %v1807 = vsub.f32 0.0, %v1743
        %v1808 = vsub.f32 0.0, %v1744
        %v1809 = vsub.f32 0.0, %v1745
        %v1810 = vsub.f32 0.0, %v1746
        %v1811 = vsub.f32 0.0, %v1747
        %v1812 = vsub.f32 0.0, %v1748
        %v1813 = vsub.f32 0.0, %v1749
        %v1814 = vsub.f32 0.0, %v1750
        %v1815 = vsub.f32 0.0, %v1751
        %v1816 = vsub.f32 0.0, %v1752
        %v1817 = vsub.f32 0.0, %v1753
        %v1818 = vsub.f32 0.0, %v1754
        %v1819 = vsub.f32 0.0, %v1755
        %v1820 = vsub.f32 0.0, %v1756
        %v1821 = vsub.f32 0.0, %v1757
        %v1822 = vsub.f32 0.0, %v1758
        %v1823 = vsub.f32 0.0, %v1759
        %v1824 = vsub.f32 0.0, %v1760
        %v1825 = vsub.f32 0.0, %v1761
        %v1826 = vsub.f32 0.0, %v1762
        %v1827 = vsub.f32 0.0, %v1763
        %v1828 = vsub.f32 0.0, %v1764
        %v1829 = vsub.f32 0.0, %v1765
        %v1830 = vsub.f32 0.0, %v1766
        %v1831 = vsub.f32 0.0, %v1767
        %v1832 = vsub.f32 0.0, %v1768
        %v1833 = vsub.f32 0.0, %v1769
        %v1834 = vsub.f32 0.0, %v1770
        %v1835 = vsub.f32 0.0, %v1771
        %v1836 = vsub.f32 0.0, %v1772
        %v1837 = vsub.f32 0.0, %v1773
        %v1838 = vsub.f32 0.0, %v1774
        %v1839 = vsub.f32 0.0, %v1775
        %v1840 = vsub.f32 0.0, %v1776
        %v1841 = vsub.f32 0.0, %v1777
        %v1842 = vsub.f32 0.0, %v1778
        %v1843 = vsub.f32 0.0, %v1779
        %v1844 = vmul.f32 %v1780, 1.442695
        %v1845 = vpow.pop %v1844
        %v1846 = vmul.f32 %v1781, 1.442695
        %v1847 = vpow.pop %v1846
        %v1848 = vmul.f32 %v1782, 1.442695
        %v1849 = vpow.pop %v1848
        %v1850 = vmul.f32 %v1783, 1.442695
        %v1851 = vpow.pop %v1850
        %v1852 = vmul.f32 %v1784, 1.442695
        %v1853 = vpow.pop %v1852
        %v1854 = vmul.f32 %v1785, 1.442695
        %v1855 = vpow.pop %v1854
        %v1856 = vmul.f32 %v1786, 1.442695
        %v1857 = vpow.pop %v1856
        %v1858 = vmul.f32 %v1787, 1.442695
        %v1859 = vpow.pop %v1858
        %v1860 = vmul.f32 %v1788, 1.442695
        %v1861 = vpow.pop %v1860
        %v1862 = vmul.f32 %v1789, 1.442695
        %v1863 = vpow.pop %v1862
        %v1864 = vmul.f32 %v1790, 1.442695
        %v1865 = vpow.pop %v1864
        %v1866 = vmul.f32 %v1791, 1.442695
        %v1867 = vpow.pop %v1866
        %v1868 = vmul.f32 %v1792, 1.442695
        %v1869 = vpow.pop %v1868
        %v1870 = vmul.f32 %v1793, 1.442695
        %v1871 = vpow.pop %v1870
        %v1872 = vmul.f32 %v1794, 1.442695
        %v1873 = vpow.pop %v1872
        %v1874 = vmul.f32 %v1795, 1.442695
        %v1875 = vpow.pop %v1874
        %v1876 = vmul.f32 %v1796, 1.442695
        %v1877 = vpow.pop %v1876
        %v1878 = vmul.f32 %v1797, 1.442695
        %v1879 = vpow.pop %v1878
        %v1880 = vmul.f32 %v1798, 1.442695
        %v1881 = vpow.pop %v1880
        %v1882 = vmul.f32 %v1799, 1.442695
        %v1883 = vpow.pop %v1882
        %v1884 = vmul.f32 %v1800, 1.442695
        %v1885 = vpow.pop %v1884
        %v1886 = vmul.f32 %v1801, 1.442695
        %v1887 = vpow.pop %v1886
        %v1888 = vmul.f32 %v1802, 1.442695
        %v1889 = vpow.pop %v1888
        %v1890 = vmul.f32 %v1803, 1.442695
        %v1891 = vpow.pop %v1890
        %v1892 = vmul.f32 %v1804, 1.442695
        %v1893 = vpow.pop %v1892
        %v1894 = vmul.f32 %v1805, 1.442695
        %v1895 = vpow.pop %v1894
        %v1896 = vmul.f32 %v1806, 1.442695
        %v1897 = vpow.pop %v1896
        %v1898 = vmul.f32 %v1807, 1.442695
        %v1899 = vpow.pop %v1898
        %v1900 = vmul.f32 %v1808, 1.442695
        %v1901 = vpow.pop %v1900
        %v1902 = vmul.f32 %v1809, 1.442695
        %v1903 = vpow.pop %v1902
        %v1904 = vmul.f32 %v1810, 1.442695
        %v1905 = vpow.pop %v1904
        %v1906 = vmul.f32 %v1811, 1.442695
        %v1907 = vpow.pop %v1906
        %v1908 = vmul.f32 %v1812, 1.442695
        %v1909 = vpow.pop %v1908
        %v1910 = vmul.f32 %v1813, 1.442695
        %v1911 = vpow.pop %v1910
        %v1912 = vmul.f32 %v1814, 1.442695
        %v1913 = vpow.pop %v1912
        %v1914 = vmul.f32 %v1815, 1.442695
        %v1915 = vpow.pop %v1914
        %v1916 = vmul.f32 %v1816, 1.442695
        %v1917 = vpow.pop %v1916
        %v1918 = vmul.f32 %v1817, 1.442695
        %v1919 = vpow.pop %v1918
        %v1920 = vmul.f32 %v1818, 1.442695
        %v1921 = vpow.pop %v1920
        %v1922 = vmul.f32 %v1819, 1.442695
        %v1923 = vpow.pop %v1922
        %v1924 = vmul.f32 %v1820, 1.442695
        %v1925 = vpow.pop %v1924
        %v1926 = vmul.f32 %v1821, 1.442695
        %v1927 = vpow.pop %v1926
        %v1928 = vmul.f32 %v1822, 1.442695
        %v1929 = vpow.pop %v1928
        %v1930 = vmul.f32 %v1823, 1.442695
        %v1931 = vpow.pop %v1930
        %v1932 = vmul.f32 %v1824, 1.442695
        %v1933 = vpow.pop %v1932
        %v1934 = vmul.f32 %v1825, 1.442695
        %v1935 = vpow.pop %v1934
        %v1936 = vmul.f32 %v1826, 1.442695
        %v1937 = vpow.pop %v1936
        %v1938 = vmul.f32 %v1827, 1.442695
        %v1939 = vpow.pop %v1938
        %v1940 = vmul.f32 %v1828, 1.442695
        %v1941 = vpow.pop %v1940
        %v1942 = vmul.f32 %v1829, 1.442695
        %v1943 = vpow.pop %v1942
        %v1944 = vmul.f32 %v1830, 1.442695
        %v1945 = vpow.pop %v1944
        %v1946 = vmul.f32 %v1831, 1.442695
        %v1947 = vpow.pop %v1946
        %v1948 = vmul.f32 %v1832, 1.442695
        %v1949 = vpow.pop %v1948
        %v1950 = vmul.f32 %v1833, 1.442695
        %v1951 = vpow.pop %v1950
        %v1952 = vmul.f32 %v1834, 1.442695
        %v1953 = vpow.pop %v1952
        %v1954 = vmul.f32 %v1835, 1.442695
        %v1955 = vpow.pop %v1954
        %v1956 = vmul.f32 %v1836, 1.442695
        %v1957 = vpow.pop %v1956
        %v1958 = vmul.f32 %v1837, 1.442695
        %v1959 = vpow.pop %v1958
        %v1960 = vmul.f32 %v1838, 1.442695
        %v1961 = vpow.pop %v1960
        %v1962 = vmul.f32 %v1839, 1.442695
        %v1963 = vpow.pop %v1962
        %v1964 = vmul.f32 %v1840, 1.442695
        %v1965 = vpow.pop %v1964
        %v1966 = vmul.f32 %v1841, 1.442695
        %v1967 = vpow.pop %v1966
        %v1968 = vmul.f32 %v1842, 1.442695
        %v1969 = vpow.pop %v1968
        %v1970 = vmul.f32 %v1843, 1.442695
        %v1971 = vpow.pop %v1970
        %v1972 = vmul.f32 %v1652, %v1845
        %v1973 = vmul.f32 %v1653, %v1847
        %v1974 = vmul.f32 %v1654, %v1849
        %v1975 = vmul.f32 %v1655, %v1851
        %v1976 = vmul.f32 %v1656, %v1853
        %v1977 = vmul.f32 %v1657, %v1855
        %v1978 = vmul.f32 %v1658, %v1857
        %v1979 = vmul.f32 %v1659, %v1859
        %v1980 = vmul.f32 %v1660, %v1861
        %v1981 = vmul.f32 %v1661, %v1863
        %v1982 = vmul.f32 %v1662, %v1865
        %v1983 = vmul.f32 %v1663, %v1867
        %v1984 = vmul.f32 %v1664, %v1869
        %v1985 = vmul.f32 %v1665, %v1871
        %v1986 = vmul.f32 %v1666, %v1873
        %v1987 = vmul.f32 %v1667, %v1875
        %v1988 = vmul.f32 %v1668, %v1877
        %v1989 = vmul.f32 %v1669, %v1879
        %v1990 = vmul.f32 %v1670, %v1881
        %v1991 = vmul.f32 %v1671, %v1883
        %v1992 = vmul.f32 %v1672, %v1885
        %v1993 = vmul.f32 %v1673, %v1887
        %v1994 = vmul.f32 %v1674, %v1889
        %v1995 = vmul.f32 %v1675, %v1891
        %v1996 = vmul.f32 %v1676, %v1893
        %v1997 = vmul.f32 %v1677, %v1895
        %v1998 = vmul.f32 %v1678, %v1897
        %v1999 = vmul.f32 %v1679, %v1899
        %v2000 = vmul.f32 %v1680, %v1901
        %v2001 = vmul.f32 %v1681, %v1903
        %v2002 = vmul.f32 %v1682, %v1905
        %v2003 = vmul.f32 %v1683, %v1907
        %v2004 = vmul.f32 %v1684, %v1909
        %v2005 = vmul.f32 %v1685, %v1911
        %v2006 = vmul.f32 %v1686, %v1913
        %v2007 = vmul.f32 %v1687, %v1915
        %v2008 = vmul.f32 %v1688, %v1917
        %v2009 = vmul.f32 %v1689, %v1919
        %v2010 = vmul.f32 %v1690, %v1921
        %v2011 = vmul.f32 %v1691, %v1923
        %v2012 = vmul.f32 %v1692, %v1925
        %v2013 = vmul.f32 %v1693, %v1927
        %v2014 = vmul.f32 %v1694, %v1929
        %v2015 = vmul.f32 %v1695, %v1931
        %v2016 = vmul.f32 %v1696, %v1933
        %v2017 = vmul.f32 %v1697, %v1935
        %v2018 = vmul.f32 %v1698, %v1937
        %v2019 = vmul.f32 %v1699, %v1939
        %v2020 = vmul.f32 %v1700, %v1941
        %v2021 = vmul.f32 %v1701, %v1943
        %v2022 = vmul.f32 %v1702, %v1945
        %v2023 = vmul.f32 %v1703, %v1947
        %v2024 = vmul.f32 %v1704, %v1949
        %v2025 = vmul.f32 %v1705, %v1951
        %v2026 = vmul.f32 %v1706, %v1953
        %v2027 = vmul.f32 %v1707, %v1955
        %v2028 = vmul.f32 %v1708, %v1957
        %v2029 = vmul.f32 %v1709, %v1959
        %v2030 = vmul.f32 %v1710, %v1961
        %v2031 = vmul.f32 %v1711, %v1963
        %v2032 = vmul.f32 %v1712, %v1965
        %v2033 = vmul.f32 %v1713, %v1967
        %v2034 = vmul.f32 %v1714, %v1969
        %v2035 = vmul.f32 %v1715, %v1971
        %v2036 = vsub.f32 1.0, %v1972
        %v2037 = vsub.f32 1.0, %v1973
        %v2038 = vsub.f32 1.0, %v1974
        %v2039 = vsub.f32 1.0, %v1975
        %v2040 = vsub.f32 1.0, %v1976
        %v2041 = vsub.f32 1.0, %v1977
        %v2042 = vsub.f32 1.0, %v1978
        %v2043 = vsub.f32 1.0, %v1979
        %v2044 = vsub.f32 1.0, %v1980
        %v2045 = vsub.f32 1.0, %v1981
        %v2046 = vsub.f32 1.0, %v1982
        %v2047 = vsub.f32 1.0, %v1983
        %v2048 = vsub.f32 1.0, %v1984
        %v2049 = vsub.f32 1.0, %v1985
        %v2050 = vsub.f32 1.0, %v1986
        %v2051 = vsub.f32 1.0, %v1987
        %v2052 = vsub.f32 1.0, %v1988
        %v2053 = vsub.f32 1.0, %v1989
        %v2054 = vsub.f32 1.0, %v1990
        %v2055 = vsub.f32 1.0, %v1991
        %v2056 = vsub.f32 1.0, %v1992
        %v2057 = vsub.f32 1.0, %v1993
        %v2058 = vsub.f32 1.0, %v1994
        %v2059 = vsub.f32 1.0, %v1995
        %v2060 = vsub.f32 1.0, %v1996
        %v2061 = vsub.f32 1.0, %v1997
        %v2062 = vsub.f32 1.0, %v1998
        %v2063 = vsub.f32 1.0, %v1999
        %v2064 = vsub.f32 1.0, %v2000
        %v2065 = vsub.f32 1.0, %v2001
        %v2066 = vsub.f32 1.0, %v2002
        %v2067 = vsub.f32 1.0, %v2003
        %v2068 = vsub.f32 1.0, %v2004
        %v2069 = vsub.f32 1.0, %v2005
        %v2070 = vsub.f32 1.0, %v2006
        %v2071 = vsub.f32 1.0, %v2007
        %v2072 = vsub.f32 1.0, %v2008
        %v2073 = vsub.f32 1.0, %v2009
        %v2074 = vsub.f32 1.0, %v2010
        %v2075 = vsub.f32 1.0, %v2011
        %v2076 = vsub.f32 1.0, %v2012
        %v2077 = vsub.f32 1.0, %v2013
        %v2078 = vsub.f32 1.0, %v2014
        %v2079 = vsub.f32 1.0, %v2015
        %v2080 = vsub.f32 1.0, %v2016
        %v2081 = vsub.f32 1.0, %v2017
        %v2082 = vsub.f32 1.0, %v2018
        %v2083 = vsub.f32 1.0, %v2019
        %v2084 = vsub.f32 1.0, %v2020
        %v2085 = vsub.f32 1.0, %v2021
        %v2086 = vsub.f32 1.0, %v2022
        %v2087 = vsub.f32 1.0, %v2023
        %v2088 = vsub.f32 1.0, %v2024
        %v2089 = vsub.f32 1.0, %v2025
        %v2090 = vsub.f32 1.0, %v2026
        %v2091 = vsub.f32 1.0, %v2027
        %v2092 = vsub.f32 1.0, %v2028
        %v2093 = vsub.f32 1.0, %v2029
        %v2094 = vsub.f32 1.0, %v2030
        %v2095 = vsub.f32 1.0, %v2031
        %v2096 = vsub.f32 1.0, %v2032
        %v2097 = vsub.f32 1.0, %v2033
        %v2098 = vsub.f32 1.0, %v2034
        %v2099 = vsub.f32 1.0, %v2035
        %vm2100 = vcmp.lt.f32.partialorder %v756, 0.0
        %vm2101 = vcmp.lt.f32.partialorder %v757, 0.0
        %vm2102 = vcmp.lt.f32.partialorder %v758, 0.0
        %vm2103 = vcmp.lt.f32.partialorder %v759, 0.0
        %vm2104 = vcmp.lt.f32.partialorder %v760, 0.0
        %vm2105 = vcmp.lt.f32.partialorder %v761, 0.0
        %vm2106 = vcmp.lt.f32.partialorder %v762, 0.0
        %vm2107 = vcmp.lt.f32.partialorder %v763, 0.0
        %vm2108 = vcmp.lt.f32.partialorder %v764, 0.0
        %vm2109 = vcmp.lt.f32.partialorder %v765, 0.0
        %vm2110 = vcmp.lt.f32.partialorder %v766, 0.0
        %vm2111 = vcmp.lt.f32.partialorder %v767, 0.0
        %vm2112 = vcmp.lt.f32.partialorder %v768, 0.0
        %vm2113 = vcmp.lt.f32.partialorder %v769, 0.0
        %vm2114 = vcmp.lt.f32.partialorder %v770, 0.0
        %vm2115 = vcmp.lt.f32.partialorder %v771, 0.0
        %vm2116 = vcmp.lt.f32.partialorder %v772, 0.0
        %vm2117 = vcmp.lt.f32.partialorder %v773, 0.0
        %vm2118 = vcmp.lt.f32.partialorder %v774, 0.0
        %vm2119 = vcmp.lt.f32.partialorder %v775, 0.0
        %vm2120 = vcmp.lt.f32.partialorder %v776, 0.0
        %vm2121 = vcmp.lt.f32.partialorder %v777, 0.0
        %vm2122 = vcmp.lt.f32.partialorder %v778, 0.0
        %vm2123 = vcmp.lt.f32.partialorder %v779, 0.0
        %vm2124 = vcmp.lt.f32.partialorder %v780, 0.0
        %vm2125 = vcmp.lt.f32.partialorder %v781, 0.0
        %vm2126 = vcmp.lt.f32.partialorder %v782, 0.0
        %vm2127 = vcmp.lt.f32.partialorder %v783, 0.0
        %vm2128 = vcmp.lt.f32.partialorder %v784, 0.0
        %vm2129 = vcmp.lt.f32.partialorder %v785, 0.0
        %vm2130 = vcmp.lt.f32.partialorder %v786, 0.0
        %vm2131 = vcmp.lt.f32.partialorder %v787, 0.0
        %vm2132 = vcmp.lt.f32.partialorder %v788, 0.0
        %vm2133 = vcmp.lt.f32.partialorder %v789, 0.0
        %vm2134 = vcmp.lt.f32.partialorder %v790, 0.0
        %vm2135 = vcmp.lt.f32.partialorder %v791, 0.0
        %vm2136 = vcmp.lt.f32.partialorder %v792, 0.0
        %vm2137 = vcmp.lt.f32.partialorder %v793, 0.0
        %vm2138 = vcmp.lt.f32.partialorder %v794, 0.0
        %vm2139 = vcmp.lt.f32.partialorder %v795, 0.0
        %vm2140 = vcmp.lt.f32.partialorder %v796, 0.0
        %vm2141 = vcmp.lt.f32.partialorder %v797, 0.0
        %vm2142 = vcmp.lt.f32.partialorder %v798, 0.0
        %vm2143 = vcmp.lt.f32.partialorder %v799, 0.0
        %vm2144 = vcmp.lt.f32.partialorder %v800, 0.0
        %vm2145 = vcmp.lt.f32.partialorder %v801, 0.0
        %vm2146 = vcmp.lt.f32.partialorder %v802, 0.0
        %vm2147 = vcmp.lt.f32.partialorder %v803, 0.0
        %vm2148 = vcmp.lt.f32.partialorder %v804, 0.0
        %vm2149 = vcmp.lt.f32.partialorder %v805, 0.0
        %vm2150 = vcmp.lt.f32.partialorder %v806, 0.0
        %vm2151 = vcmp.lt.f32.partialorder %v807, 0.0
        %vm2152 = vcmp.lt.f32.partialorder %v808, 0.0
        %vm2153 = vcmp.lt.f32.partialorder %v809, 0.0
        %vm2154 = vcmp.lt.f32.partialorder %v810, 0.0
        %vm2155 = vcmp.lt.f32.partialorder %v811, 0.0
        %vm2156 = vcmp.lt.f32.partialorder %v812, 0.0
        %vm2157 = vcmp.lt.f32.partialorder %v813, 0.0
        %vm2158 = vcmp.lt.f32.partialorder %v814, 0.0
        %vm2159 = vcmp.lt.f32.partialorder %v815, 0.0
        %vm2160 = vcmp.lt.f32.partialorder %v816, 0.0
        %vm2161 = vcmp.lt.f32.partialorder %v817, 0.0
        %vm2162 = vcmp.lt.f32.partialorder %v818, 0.0
        %vm2163 = vcmp.lt.f32.partialorder %v819, 0.0
        %v2164 = vsub.f32 0.0, %v2036
        %v2165 = vsub.f32 0.0, %v2037
        %v2166 = vsub.f32 0.0, %v2038
        %v2167 = vsub.f32 0.0, %v2039
        %v2168 = vsub.f32 0.0, %v2040
        %v2169 = vsub.f32 0.0, %v2041
        %v2170 = vsub.f32 0.0, %v2042
        %v2171 = vsub.f32 0.0, %v2043
        %v2172 = vsub.f32 0.0, %v2044
        %v2173 = vsub.f32 0.0, %v2045
        %v2174 = vsub.f32 0.0, %v2046
        %v2175 = vsub.f32 0.0, %v2047
        %v2176 = vsub.f32 0.0, %v2048
        %v2177 = vsub.f32 0.0, %v2049
        %v2178 = vsub.f32 0.0, %v2050
        %v2179 = vsub.f32 0.0, %v2051
        %v2180 = vsub.f32 0.0, %v2052
        %v2181 = vsub.f32 0.0, %v2053
        %v2182 = vsub.f32 0.0, %v2054
        %v2183 = vsub.f32 0.0, %v2055
        %v2184 = vsub.f32 0.0, %v2056
        %v2185 = vsub.f32 0.0, %v2057
        %v2186 = vsub.f32 0.0, %v2058
        %v2187 = vsub.f32 0.0, %v2059
        %v2188 = vsub.f32 0.0, %v2060
        %v2189 = vsub.f32 0.0, %v2061
        %v2190 = vsub.f32 0.0, %v2062
        %v2191 = vsub.f32 0.0, %v2063
        %v2192 = vsub.f32 0.0, %v2064
        %v2193 = vsub.f32 0.0, %v2065
        %v2194 = vsub.f32 0.0, %v2066
        %v2195 = vsub.f32 0.0, %v2067
        %v2196 = vsub.f32 0.0, %v2068
        %v2197 = vsub.f32 0.0, %v2069
        %v2198 = vsub.f32 0.0, %v2070
        %v2199 = vsub.f32 0.0, %v2071
        %v2200 = vsub.f32 0.0, %v2072
        %v2201 = vsub.f32 0.0, %v2073
        %v2202 = vsub.f32 0.0, %v2074
        %v2203 = vsub.f32 0.0, %v2075
        %v2204 = vsub.f32 0.0, %v2076
        %v2205 = vsub.f32 0.0, %v2077
        %v2206 = vsub.f32 0.0, %v2078
        %v2207 = vsub.f32 0.0, %v2079
        %v2208 = vsub.f32 0.0, %v2080
        %v2209 = vsub.f32 0.0, %v2081
        %v2210 = vsub.f32 0.0, %v2082
        %v2211 = vsub.f32 0.0, %v2083
        %v2212 = vsub.f32 0.0, %v2084
        %v2213 = vsub.f32 0.0, %v2085
        %v2214 = vsub.f32 0.0, %v2086
        %v2215 = vsub.f32 0.0, %v2087
        %v2216 = vsub.f32 0.0, %v2088
        %v2217 = vsub.f32 0.0, %v2089
        %v2218 = vsub.f32 0.0, %v2090
        %v2219 = vsub.f32 0.0, %v2091
        %v2220 = vsub.f32 0.0, %v2092
        %v2221 = vsub.f32 0.0, %v2093
        %v2222 = vsub.f32 0.0, %v2094
        %v2223 = vsub.f32 0.0, %v2095
        %v2224 = vsub.f32 0.0, %v2096
        %v2225 = vsub.f32 0.0, %v2097
        %v2226 = vsub.f32 0.0, %v2098
        %v2227 = vsub.f32 0.0, %v2099
        %v2228 = vsel %vm2100, %v2164, %v2036
        %v2229 = vsel %vm2101, %v2165, %v2037
        %v2230 = vsel %vm2102, %v2166, %v2038
        %v2231 = vsel %vm2103, %v2167, %v2039
        %v2232 = vsel %vm2104, %v2168, %v2040
        %v2233 = vsel %vm2105, %v2169, %v2041
        %v2234 = vsel %vm2106, %v2170, %v2042
        %v2235 = vsel %vm2107, %v2171, %v2043
        %v2236 = vsel %vm2108, %v2172, %v2044
        %v2237 = vsel %vm2109, %v2173, %v2045
        %v2238 = vsel %vm2110, %v2174, %v2046
        %v2239 = vsel %vm2111, %v2175, %v2047
        %v2240 = vsel %vm2112, %v2176, %v2048
        %v2241 = vsel %vm2113, %v2177, %v2049
        %v2242 = vsel %vm2114, %v2178, %v2050
        %v2243 = vsel %vm2115, %v2179, %v2051
        %v2244 = vsel %vm2116, %v2180, %v2052
        %v2245 = vsel %vm2117, %v2181, %v2053
        %v2246 = vsel %vm2118, %v2182, %v2054
        %v2247 = vsel %vm2119, %v2183, %v2055
        %v2248 = vsel %vm2120, %v2184, %v2056
        %v2249 = vsel %vm2121, %v2185, %v2057
        %v2250 = vsel %vm2122, %v2186, %v2058
        %v2251 = vsel %vm2123, %v2187, %v2059
        %v2252 = vsel %vm2124, %v2188, %v2060
        %v2253 = vsel %vm2125, %v2189, %v2061
        %v2254 = vsel %vm2126, %v2190, %v2062
        %v2255 = vsel %vm2127, %v2191, %v2063
        %v2256 = vsel %vm2128, %v2192, %v2064
        %v2257 = vsel %vm2129, %v2193, %v2065
        %v2258 = vsel %vm2130, %v2194, %v2066
        %v2259 = vsel %vm2131, %v2195, %v2067
        %v2260 = vsel %vm2132, %v2196, %v2068
        %v2261 = vsel %vm2133, %v2197, %v2069
        %v2262 = vsel %vm2134, %v2198, %v2070
        %v2263 = vsel %vm2135, %v2199, %v2071
        %v2264 = vsel %vm2136, %v2200, %v2072
        %v2265 = vsel %vm2137, %v2201, %v2073
        %v2266 = vsel %vm2138, %v2202, %v2074
        %v2267 = vsel %vm2139, %v2203, %v2075
        %v2268 = vsel %vm2140, %v2204, %v2076
        %v2269 = vsel %vm2141, %v2205, %v2077
        %v2270 = vsel %vm2142, %v2206, %v2078
        %v2271 = vsel %vm2143, %v2207, %v2079
        %v2272 = vsel %vm2144, %v2208, %v2080
        %v2273 = vsel %vm2145, %v2209, %v2081
        %v2274 = vsel %vm2146, %v2210, %v2082
        %v2275 = vsel %vm2147, %v2211, %v2083
        %v2276 = vsel %vm2148, %v2212, %v2084
        %v2277 = vsel %vm2149, %v2213, %v2085
        %v2278 = vsel %vm2150, %v2214, %v2086
        %v2279 = vsel %vm2151, %v2215, %v2087
        %v2280 = vsel %vm2152, %v2216, %v2088
        %v2281 = vsel %vm2153, %v2217, %v2089
        %v2282 = vsel %vm2154, %v2218, %v2090
        %v2283 = vsel %vm2155, %v2219, %v2091
        %v2284 = vsel %vm2156, %v2220, %v2092
        %v2285 = vsel %vm2157, %v2221, %v2093
        %v2286 = vsel %vm2158, %v2222, %v2094
        %v2287 = vsel %vm2159, %v2223, %v2095
        %v2288 = vsel %vm2160, %v2224, %v2096
        %v2289 = vsel %vm2161, %v2225, %v2097
        %v2290 = vsel %vm2162, %v2226, %v2098
        %v2291 = vsel %vm2163, %v2227, %v2099
        %v2292 = vadd.f32 %v2228, 1.0
        %v2293 = vadd.f32 %v2229, 1.0
        %v2294 = vadd.f32 %v2230, 1.0
        %v2295 = vadd.f32 %v2231, 1.0
        %v2296 = vadd.f32 %v2232, 1.0
        %v2297 = vadd.f32 %v2233, 1.0
        %v2298 = vadd.f32 %v2234, 1.0
        %v2299 = vadd.f32 %v2235, 1.0
        %v2300 = vadd.f32 %v2236, 1.0
        %v2301 = vadd.f32 %v2237, 1.0
        %v2302 = vadd.f32 %v2238, 1.0
        %v2303 = vadd.f32 %v2239, 1.0
        %v2304 = vadd.f32 %v2240, 1.0
        %v2305 = vadd.f32 %v2241, 1.0
        %v2306 = vadd.f32 %v2242, 1.0
        %v2307 = vadd.f32 %v2243, 1.0
        %v2308 = vadd.f32 %v2244, 1.0
        %v2309 = vadd.f32 %v2245, 1.0
        %v2310 = vadd.f32 %v2246, 1.0
        %v2311 = vadd.f32 %v2247, 1.0
        %v2312 = vadd.f32 %v2248, 1.0
        %v2313 = vadd.f32 %v2249, 1.0
        %v2314 = vadd.f32 %v2250, 1.0
        %v2315 = vadd.f32 %v2251, 1.0
        %v2316 = vadd.f32 %v2252, 1.0
        %v2317 = vadd.f32 %v2253, 1.0
        %v2318 = vadd.f32 %v2254, 1.0
        %v2319 = vadd.f32 %v2255, 1.0
        %v2320 = vadd.f32 %v2256, 1.0
        %v2321 = vadd.f32 %v2257, 1.0
        %v2322 = vadd.f32 %v2258, 1.0
        %v2323 = vadd.f32 %v2259, 1.0
        %v2324 = vadd.f32 %v2260, 1.0
        %v2325 = vadd.f32 %v2261, 1.0
        %v2326 = vadd.f32 %v2262, 1.0
        %v2327 = vadd.f32 %v2263, 1.0
        %v2328 = vadd.f32 %v2264, 1.0
        %v2329 = vadd.f32 %v2265, 1.0
        %v2330 = vadd.f32 %v2266, 1.0
        %v2331 = vadd.f32 %v2267, 1.0
        %v2332 = vadd.f32 %v2268, 1.0
        %v2333 = vadd.f32 %v2269, 1.0
        %v2334 = vadd.f32 %v2270, 1.0
        %v2335 = vadd.f32 %v2271, 1.0
        %v2336 = vadd.f32 %v2272, 1.0
        %v2337 = vadd.f32 %v2273, 1.0
        %v2338 = vadd.f32 %v2274, 1.0
        %v2339 = vadd.f32 %v2275, 1.0
        %v2340 = vadd.f32 %v2276, 1.0
        %v2341 = vadd.f32 %v2277, 1.0
        %v2342 = vadd.f32 %v2278, 1.0
        %v2343 = vadd.f32 %v2279, 1.0
        %v2344 = vadd.f32 %v2280, 1.0
        %v2345 = vadd.f32 %v2281, 1.0
        %v2346 = vadd.f32 %v2282, 1.0
        %v2347 = vadd.f32 %v2283, 1.0
        %v2348 = vadd.f32 %v2284, 1.0
        %v2349 = vadd.f32 %v2285, 1.0
        %v2350 = vadd.f32 %v2286, 1.0
        %v2351 = vadd.f32 %v2287, 1.0
        %v2352 = vadd.f32 %v2288, 1.0
        %v2353 = vadd.f32 %v2289, 1.0
        %v2354 = vadd.f32 %v2290, 1.0
        %v2355 = vadd.f32 %v2291, 1.0
        %v2356 = vmul.f32 %v692, %v2292
        %v2357 = vmul.f32 %v693, %v2293
        %v2358 = vmul.f32 %v694, %v2294
        %v2359 = vmul.f32 %v695, %v2295
        %v2360 = vmul.f32 %v696, %v2296
        %v2361 = vmul.f32 %v697, %v2297
        %v2362 = vmul.f32 %v698, %v2298
        %v2363 = vmul.f32 %v699, %v2299
        %v2364 = vmul.f32 %v700, %v2300
        %v2365 = vmul.f32 %v701, %v2301
        %v2366 = vmul.f32 %v702, %v2302
        %v2367 = vmul.f32 %v703, %v2303
        %v2368 = vmul.f32 %v704, %v2304
        %v2369 = vmul.f32 %v705, %v2305
        %v2370 = vmul.f32 %v706, %v2306
        %v2371 = vmul.f32 %v707, %v2307
        %v2372 = vmul.f32 %v708, %v2308
        %v2373 = vmul.f32 %v709, %v2309
        %v2374 = vmul.f32 %v710, %v2310
        %v2375 = vmul.f32 %v711, %v2311
        %v2376 = vmul.f32 %v712, %v2312
        %v2377 = vmul.f32 %v713, %v2313
        %v2378 = vmul.f32 %v714, %v2314
        %v2379 = vmul.f32 %v715, %v2315
        %v2380 = vmul.f32 %v716, %v2316
        %v2381 = vmul.f32 %v717, %v2317
        %v2382 = vmul.f32 %v718, %v2318
        %v2383 = vmul.f32 %v719, %v2319
        %v2384 = vmul.f32 %v720, %v2320
        %v2385 = vmul.f32 %v721, %v2321
        %v2386 = vmul.f32 %v722, %v2322
        %v2387 = vmul.f32 %v723, %v2323
        %v2388 = vmul.f32 %v724, %v2324
        %v2389 = vmul.f32 %v725, %v2325
        %v2390 = vmul.f32 %v726, %v2326
        %v2391 = vmul.f32 %v727, %v2327
        %v2392 = vmul.f32 %v728, %v2328
        %v2393 = vmul.f32 %v729, %v2329
        %v2394 = vmul.f32 %v730, %v2330
        %v2395 = vmul.f32 %v731, %v2331
        %v2396 = vmul.f32 %v732, %v2332
        %v2397 = vmul.f32 %v733, %v2333
        %v2398 = vmul.f32 %v734, %v2334
        %v2399 = vmul.f32 %v735, %v2335
        %v2400 = vmul.f32 %v736, %v2336
        %v2401 = vmul.f32 %v737, %v2337
        %v2402 = vmul.f32 %v738, %v2338
        %v2403 = vmul.f32 %v739, %v2339
        %v2404 = vmul.f32 %v740, %v2340
        %v2405 = vmul.f32 %v741, %v2341
        %v2406 = vmul.f32 %v742, %v2342
        %v2407 = vmul.f32 %v743, %v2343
        %v2408 = vmul.f32 %v744, %v2344
        %v2409 = vmul.f32 %v745, %v2345
        %v2410 = vmul.f32 %v746, %v2346
        %v2411 = vmul.f32 %v747, %v2347
        %v2412 = vmul.f32 %v748, %v2348
        %v2413 = vmul.f32 %v749, %v2349
        %v2414 = vmul.f32 %v750, %v2350
        %v2415 = vmul.f32 %v751, %v2351
        %v2416 = vmul.f32 %v752, %v2352
        %v2417 = vmul.f32 %v753, %v2353
        %v2418 = vmul.f32 %v754, %v2354
        %v2419 = vmul.f32 %v755, %v2355
        %v2420 = vld [vmem:[#allocation2] sm:$0xff]
        %v2421 = vld [vmem:[#allocation2 + $0x8] sm:$0xff]
        %v2422 = vld [vmem:[#allocation2 + $0x10] sm:$0xff]
        %v2423 = vld [vmem:[#allocation2 + $0x18] sm:$0xff]
        %v2424 = vld [vmem:[#allocation2 + $0x20] sm:$0xff]
        %v2425 = vld [vmem:[#allocation2 + $0x28] sm:$0xff]
        %v2426 = vld [vmem:[#allocation2 + $0x30] sm:$0xff]
        %v2427 = vld [vmem:[#allocation2 + $0x38] sm:$0xff]
        %v2428 = vld [vmem:[#allocation2 + $0x40] sm:$0xff]
        %v2429 = vld [vmem:[#allocation2 + $0x48] sm:$0xff]
        %v2430 = vld [vmem:[#allocation2 + $0x50] sm:$0xff]
        %v2431 = vld [vmem:[#allocation2 + $0x58] sm:$0xff]
        %v2432 = vld [vmem:[#allocation2 + $0x60] sm:$0xff]
        %v2433 = vld [vmem:[#allocation2 + $0x68] sm:$0xff]
        %v2434 = vld [vmem:[#allocation2 + $0x70] sm:$0xff]
        %v2435 = vld [vmem:[#allocation2 + $0x78] sm:$0xff]
        %v2436 = vld [vmem:[#allocation2 + $0x80] sm:$0xff]
        %v2437 = vld [vmem:[#allocation2 + $0x88] sm:$0xff]
        %v2438 = vld [vmem:[#allocation2 + $0x90] sm:$0xff]
        %v2439 = vld [vmem:[#allocation2 + $0x98] sm:$0xff]
        %v2440 = vld [vmem:[#allocation2 + $0xa0] sm:$0xff]
        %v2441 = vld [vmem:[#allocation2 + $0xa8] sm:$0xff]
        %v2442 = vld [vmem:[#allocation2 + $0xb0] sm:$0xff]
        %v2443 = vld [vmem:[#allocation2 + $0xb8] sm:$0xff]
        %v2444 = vld [vmem:[#allocation2 + $0xc0] sm:$0xff]
        %v2445 = vld [vmem:[#allocation2 + $0xc8] sm:$0xff]
        %v2446 = vld [vmem:[#allocation2 + $0xd0] sm:$0xff]
        %v2447 = vld [vmem:[#allocation2 + $0xd8] sm:$0xff]
        %v2448 = vld [vmem:[#allocation2 + $0xe0] sm:$0xff]
        %v2449 = vld [vmem:[#allocation2 + $0xe8] sm:$0xff]
        %v2450 = vld [vmem:[#allocation2 + $0xf0] sm:$0xff]
        %v2451 = vld [vmem:[#allocation2 + $0xf8] sm:$0xff]
        %v2452 = vld [vmem:[#allocation8] sm:$0xff]
        %v2453 = vld [vmem:[#allocation8 + $0x8] sm:$0xff]
        %v2454 = vld [vmem:[#allocation8 + $0x10] sm:$0xff]
        %v2455 = vld [vmem:[#allocation8 + $0x18] sm:$0xff]
        %v2456 = vld [vmem:[#allocation8 + $0x20] sm:$0xff]
        %v2457 = vld [vmem:[#allocation8 + $0x28] sm:$0xff]
        %v2458 = vld [vmem:[#allocation8 + $0x30] sm:$0xff]
        %v2459 = vld [vmem:[#allocation8 + $0x38] sm:$0xff]
        %v2460 = vld [vmem:[#allocation8 + $0x40] sm:$0xff]
        %v2461 = vld [vmem:[#allocation8 + $0x48] sm:$0xff]
        %v2462 = vld [vmem:[#allocation8 + $0x50] sm:$0xff]
        %v2463 = vld [vmem:[#allocation8 + $0x58] sm:$0xff]
        %v2464 = vld [vmem:[#allocation8 + $0x60] sm:$0xff]
        %v2465 = vld [vmem:[#allocation8 + $0x68] sm:$0xff]
        %v2466 = vld [vmem:[#allocation8 + $0x70] sm:$0xff]
        %v2467 = vld [vmem:[#allocation8 + $0x78] sm:$0xff]
        %v2468 = vld [vmem:[#allocation8 + $0x80] sm:$0xff]
        %v2469 = vld [vmem:[#allocation8 + $0x88] sm:$0xff]
        %v2470 = vld [vmem:[#allocation8 + $0x90] sm:$0xff]
        %v2471 = vld [vmem:[#allocation8 + $0x98] sm:$0xff]
        %v2472 = vld [vmem:[#allocation8 + $0xa0] sm:$0xff]
        %v2473 = vld [vmem:[#allocation8 + $0xa8] sm:$0xff]
        %v2474 = vld [vmem:[#allocation8 + $0xb0] sm:$0xff]
        %v2475 = vld [vmem:[#allocation8 + $0xb8] sm:$0xff]
        %v2476 = vld [vmem:[#allocation8 + $0xc0] sm:$0xff]
        %v2477 = vld [vmem:[#allocation8 + $0xc8] sm:$0xff]
        %v2478 = vld [vmem:[#allocation8 + $0xd0] sm:$0xff]
        %v2479 = vld [vmem:[#allocation8 + $0xd8] sm:$0xff]
        %v2480 = vld [vmem:[#allocation8 + $0xe0] sm:$0xff]
        %v2481 = vld [vmem:[#allocation8 + $0xe8] sm:$0xff]
        %v2482 = vld [vmem:[#allocation8 + $0xf0] sm:$0xff]
        %v2483 = vld [vmem:[#allocation8 + $0xf8] sm:$0xff]
        %2484 = vmatprep.subr.mxu0 0.0
        %2485 = vmatpush1.msra.mxu0 %v2467
        %2486 = vmatprep.subr.mxu0 0.0
        %2487 = vmatpush1.msra.mxu0 %v2466
        %2488 = vmatprep.subr.mxu0 0.0
        %2489 = vmatpush1.msra.mxu0 %v2465
        %2490 = vmatprep.subr.mxu0 0.0
        %2491 = vmatpush1.msra.mxu0 %v2464
        %2492 = vmatprep.subr.mxu0 0.0
        %2493 = vmatpush1.msra.mxu0 %v2463
        %2494 = vmatprep.subr.mxu0 0.0
        %2495 = vmatpush1.msra.mxu0 %v2462
        %2496 = vmatprep.subr.mxu0 0.0
        %2497 = vmatpush1.msra.mxu0 %v2461
        %2498 = vmatprep.subr.mxu0 0.0
        %2499 = vmatpush1.msra.mxu0 %v2460
        %2500 = vmatprep.subr.mxu0 0.0
        %2501 = vmatpush1.msra.mxu0 %v2459
        %2502 = vmatprep.subr.mxu0 0.0
        %2503 = vmatpush1.msra.mxu0 %v2458
        %2504 = vmatprep.subr.mxu0 0.0
        %2505 = vmatpush1.msra.mxu0 %v2457
        %2506 = vmatprep.subr.mxu0 0.0
        %2507 = vmatpush1.msra.mxu0 %v2456
        %2508 = vmatprep.subr.mxu0 0.0
        %2509 = vmatpush1.msra.mxu0 %v2455
        %2510 = vmatprep.subr.mxu0 0.0
        %2511 = vmatpush1.msra.mxu0 %v2454
        %2512 = vmatprep.subr.mxu0 0.0
        %2513 = vmatpush1.msra.mxu0 %v2453
        %2514 = vmatprep.subr.mxu0 0.0
        %2515 = vmatpush1.msra.mxu0 %v2452
        %2516 = vmatprep.subr.mxu0 0.0
        %2517 = vmatpush2.msra.mxu0 %v2483
        %2518 = vmatprep.subr.mxu0 0.0
        %2519 = vmatpush2.msra.mxu0 %v2482
        %2520 = vmatprep.subr.mxu0 0.0
        %2521 = vmatpush2.msra.mxu0 %v2481
        %2522 = vmatprep.subr.mxu0 0.0
        %2523 = vmatpush2.msra.mxu0 %v2480
        %2524 = vmatprep.subr.mxu0 0.0
        %2525 = vmatpush2.msra.mxu0 %v2479
        %2526 = vmatprep.subr.mxu0 0.0
        %2527 = vmatpush2.msra.mxu0 %v2478
        %2528 = vmatprep.subr.mxu0 0.0
        %2529 = vmatpush2.msra.mxu0 %v2477
        %2530 = vmatprep.subr.mxu0 0.0
        %2531 = vmatpush2.msra.mxu0 %v2476
        %2532 = vmatprep.subr.mxu0 0.0
        %2533 = vmatpush2.msra.mxu0 %v2475
        %2534 = vmatprep.subr.mxu0 0.0
        %2535 = vmatpush2.msra.mxu0 %v2474
        %2536 = vmatprep.subr.mxu0 0.0
        %2537 = vmatpush2.msra.mxu0 %v2473
        %2538 = vmatprep.subr.mxu0 0.0
        %2539 = vmatpush2.msra.mxu0 %v2472
        %2540 = vmatprep.subr.mxu0 0.0
        %2541 = vmatpush2.msra.mxu0 %v2471
        %2542 = vmatprep.subr.mxu0 0.0
        %2543 = vmatpush2.msra.mxu0 %v2470
        %2544 = vmatprep.subr.mxu0 0.0
        %2545 = vmatpush2.msra.mxu0 %v2469
        %2546 = vmatprep.subr.mxu0 0.0
        %2547 = vmatpush2.msra.mxu0 %v2468
        %2548 = vmatprep.mubr.f32.mxu0 %v2357
        %2549 = vmatmul.mubr.f32.gmra.mxu0 %v2356
        %v2550 = vpop.f32.mrf.mxu0
        %v2551 = vadd.f32 0.0, %v2550
        %v2552 = vpop.f32.mrf.mxu0
        %2553 = vmatprep.mubr.f32.mxu0 %v2359
        %2554 = vmatmul.mubr.f32.gmra.mxu0 %v2358
        %v2555 = vpop.f32.mrf.mxu0
        %v2556 = vadd.f32 0.0, %v2555
        %v2557 = vpop.f32.mrf.mxu0
        %2558 = vmatprep.mubr.f32.mxu0 %v2361
        %2559 = vmatmul.mubr.f32.gmra.mxu0 %v2360
        %v2560 = vpop.f32.mrf.mxu0
        %v2561 = vadd.f32 0.0, %v2560
        %v2562 = vpop.f32.mrf.mxu0
        %2563 = vmatprep.mubr.f32.mxu0 %v2363
        %2564 = vmatmul.mubr.f32.gmra.mxu0 %v2362
        %v2565 = vpop.f32.mrf.mxu0
        %v2566 = vadd.f32 0.0, %v2565
        %v2567 = vpop.f32.mrf.mxu0
        %2568 = vmatprep.mubr.f32.mxu0 %v2365
        %2569 = vmatmul.mubr.f32.gmra.mxu0 %v2364
        %v2570 = vpop.f32.mrf.mxu0
        %v2571 = vadd.f32 0.0, %v2570
        %v2572 = vpop.f32.mrf.mxu0
        %2573 = vmatprep.mubr.f32.mxu0 %v2367
        %2574 = vmatmul.mubr.f32.gmra.mxu0 %v2366
        %v2575 = vpop.f32.mrf.mxu0
        %v2576 = vadd.f32 0.0, %v2575
        %v2577 = vpop.f32.mrf.mxu0
        %2578 = vmatprep.mubr.f32.mxu0 %v2369
        %2579 = vmatmul.mubr.f32.gmra.mxu0 %v2368
        %v2580 = vpop.f32.mrf.mxu0
        %v2581 = vadd.f32 0.0, %v2580
        %v2582 = vpop.f32.mrf.mxu0
        %2583 = vmatprep.mubr.f32.mxu0 %v2371
        %2584 = vmatmul.mubr.f32.gmra.mxu0 %v2370
        %v2585 = vpop.f32.mrf.mxu0
        %v2586 = vadd.f32 0.0, %v2585
        %v2587 = vpop.f32.mrf.mxu0
        %2588 = vmatprep.mubr.f32.mxu0 %v2373
        %2589 = vmatmul.mubr.f32.gmra.mxu0 %v2372
        %v2590 = vpop.f32.mrf.mxu0
        %v2591 = vadd.f32 0.0, %v2590
        %v2592 = vpop.f32.mrf.mxu0
        %2593 = vmatprep.mubr.f32.mxu0 %v2375
        %2594 = vmatmul.mubr.f32.gmra.mxu0 %v2374
        %v2595 = vpop.f32.mrf.mxu0
        %v2596 = vadd.f32 0.0, %v2595
        %v2597 = vpop.f32.mrf.mxu0
        %2598 = vmatprep.mubr.f32.mxu0 %v2377
        %2599 = vmatmul.mubr.f32.gmra.mxu0 %v2376
        %v2600 = vpop.f32.mrf.mxu0
        %v2601 = vadd.f32 0.0, %v2600
        %v2602 = vpop.f32.mrf.mxu0
        %2603 = vmatprep.mubr.f32.mxu0 %v2379
        %2604 = vmatmul.mubr.f32.gmra.mxu0 %v2378
        %v2605 = vpop.f32.mrf.mxu0
        %v2606 = vadd.f32 0.0, %v2605
        %v2607 = vpop.f32.mrf.mxu0
        %2608 = vmatprep.mubr.f32.mxu0 %v2381
        %2609 = vmatmul.mubr.f32.gmra.mxu0 %v2380
        %v2610 = vpop.f32.mrf.mxu0
        %v2611 = vadd.f32 0.0, %v2610
        %v2612 = vpop.f32.mrf.mxu0
        %2613 = vmatprep.mubr.f32.mxu0 %v2383
        %2614 = vmatmul.mubr.f32.gmra.mxu0 %v2382
        %v2615 = vpop.f32.mrf.mxu0
        %v2616 = vadd.f32 0.0, %v2615
        %v2617 = vpop.f32.mrf.mxu0
        %2618 = vmatprep.mubr.f32.mxu0 %v2385
        %2619 = vmatmul.mubr.f32.gmra.mxu0 %v2384
        %v2620 = vpop.f32.mrf.mxu0
        %v2621 = vadd.f32 0.0, %v2620
        %v2622 = vpop.f32.mrf.mxu0
        %2623 = vmatprep.mubr.f32.mxu0 %v2387
        %2624 = vmatmul.mubr.f32.gmra.mxu0 %v2386
        %v2625 = vpop.f32.mrf.mxu0
        %v2626 = vadd.f32 0.0, %v2625
        %v2627 = vpop.f32.mrf.mxu0
        %2628 = vmatprep.mubr.f32.mxu0 %v2389
        %2629 = vmatmul.mubr.f32.gmra.mxu0 %v2388
        %v2630 = vpop.f32.mrf.mxu0
        %v2631 = vadd.f32 0.0, %v2630
        %v2632 = vpop.f32.mrf.mxu0
        %2633 = vmatprep.mubr.f32.mxu0 %v2391
        %2634 = vmatmul.mubr.f32.gmra.mxu0 %v2390
        %v2635 = vpop.f32.mrf.mxu0
        %v2636 = vadd.f32 0.0, %v2635
        %v2637 = vpop.f32.mrf.mxu0
        %2638 = vmatprep.mubr.f32.mxu0 %v2393
        %2639 = vmatmul.mubr.f32.gmra.mxu0 %v2392
        %v2640 = vpop.f32.mrf.mxu0
        %v2641 = vadd.f32 0.0, %v2640
        %v2642 = vpop.f32.mrf.mxu0
        %2643 = vmatprep.mubr.f32.mxu0 %v2395
        %2644 = vmatmul.mubr.f32.gmra.mxu0 %v2394
        %v2645 = vpop.f32.mrf.mxu0
        %v2646 = vadd.f32 0.0, %v2645
        %v2647 = vpop.f32.mrf.mxu0
        %2648 = vmatprep.mubr.f32.mxu0 %v2397
        %2649 = vmatmul.mubr.f32.gmra.mxu0 %v2396
        %v2650 = vpop.f32.mrf.mxu0
        %v2651 = vadd.f32 0.0, %v2650
        %v2652 = vpop.f32.mrf.mxu0
        %2653 = vmatprep.mubr.f32.mxu0 %v2399
        %2654 = vmatmul.mubr.f32.gmra.mxu0 %v2398
        %v2655 = vpop.f32.mrf.mxu0
        %v2656 = vadd.f32 0.0, %v2655
        %v2657 = vpop.f32.mrf.mxu0
        %2658 = vmatprep.mubr.f32.mxu0 %v2401
        %2659 = vmatmul.mubr.f32.gmra.mxu0 %v2400
        %v2660 = vpop.f32.mrf.mxu0
        %v2661 = vadd.f32 0.0, %v2660
        %v2662 = vpop.f32.mrf.mxu0
        %2663 = vmatprep.mubr.f32.mxu0 %v2403
        %2664 = vmatmul.mubr.f32.gmra.mxu0 %v2402
        %v2665 = vpop.f32.mrf.mxu0
        %v2666 = vadd.f32 0.0, %v2665
        %v2667 = vpop.f32.mrf.mxu0
        %2668 = vmatprep.mubr.f32.mxu0 %v2405
        %2669 = vmatmul.mubr.f32.gmra.mxu0 %v2404
        %v2670 = vpop.f32.mrf.mxu0
        %v2671 = vadd.f32 0.0, %v2670
        %v2672 = vpop.f32.mrf.mxu0
        %2673 = vmatprep.mubr.f32.mxu0 %v2407
        %2674 = vmatmul.mubr.f32.gmra.mxu0 %v2406
        %v2675 = vpop.f32.mrf.mxu0
        %v2676 = vadd.f32 0.0, %v2675
        %v2677 = vpop.f32.mrf.mxu0
        %2678 = vmatprep.mubr.f32.mxu0 %v2409
        %2679 = vmatmul.mubr.f32.gmra.mxu0 %v2408
        %v2680 = vpop.f32.mrf.mxu0
        %v2681 = vadd.f32 0.0, %v2680
        %v2682 = vpop.f32.mrf.mxu0
        %2683 = vmatprep.mubr.f32.mxu0 %v2411
        %2684 = vmatmul.mubr.f32.gmra.mxu0 %v2410
        %v2685 = vpop.f32.mrf.mxu0
        %v2686 = vadd.f32 0.0, %v2685
        %v2687 = vpop.f32.mrf.mxu0
        %2688 = vmatprep.mubr.f32.mxu0 %v2413
        %2689 = vmatmul.mubr.f32.gmra.mxu0 %v2412
        %v2690 = vpop.f32.mrf.mxu0
        %v2691 = vadd.f32 0.0, %v2690
        %v2692 = vpop.f32.mrf.mxu0
        %2693 = vmatprep.mubr.f32.mxu0 %v2415
        %2694 = vmatmul.mubr.f32.gmra.mxu0 %v2414
        %v2695 = vpop.f32.mrf.mxu0
        %v2696 = vadd.f32 0.0, %v2695
        %v2697 = vpop.f32.mrf.mxu0
        %2698 = vmatprep.mubr.f32.mxu0 %v2417
        %2699 = vmatmul.mubr.f32.gmra.mxu0 %v2416
        %v2700 = vpop.f32.mrf.mxu0
        %v2701 = vadd.f32 0.0, %v2700
        %v2702 = vpop.f32.mrf.mxu0
        %2703 = vmatprep.mubr.f32.mxu0 %v2419
        %2704 = vmatmul.mubr.f32.gmra.mxu0 %v2418
        %v2705 = vpop.f32.mrf.mxu0
        %v2706 = vadd.f32 0.0, %v2705
        %v2707 = vpop.f32.mrf.mxu0
        %2708 = vdwg.mxu0
        %v2709 = vadd.f32 %v2420, %v2551
        %v2710 = vadd.f32 %v2421, %v2556
        %v2711 = vadd.f32 %v2422, %v2561
        %v2712 = vadd.f32 %v2423, %v2566
        %v2713 = vadd.f32 %v2424, %v2571
        %v2714 = vadd.f32 %v2425, %v2576
        %v2715 = vadd.f32 %v2426, %v2581
        %v2716 = vadd.f32 %v2427, %v2586
        %v2717 = vadd.f32 %v2428, %v2591
        %v2718 = vadd.f32 %v2429, %v2596
        %v2719 = vadd.f32 %v2430, %v2601
        %v2720 = vadd.f32 %v2431, %v2606
        %v2721 = vadd.f32 %v2432, %v2611
        %v2722 = vadd.f32 %v2433, %v2616
        %v2723 = vadd.f32 %v2434, %v2621
        %v2724 = vadd.f32 %v2435, %v2626
        %v2725 = vadd.f32 %v2436, %v2631
        %v2726 = vadd.f32 %v2437, %v2636
        %v2727 = vadd.f32 %v2438, %v2641
        %v2728 = vadd.f32 %v2439, %v2646
        %v2729 = vadd.f32 %v2440, %v2651
        %v2730 = vadd.f32 %v2441, %v2656
        %v2731 = vadd.f32 %v2442, %v2661
        %v2732 = vadd.f32 %v2443, %v2666
        %v2733 = vadd.f32 %v2444, %v2671
        %v2734 = vadd.f32 %v2445, %v2676
        %v2735 = vadd.f32 %v2446, %v2681
        %v2736 = vadd.f32 %v2447, %v2686
        %v2737 = vadd.f32 %v2448, %v2691
        %v2738 = vadd.f32 %v2449, %v2696
        %v2739 = vadd.f32 %v2450, %v2701
        %v2740 = vadd.f32 %v2451, %v2706
        %2741 = vst [vmem:[#allocation2] sm:$0xff] %v2709
        %2742 = vst [vmem:[#allocation2 + $0x8] sm:$0xff] %v2710
        %2743 = vst [vmem:[#allocation2 + $0x10] sm:$0xff] %v2711
        %2744 = vst [vmem:[#allocation2 + $0x18] sm:$0xff] %v2712
        %2745 = vst [vmem:[#allocation2 + $0x20] sm:$0xff] %v2713
        %2746 = vst [vmem:[#allocation2 + $0x28] sm:$0xff] %v2714
        %2747 = vst [vmem:[#allocation2 + $0x30] sm:$0xff] %v2715
        %2748 = vst [vmem:[#allocation2 + $0x38] sm:$0xff] %v2716
        %2749 = vst [vmem:[#allocation2 + $0x40] sm:$0xff] %v2717
        %2750 = vst [vmem:[#allocation2 + $0x48] sm:$0xff] %v2718
        %2751 = vst [vmem:[#allocation2 + $0x50] sm:$0xff] %v2719
        %2752 = vst [vmem:[#allocation2 + $0x58] sm:$0xff] %v2720
        %2753 = vst [vmem:[#allocation2 + $0x60] sm:$0xff] %v2721
        %2754 = vst [vmem:[#allocation2 + $0x68] sm:$0xff] %v2722
        %2755 = vst [vmem:[#allocation2 + $0x70] sm:$0xff] %v2723
        %2756 = vst [vmem:[#allocation2 + $0x78] sm:$0xff] %v2724
        %2757 = vst [vmem:[#allocation2 + $0x80] sm:$0xff] %v2725
        %2758 = vst [vmem:[#allocation2 + $0x88] sm:$0xff] %v2726
        %2759 = vst [vmem:[#allocation2 + $0x90] sm:$0xff] %v2727
        %2760 = vst [vmem:[#allocation2 + $0x98] sm:$0xff] %v2728
        %2761 = vst [vmem:[#allocation2 + $0xa0] sm:$0xff] %v2729
        %2762 = vst [vmem:[#allocation2 + $0xa8] sm:$0xff] %v2730
        %2763 = vst [vmem:[#allocation2 + $0xb0] sm:$0xff] %v2731
        %2764 = vst [vmem:[#allocation2 + $0xb8] sm:$0xff] %v2732
        %2765 = vst [vmem:[#allocation2 + $0xc0] sm:$0xff] %v2733
        %2766 = vst [vmem:[#allocation2 + $0xc8] sm:$0xff] %v2734
        %2767 = vst [vmem:[#allocation2 + $0xd0] sm:$0xff] %v2735
        %2768 = vst [vmem:[#allocation2 + $0xd8] sm:$0xff] %v2736
        %2769 = vst [vmem:[#allocation2 + $0xe0] sm:$0xff] %v2737
        %2770 = vst [vmem:[#allocation2 + $0xe8] sm:$0xff] %v2738
        %2771 = vst [vmem:[#allocation2 + $0xf0] sm:$0xff] %v2739
        %2772 = vst [vmem:[#allocation2 + $0xf8] sm:$0xff] %v2740
        // Predicated region
        $region57: #{tpu_custom_call.1} parent=39 // pred_check
          %p2773 = pneg %p323
        $region58: #{tpu_custom_call.1} parent=39 // pred_check_branch
          %2775 = sbr.rel (%p2773) target = $region60
        $region59: #{tpu_custom_call.1} parent=39 // pred_region
          %v2776 = vld [vmem:[#allocation2] sm:$0xff]
          %v2777 = vld [vmem:[#allocation2 + $0x8] sm:$0xff]
          %v2778 = vld [vmem:[#allocation2 + $0x10] sm:$0xff]
          %v2779 = vld [vmem:[#allocation2 + $0x18] sm:$0xff]
          %v2780 = vld [vmem:[#allocation2 + $0x20] sm:$0xff]
          %v2781 = vld [vmem:[#allocation2 + $0x28] sm:$0xff]
          %v2782 = vld [vmem:[#allocation2 + $0x30] sm:$0xff]
          %v2783 = vld [vmem:[#allocation2 + $0x38] sm:$0xff]
          %v2784 = vld [vmem:[#allocation2 + $0x40] sm:$0xff]
          %v2785 = vld [vmem:[#allocation2 + $0x48] sm:$0xff]
          %v2786 = vld [vmem:[#allocation2 + $0x50] sm:$0xff]
          %v2787 = vld [vmem:[#allocation2 + $0x58] sm:$0xff]
          %v2788 = vld [vmem:[#allocation2 + $0x60] sm:$0xff]
          %v2789 = vld [vmem:[#allocation2 + $0x68] sm:$0xff]
          %v2790 = vld [vmem:[#allocation2 + $0x70] sm:$0xff]
          %v2791 = vld [vmem:[#allocation2 + $0x78] sm:$0xff]
          %v2792 = vld [vmem:[#allocation2 + $0x80] sm:$0xff]
          %v2793 = vld [vmem:[#allocation2 + $0x88] sm:$0xff]
          %v2794 = vld [vmem:[#allocation2 + $0x90] sm:$0xff]
          %v2795 = vld [vmem:[#allocation2 + $0x98] sm:$0xff]
          %v2796 = vld [vmem:[#allocation2 + $0xa0] sm:$0xff]
          %v2797 = vld [vmem:[#allocation2 + $0xa8] sm:$0xff]
          %v2798 = vld [vmem:[#allocation2 + $0xb0] sm:$0xff]
          %v2799 = vld [vmem:[#allocation2 + $0xb8] sm:$0xff]
          %v2800 = vld [vmem:[#allocation2 + $0xc0] sm:$0xff]
          %v2801 = vld [vmem:[#allocation2 + $0xc8] sm:$0xff]
          %v2802 = vld [vmem:[#allocation2 + $0xd0] sm:$0xff]
          %v2803 = vld [vmem:[#allocation2 + $0xd8] sm:$0xff]
          %v2804 = vld [vmem:[#allocation2 + $0xe0] sm:$0xff]
          %v2805 = vld [vmem:[#allocation2 + $0xe8] sm:$0xff]
          %v2806 = vld [vmem:[#allocation2 + $0xf0] sm:$0xff]
          %v2807 = vld [vmem:[#allocation2 + $0xf8] sm:$0xff]
          %v2808 = vld [vmem:[%s4] sm:$0x1]
          %v2810 = vlaneseq
          %v2811 = vshrl.u32 %v2810, 7
          %v2812 = vsub.s32 0, %v2811
          %v2813 = vrot.slane %v2808, %v2812
          %v2815 = vadd.f32 %v2776, %v2813
          %v2816 = vadd.f32 %v2777, %v2813
          %v2817 = vadd.f32 %v2778, %v2813
          %v2818 = vadd.f32 %v2779, %v2813
          %v2819 = vadd.f32 %v2780, %v2813
          %v2820 = vadd.f32 %v2781, %v2813
          %v2821 = vadd.f32 %v2782, %v2813
          %v2822 = vadd.f32 %v2783, %v2813
          %v2823 = vadd.f32 %v2784, %v2813
          %v2824 = vadd.f32 %v2785, %v2813
          %v2825 = vadd.f32 %v2786, %v2813
          %v2826 = vadd.f32 %v2787, %v2813
          %v2827 = vadd.f32 %v2788, %v2813
          %v2828 = vadd.f32 %v2789, %v2813
          %v2829 = vadd.f32 %v2790, %v2813
          %v2830 = vadd.f32 %v2791, %v2813
          %v2831 = vadd.f32 %v2792, %v2813
          %v2832 = vadd.f32 %v2793, %v2813
          %v2833 = vadd.f32 %v2794, %v2813
          %v2834 = vadd.f32 %v2795, %v2813
          %v2835 = vadd.f32 %v2796, %v2813
          %v2836 = vadd.f32 %v2797, %v2813
          %v2837 = vadd.f32 %v2798, %v2813
          %v2838 = vadd.f32 %v2799, %v2813
          %v2839 = vadd.f32 %v2800, %v2813
          %v2840 = vadd.f32 %v2801, %v2813
          %v2841 = vadd.f32 %v2802, %v2813
          %v2842 = vadd.f32 %v2803, %v2813
          %v2843 = vadd.f32 %v2804, %v2813
          %v2844 = vadd.f32 %v2805, %v2813
          %v2845 = vadd.f32 %v2806, %v2813
          %v2846 = vadd.f32 %v2807, %v2813
          %2847 = vst [vmem:[%s313] sm:$0xff] %v2815
          %2848 = vst [vmem:[%s313 + $0x8] sm:$0xff] %v2816
          %2849 = vst [vmem:[%s313 + $0x10] sm:$0xff] %v2817
          %2850 = vst [vmem:[%s313 + $0x18] sm:$0xff] %v2818
          %2851 = vst [vmem:[%s313 + $0x20] sm:$0xff] %v2819
          %2852 = vst [vmem:[%s313 + $0x28] sm:$0xff] %v2820
          %2853 = vst [vmem:[%s313 + $0x30] sm:$0xff] %v2821
          %2854 = vst [vmem:[%s313 + $0x38] sm:$0xff] %v2822
          %2855 = vst [vmem:[%s313 + $0x40] sm:$0xff] %v2823
          %2856 = vst [vmem:[%s313 + $0x48] sm:$0xff] %v2824
          %2857 = vst [vmem:[%s313 + $0x50] sm:$0xff] %v2825
          %2858 = vst [vmem:[%s313 + $0x58] sm:$0xff] %v2826
          %2859 = vst [vmem:[%s313 + $0x60] sm:$0xff] %v2827
          %2860 = vst [vmem:[%s313 + $0x68] sm:$0xff] %v2828
          %2861 = vst [vmem:[%s313 + $0x70] sm:$0xff] %v2829
          %2862 = vst [vmem:[%s313 + $0x78] sm:$0xff] %v2830
          %2863 = vst [vmem:[%s313 + $0x80] sm:$0xff] %v2831
          %2864 = vst [vmem:[%s313 + $0x88] sm:$0xff] %v2832
          %2865 = vst [vmem:[%s313 + $0x90] sm:$0xff] %v2833
          %2866 = vst [vmem:[%s313 + $0x98] sm:$0xff] %v2834
          %2867 = vst [vmem:[%s313 + $0xa0] sm:$0xff] %v2835
          %2868 = vst [vmem:[%s313 + $0xa8] sm:$0xff] %v2836
          %2869 = vst [vmem:[%s313 + $0xb0] sm:$0xff] %v2837
          %2870 = vst [vmem:[%s313 + $0xb8] sm:$0xff] %v2838
          %2871 = vst [vmem:[%s313 + $0xc0] sm:$0xff] %v2839
          %2872 = vst [vmem:[%s313 + $0xc8] sm:$0xff] %v2840
          %2873 = vst [vmem:[%s313 + $0xd0] sm:$0xff] %v2841
          %2874 = vst [vmem:[%s313 + $0xd8] sm:$0xff] %v2842
          %2875 = vst [vmem:[%s313 + $0xe0] sm:$0xff] %v2843
          %2876 = vst [vmem:[%s313 + $0xe8] sm:$0xff] %v2844
          %2877 = vst [vmem:[%s313 + $0xf0] sm:$0xff] %v2845
          %2878 = vst [vmem:[%s313 + $0xf8] sm:$0xff] %v2846
        $region60: #{tpu_custom_call.1} parent=39 // pred_fallthru
          _
        %s2879 = sand.u32 %s168, 1
        %s2880 = scalar_lea.sflag [#allocation5], %s2879
        %s2881 = sand.u32 %s168, 1
        %s2882 = smul.addr %s2881, 256
        %s2883 = scalar_lea.vmem [#allocation9], %s2882
        // Predicated region
        $region61: #{tpu_custom_call.1} parent=39 // pred_check
          %p2884 = pneg %p178
        $region62: #{tpu_custom_call.1} parent=39 // pred_check_branch
          %2886 = sbr.rel (%p2884) target = $region64
        $region63: #{tpu_custom_call.1} parent=39 // pred_region
          %s2887 = smul.u32 32, %s27
          %s2889 = ssub.s32 4096, 4096
          %2890 = vsyncadd %s2880, %s2889
          %s2891 = smul.addr %s2887, 128
          %s2892 = scalar_lea.hbm %s5, %s2891
          %s2893 = sshll.u32 %s2883, 4
          %s2894 = int_to_ptr.vmem [resolvable:$true] %s2893
          %2899 = dma.vmem_to_hbm [thread:$0]  %s2894, 4096, %s2892, %s2880, 128, 128, 8
        $region64: #{tpu_custom_call.1} parent=39 // pred_fallthru
          _
      $region40: #{tpu_custom_call.1} parent=5 // pred_fallthru
        _
      %p2900 = scmp.le.s32.totalorder 2, %s18
      // Predicated region
      $region65: #{tpu_custom_call.1} parent=5 // pred_check
        %p2901 = pneg %p2900
      $region66: #{tpu_custom_call.1} parent=5 // pred_check_branch
        %2903 = sbr.rel (%p2901) target = $region68
      $region67: #{tpu_custom_call.1} parent=5 // pred_region
        %s2904 = ssub.s32 %s18, 2
        // Predicated region
        $region69: #{tpu_custom_call.1} parent=67 // pred_check
          %p2905 = pneg %p184
        $region70: #{tpu_custom_call.1} parent=67 // pred_check_branch
          %2907 = sbr.rel (%p2905) target = $region72
        $region71: #{tpu_custom_call.1} parent=67 // pred_region
          %s2908 = sand.u32 %s169, 1
          %s2909 = scalar_lea.sflag [#allocation5], %s2908
          %s2910 = sand.u32 %s169, 1
          %s2911 = smul.addr %s2910, 256
          %s2912 = scalar_lea.vmem [#allocation9], %s2911
          %2913 = dma.done %s2909, 4096
        $region72: #{tpu_custom_call.1} parent=67 // pred_fallthru
          _
      $region68: #{tpu_custom_call.1} parent=5 // pred_fallthru
        _
    $region6: #{tpu_custom_call.1} parent=1 // loop_footer
      %s22 = sadd.s32 1, %s18
    $region7: #{tpu_custom_call.1} parent=1 // loop_footer_branch
      %17 = sbr.rel target = $region3
    $region8: #{tpu_custom_call.1} parent=1 // loop_exit
      _
    %2914 = vsyncpa [#allocation4], 1
    %s2915 = scalar_lea.sflag [#allocation4], 1
    %2916 = vsyncpa %s2915, 1
    %2917 = vsyncpa [#allocation7], 1
    %2918 = vsyncpa [#allocation5], 1
    %s2919 = scalar_lea.sflag [#allocation5], 1
    %2920 = vsyncpa %s2919, 1

// kernel: tpu_custom_call.1
$region0: #{tpu_custom_call.1}
  #allocation0 [shape = 'u32[]', space=smem, size = 0x4, offset = 0x4, fixed_abs, tag = 'smem constant byte address 0x4 - core index']
  #allocation1 [shape = 'u32[144,128]{1,0:T(1,128)}', space=vmem, size = 0x12000, scoped, tag = 'internal scratch']
  #allocation2 [shape = 'f32[256,128]{1,0:T(8,128)}', space=vmem, size = 0x20000, scoped, tag = 'scratch operand']
  %s0 = inlined_call_operand.hbm [shape: f32[512,128], index: 0, kind: input, shape index: {}]
  %s1 = inlined_call_operand.hbm [shape: f32[128,256], index: 1, kind: input, shape index: {}]
  %s2 = inlined_call_operand.vmem [shape: f32[1,256], index: 2, kind: input, shape index: {}]
  %s3 = inlined_call_operand.hbm [shape: f32[256,128], index: 3, kind: input, shape index: {}]
  %s4 = inlined_call_operand.vmem [shape: f32[1,128], index: 4, kind: input, shape index: {}]
  %s5 = inlined_call_operand.hbm [shape: f32[512,128], index: 5, kind: output, shape index: {}]
  %s6 = sld [smem:[#allocation0]]
  $region73: #{tpu_custom_call.1} parent=0
    _
  %s8 = ssub.s32 1, %s6
  %s9 = scalar_select 0, %s8, %s6
  $region1: #{tpu_custom_call.1} parent=0
    #allocation3 [shape = 'u8[262144]{0}', space=vmem, size = 0x40000, scoped, tag = 'input window, operand 0']
    #allocation4 [shape = 's32[2]{0}', space=sflag, size = 0x8, scoped, tag = 'scoped memory for tpu_custom_call.1']
    #allocation5 [shape = 's32[2]{0}', space=sflag, size = 0x8, scoped, tag = 'scoped memory for tpu_custom_call.1']
    #allocation6 [shape = 'u8[131072]{0}', space=vmem, size = 0x20000, scoped, tag = 'input window, operand 1, single buffered']
    #allocation7 [shape = 's32[1]{0}', space=sflag, size = 0x4, scoped, tag = 'scoped memory for tpu_custom_call.1']
    #allocation8 [shape = 'u8[131072]{0}', space=vmem, size = 0x20000, scoped, tag = 'input window, operand 3, single buffered']
    #allocation9 [shape = 'u8[262144]{0}', space=vmem, size = 0x40000, scoped, tag = 'output window, operand 0']
    %10 = vsyncpa [#allocation4], 0
    %s11 = scalar_lea.sflag [#allocation4], 1
    %12 = vsyncpa %s11, 0
    %13 = vsyncpa [#allocation7], 0
    %14 = vsyncpa [#allocation5], 0
    %s15 = scalar_lea.sflag [#allocation5], 1
    %16 = vsyncpa %s15, 0
    loop: start=0, step=1, limit=4
    $region2: #{tpu_custom_call.1} parent=1 // loop_pre_header
      _
    $region3: #{tpu_custom_call.1} parent=1 // loop_header
      %s18 = sphi 0, %s22
      %p19 = scmp.ge.s32.totalorder %s18, 4
      %s25 = sphi 0, %s37
      %s26 = sphi 0, %s33
      %s27 = sphi 0, %s25
      %s28 = sphi 0, %s26
      %s29 = sphi 0, %s27
      %s30 = sphi 0, %s28
      %s40 = sphi 0, %s42
      %s43 = sphi 0, %s40
      %s44 = sphi 0, %s43
      %s60 = sphi 0, %s44
      %s66 = sphi 0, %s68
      %s69 = sphi 0, %s66
      %s70 = sphi 0, %s69
      %s86 = sphi 0, %s70
      %s92 = sphi 0, %s94
      %s95 = sphi 0, %s92
      %s96 = sphi 0, %s95
      %s112 = sphi 0, %s96
      %s118 = sphi 0, %s120
      %s121 = sphi 0, %s118
      %s122 = sphi 0, %s121
      %s138 = sphi 0, %s122
      %s142 = sphi 0, %s142
      %s144 = sphi 0, %s142
      %s145 = sphi 0, %s144
      %s159 = sphi 0, %s145
      %s165 = sphi 0, %s167
      %s168 = sphi 0, %s165
      %s169 = sphi 0, %s168
      %s185 = sphi 0, %s169
    $region4: #{tpu_custom_call.1} parent=1 // loop_header_branch
      %21 = sbr.rel (%p19) target = $region8
    $region5: #{tpu_custom_call.1} parent=1 // loop_body
      %s23 = ssub.s32 %s18, 1
      %s24 = ssub.s32 %s18, 2
      %s31 = sadd.s32 1, %s26
      %p32 = scmp.ge.s32.totalorder %s31, 1
      %s33 = scalar_select %p32, 0, %s31
      %s34 = sadd.s32 1, %s25
      %s35 = scalar_select %p32, %s34, %s25
      %p36 = scmp.ge.s32.totalorder %s35, 2
      %s37 = scalar_select %p36, 0, %s35
      %s38 = ssub.s32 %s25, %s37
      %p39 = scmp.eq.s32.totalorder %s38, 0
      %s41 = sadd.s32 %s40, 1
      %s42 = scalar_select %p39, %s40, %s41
      %p45 = pneg %p39
      %p46 = scmp.eq.s32.totalorder %s18, 1
      %p47 = por %p45, %p46
      %p48 = scmp.ne.s32.totalorder %s40, %s43
      %p49 = scmp.eq.s32.totalorder %s18, 0
      %p50 = por %p48, %p49
      %p51 = scmp.ne.s32.totalorder %s40, %s43
      %p52 = scmp.eq.s32.totalorder %s23, 1
      %p53 = por %p51, %p52
      %p54 = scmp.ne.s32.totalorder %s43, %s44
      %p55 = scmp.eq.s32.totalorder %s23, 0
      %p56 = por %p54, %p55
      %p57 = scmp.ne.s32.totalorder %s43, %s44
      %p58 = scmp.eq.s32.totalorder %s24, 1
      %p59 = por %p57, %p58
      %p61 = scmp.ne.s32.totalorder %s44, %s60
      %p62 = scmp.eq.s32.totalorder %s24, 0
      %p63 = por %p61, %p62
      %s64 = ssub.s32 %s26, %s33
      %p65 = scmp.eq.s32.totalorder %s64, 0
      %s67 = sadd.s32 %s66, 1
      %s68 = scalar_select %p65, %s66, %s67
      %p71 = pneg %p65
      %p72 = scmp.eq.s32.totalorder %s18, 1
      %p73 = por %p71, %p72
      %p74 = scmp.ne.s32.totalorder %s66, %s69
      %p75 = scmp.eq.s32.totalorder %s18, 0
      %p76 = por %p74, %p75
      %p77 = scmp.ne.s32.totalorder %s66, %s69
      %p78 = scmp.eq.s32.totalorder %s23, 1
      %p79 = por %p77, %p78
      %p80 = scmp.ne.s32.totalorder %s69, %s70
      %p81 = scmp.eq.s32.totalorder %s23, 0
      %p82 = por %p80, %p81
      %p83 = scmp.ne.s32.totalorder %s69, %s70
      %p84 = scmp.eq.s32.totalorder %s24, 1
      %p85 = por %p83, %p84
      %p87 = scmp.ne.s32.totalorder %s70, %s86
      %p88 = scmp.eq.s32.totalorder %s24, 0
      %p89 = por %p87, %p88
      %s90 = ssub.s32 %s26, %s33
      %p91 = scmp.eq.s32.totalorder %s90, 0
      %s93 = sadd.s32 %s92, 1
      %s94 = scalar_select %p91, %s92, %s93
      %p97 = pneg %p91
      %p98 = scmp.eq.s32.totalorder %s18, 1
      %p99 = por %p97, %p98
      %p100 = scmp.ne.s32.totalorder %s92, %s95
      %p101 = scmp.eq.s32.totalorder %s18, 0
      %p102 = por %p100, %p101
      %p103 = scmp.ne.s32.totalorder %s92, %s95
      %p104 = scmp.eq.s32.totalorder %s23, 1
      %p105 = por %p103, %p104
      %p106 = scmp.ne.s32.totalorder %s95, %s96
      %p107 = scmp.eq.s32.totalorder %s23, 0
      %p108 = por %p106, %p107
      %p109 = scmp.ne.s32.totalorder %s95, %s96
      %p110 = scmp.eq.s32.totalorder %s24, 1
      %p111 = por %p109, %p110
      %p113 = scmp.ne.s32.totalorder %s96, %s112
      %p114 = scmp.eq.s32.totalorder %s24, 0
      %p115 = por %p113, %p114
      %s116 = ssub.s32 %s26, %s33
      %p117 = scmp.eq.s32.totalorder %s116, 0
      %s119 = sadd.s32 %s118, 1
      %s120 = scalar_select %p117, %s118, %s119
      %p123 = pneg %p117
      %p124 = scmp.eq.s32.totalorder %s18, 1
      %p125 = por %p123, %p124
      %p126 = scmp.ne.s32.totalorder %s118, %s121
      %p127 = scmp.eq.s32.totalorder %s18, 0
      %p128 = por %p126, %p127
      %p129 = scmp.ne.s32.totalorder %s118, %s121
      %p130 = scmp.eq.s32.totalorder %s23, 1
      %p131 = por %p129, %p130
      %p132 = scmp.ne.s32.totalorder %s121, %s122
      %p133 = scmp.eq.s32.totalorder %s23, 0
      %p134 = por %p132, %p133
      %p135 = scmp.ne.s32.totalorder %s121, %s122
      %p136 = scmp.eq.s32.totalorder %s24, 1
      %p137 = por %p135, %p136
      %p139 = scmp.ne.s32.totalorder %s122, %s138
      %p140 = scmp.eq.s32.totalorder %s24, 0
      %p141 = por %p139, %p140
      %s143 = sadd.s32 %s142, 1
      %p146 = scmp.eq.s32.totalorder %s18, 1
      %p147 = scmp.ne.s32.totalorder %s142, %s144
      %p148 = scmp.eq.s32.totalorder %s18, 0
      %p149 = por %p147, %p148
      %p150 = scmp.ne.s32.totalorder %s142, %s144
      %p151 = scmp.eq.s32.totalorder %s23, 1
      %p152 = por %p150, %p151
      %p153 = scmp.ne.s32.totalorder %s144, %s145
      %p154 = scmp.eq.s32.totalorder %s23, 0
      %p155 = por %p153, %p154
      %p156 = scmp.ne.s32.totalorder %s144, %s145
      %p157 = scmp.eq.s32.totalorder %s24, 1
      %p158 = por %p156, %p157
      %p160 = scmp.ne.s32.totalorder %s145, %s159
      %p161 = scmp.eq.s32.totalorder %s24, 0
      %p162 = por %p160, %p161
      %s163 = ssub.s32 %s25, %s37
      %p164 = scmp.eq.s32.totalorder %s163, 0
      %s166 = sadd.s32 %s165, 1
      %s167 = scalar_select %p164, %s165, %s166
      %p170 = pneg %p164
      %p171 = scmp.eq.s32.totalorder %s18, 1
      %p172 = por %p170, %p171
      %p173 = scmp.ne.s32.totalorder %s165, %s168
      %p174 = scmp.eq.s32.totalorder %s18, 0
      %p175 = por %p173, %p174
      %p176 = scmp.ne.s32.totalorder %s165, %s168
      %p177 = scmp.eq.s32.totalorder %s23, 1
      %p178 = por %p176, %p177
      %p179 = scmp.ne.s32.totalorder %s168, %s169
      %p180 = scmp.eq.s32.totalorder %s23, 0
      %p181 = por %p179, %p180
      %p182 = scmp.ne.s32.totalorder %s168, %s169
      %p183 = scmp.eq.s32.totalorder %s24, 1
      %p184 = por %p182, %p183
      %p186 = scmp.ne.s32.totalorder %s169, %s185
      %p187 = scmp.eq.s32.totalorder %s24, 0
      %p188 = por %p186, %p187
      %p189 = scmp.le.s32.totalorder 1, %s18
      %p190 = scmp.lt.s32.totalorder %s18, 3
      %p191 = pnand %p189, %p190
      %p192 = pneg %p191
      // Predicated region
      $region9: #{tpu_custom_call.1} parent=5 // pred_check
        _
      $region10: #{tpu_custom_call.1} parent=5 // pred_check_branch
        %194 = sbr.rel (%p191) target = $region12
      $region11: #{tpu_custom_call.1} parent=5 // pred_region
        %s195 = ssub.s32 %s18, 1
        // Predicated region
        $region13: #{tpu_custom_call.1} parent=11 // pred_check
          %p196 = pneg %p82
        $region14: #{tpu_custom_call.1} parent=11 // pred_check_branch
          %198 = sbr.rel (%p196) target = $region16
        $region15: #{tpu_custom_call.1} parent=11 // pred_region
          %s199 = smul.u32 2, %s28
          %s201 = ssub.s32 4096, 4096
          %202 = vsyncadd [#allocation7], %s201
          %s203 = smul.addr %s199, 128
          %s204 = scalar_lea.hbm %s1, %s203
          %s205 = sshll.u32 [#allocation6], 4
          %s206 = int_to_ptr.vmem [resolvable:$true] %s205
          %211 = dma.hbm_to_vmem [thread:$0]  %s204, 4096, %s206, [#allocation7], 256, 256, 16
        $region16: #{tpu_custom_call.1} parent=11 // pred_fallthru
          _
        // Predicated region
        $region17: #{tpu_custom_call.1} parent=11 // pred_check
          %p212 = pneg %p108
        $region18: #{tpu_custom_call.1} parent=11 // pred_check_branch
          %214 = sbr.rel (%p212) target = $region20
        $region19: #{tpu_custom_call.1} parent=11 // pred_region
          %s215 = smul.u32 2, %s28
          %p216 = scmp.lt.s32.totalorder %s215, 1
          %s217 = scalar_select %p216, %s215, 1
          %s218 = scalar_lea.vmem %s2, %s217
          %s219 = smul.u32 2, %s28
        $region20: #{tpu_custom_call.1} parent=11 // pred_fallthru
          _
        // Predicated region
        $region21: #{tpu_custom_call.1} parent=11 // pred_check
          %p220 = pneg %p134
        $region22: #{tpu_custom_call.1} parent=11 // pred_check_branch
          %222 = sbr.rel (%p220) target = $region24
        $region23: #{tpu_custom_call.1} parent=11 // pred_region
          %s223 = smul.u32 32, %s28
          %s225 = ssub.s32 4096, 4096
          %226 = vsyncadd [#allocation7], %s225
          %s227 = smul.addr %s223, 128
          %s228 = scalar_lea.hbm %s3, %s227
          %s229 = sshll.u32 [#allocation8], 4
          %s230 = int_to_ptr.vmem [resolvable:$true] %s229
          %235 = dma.hbm_to_vmem [thread:$0]  %s228, 4096, %s230, [#allocation7], 128, 128, 8
        $region24: #{tpu_custom_call.1} parent=11 // pred_fallthru
          _
        // Predicated region
        $region25: #{tpu_custom_call.1} parent=11 // pred_check
          %p236 = pneg %p155
        $region26: #{tpu_custom_call.1} parent=11 // pred_check_branch
          %238 = sbr.rel (%p236) target = $region28
        $region27: #{tpu_custom_call.1} parent=11 // pred_region
          _
        $region28: #{tpu_custom_call.1} parent=11 // pred_fallthru
          _
      $region12: #{tpu_custom_call.1} parent=5 // pred_fallthru
        _
      %p239 = scmp.lt.s32.totalorder %s18, 2
      // Predicated region
      $region29: #{tpu_custom_call.1} parent=5 // pred_check
        %p240 = pneg %p239
      $region30: #{tpu_custom_call.1} parent=5 // pred_check_branch
        %242 = sbr.rel (%p240) target = $region32
      $region31: #{tpu_custom_call.1} parent=5 // pred_region
        // Predicated region
        $region33: #{tpu_custom_call.1} parent=31 // pred_check
          %p243 = pneg %p50
        $region34: #{tpu_custom_call.1} parent=31 // pred_check_branch
          %245 = sbr.rel (%p243) target = $region36
        $region35: #{tpu_custom_call.1} parent=31 // pred_region
          %s246 = sand.u32 %s40, 1
          %s247 = scalar_lea.sflag [#allocation4], %s246
          %s248 = sand.u32 %s40, 1
          %s249 = smul.addr %s248, 256
          %s250 = scalar_lea.vmem [#allocation3], %s249
          %s251 = smul.u32 32, %s25
          %s253 = ssub.s32 4096, 4096
          %254 = vsyncadd %s247, %s253
          %s255 = smul.addr %s251, 128
          %s256 = scalar_lea.hbm %s0, %s255
          %s257 = sshll.u32 %s250, 4
          %s258 = int_to_ptr.vmem [resolvable:$true] %s257
          %263 = dma.hbm_to_vmem [thread:$0]  %s256, 4096, %s258, %s247, 128, 128, 8
        $region36: #{tpu_custom_call.1} parent=31 // pred_fallthru
          _
      $region32: #{tpu_custom_call.1} parent=5 // pred_fallthru
        _
      %p264 = scmp.le.s32.totalorder 1, %s18
      %p265 = scmp.lt.s32.totalorder %s18, 3
      %p266 = pnand %p264, %p265
      %p267 = pneg %p266
      // Predicated region
      $region37: #{tpu_custom_call.1} parent=5 // pred_check
        _
      $region38: #{tpu_custom_call.1} parent=5 // pred_check_branch
        %269 = sbr.rel (%p266) target = $region40
      $region39: #{tpu_custom_call.1} parent=5 // pred_region
        %s270 = ssub.s32 %s18, 1
        %s271 = sand.u32 %s43, 1
        %s272 = scalar_lea.sflag [#allocation4], %s271
        %s273 = sand.u32 %s43, 1
        %s274 = smul.addr %s273, 256
        %s275 = scalar_lea.vmem [#allocation3], %s274
        // Predicated region
        $region41: #{tpu_custom_call.1} parent=39 // pred_check
          %p276 = pneg %p56
        $region42: #{tpu_custom_call.1} parent=39 // pred_check_branch
          %278 = sbr.rel (%p276) target = $region44
        $region43: #{tpu_custom_call.1} parent=39 // pred_region
          %279 = dma.done %s272, 4096
        $region44: #{tpu_custom_call.1} parent=39 // pred_fallthru
          _
        // Predicated region
        $region45: #{tpu_custom_call.1} parent=39 // pred_check
          %p280 = pneg %p82
        $region46: #{tpu_custom_call.1} parent=39 // pred_check_branch
          %282 = sbr.rel (%p280) target = $region48
        $region47: #{tpu_custom_call.1} parent=39 // pred_region
          %283 = dma.done [#allocation7], 4096
        $region48: #{tpu_custom_call.1} parent=39 // pred_fallthru
          _
        // Predicated region
        $region49: #{tpu_custom_call.1} parent=39 // pred_check
          %p284 = pneg %p134
        $region50: #{tpu_custom_call.1} parent=39 // pred_check_branch
          %286 = sbr.rel (%p284) target = $region52
        $region51: #{tpu_custom_call.1} parent=39 // pred_region
          %287 = dma.done [#allocation7], 4096
        $region52: #{tpu_custom_call.1} parent=39 // pred_fallthru
          _
        %s288 = sand.u32 %s43, 1
        %s289 = scalar_lea.sflag [#allocation4], %s288
        %s290 = sand.u32 %s43, 1
        %s291 = smul.addr %s290, 256
        %s292 = scalar_lea.vmem [#allocation3], %s291
        %p293 = pneg %p56
        %p294 = pneg %p53
        %p295 = pneg %p82
        %p296 = pneg %p79
        %s297 = smul.u32 2, %s28
        %p298 = scmp.lt.s32.totalorder %s297, 1
        %s299 = scalar_select %p298, %s297, 1
        %s300 = scalar_lea.vmem %s2, %s299
        %p301 = pneg %p108
        %p302 = pneg %p105
        %p303 = pneg %p134
        %p304 = pneg %p131
        %p305 = pneg %p155
        %p306 = pneg %p152
        %p307 = pneg %p181
        %p308 = pneg %p178
        %s309 = sand.u32 %s168, 1
        %s310 = scalar_lea.sflag [#allocation5], %s309
        %s311 = sand.u32 %s168, 1
        %s312 = smul.addr %s311, 256
        %s313 = scalar_lea.vmem [#allocation9], %s312
        %s314 = smul.u32 32, %s27
        %s315 = smul.u32 2, %s28
        %s316 = smul.u32 2, %s28
        %p317 = scmp.lt.s32.totalorder %s316, 1
        %s318 = scalar_select %p317, %s316, 1
        %s319 = scalar_lea.vmem %s2, %s318
        %s320 = smul.u32 2, %s28
        %s321 = smul.u32 32, %s28
        %s322 = smul.u32 32, %s27
        %p323 = scmp.eq.s32.totalorder %s28, 0
        // Predicated region
        $region53: #{tpu_custom_call.1} parent=39 // pred_check
          %p324 = pneg %p323
        $region54: #{tpu_custom_call.1} parent=39 // pred_check_branch
          %326 = sbr.rel (%p324) target = $region56
        $region55: #{tpu_custom_call.1} parent=39 // pred_region
          %327 = vst [vmem:[#allocation2] sm:$0xff] 0.0
          %328 = vst [vmem:[#allocation2 + $0x8] sm:$0xff] 0.0
          %329 = vst [vmem:[#allocation2 + $0x10] sm:$0xff] 0.0
          %330 = vst [vmem:[#allocation2 + $0x18] sm:$0xff] 0.0
          %331 = vst [vmem:[#allocation2 + $0x20] sm:$0xff] 0.0
          %332 = vst [vmem:[#allocation2 + $0x28] sm:$0xff] 0.0
          %333 = vst [vmem:[#allocation2 + $0x30] sm:$0xff] 0.0
          %334 = vst [vmem:[#allocation2 + $0x38] sm:$0xff] 0.0
          %335 = vst [vmem:[#allocation2 + $0x40] sm:$0xff] 0.0
          %336 = vst [vmem:[#allocation2 + $0x48] sm:$0xff] 0.0
          %337 = vst [vmem:[#allocation2 + $0x50] sm:$0xff] 0.0
          %338 = vst [vmem:[#allocation2 + $0x58] sm:$0xff] 0.0
          %339 = vst [vmem:[#allocation2 + $0x60] sm:$0xff] 0.0
          %340 = vst [vmem:[#allocation2 + $0x68] sm:$0xff] 0.0
          %341 = vst [vmem:[#allocation2 + $0x70] sm:$0xff] 0.0
          %342 = vst [vmem:[#allocation2 + $0x78] sm:$0xff] 0.0
          %343 = vst [vmem:[#allocation2 + $0x80] sm:$0xff] 0.0
          %344 = vst [vmem:[#allocation2 + $0x88] sm:$0xff] 0.0
          %345 = vst [vmem:[#allocation2 + $0x90] sm:$0xff] 0.0
          %346 = vst [vmem:[#allocation2 + $0x98] sm:$0xff] 0.0
          %347 = vst [vmem:[#allocation2 + $0xa0] sm:$0xff] 0.0
          %348 = vst [vmem:[#allocation2 + $0xa8] sm:$0xff] 0.0
          %349 = vst [vmem:[#allocation2 + $0xb0] sm:$0xff] 0.0
          %350 = vst [vmem:[#allocation2 + $0xb8] sm:$0xff] 0.0
          %351 = vst [vmem:[#allocation2 + $0xc0] sm:$0xff] 0.0
          %352 = vst [vmem:[#allocation2 + $0xc8] sm:$0xff] 0.0
          %353 = vst [vmem:[#allocation2 + $0xd0] sm:$0xff] 0.0
          %354 = vst [vmem:[#allocation2 + $0xd8] sm:$0xff] 0.0
          %355 = vst [vmem:[#allocation2 + $0xe0] sm:$0xff] 0.0
          %356 = vst [vmem:[#allocation2 + $0xe8] sm:$0xff] 0.0
          %357 = vst [vmem:[#allocation2 + $0xf0] sm:$0xff] 0.0
          %358 = vst [vmem:[#allocation2 + $0xf8] sm:$0xff] 0.0
        $region56: #{tpu_custom_call.1} parent=39 // pred_fallthru
          _
        %v359 = vld [vmem:[%s275] sm:$0xff]
        %v360 = vld [vmem:[%s275 + $0x8] sm:$0xff]
        %v361 = vld [vmem:[%s275 + $0x10] sm:$0xff]
        %v362 = vld [vmem:[%s275 + $0x18] sm:$0xff]
        %v363 = vld [vmem:[%s275 + $0x20] sm:$0xff]
        %v364 = vld [vmem:[%s275 + $0x28] sm:$0xff]
        %v365 = vld [vmem:[%s275 + $0x30] sm:$0xff]
        %v366 = vld [vmem:[%s275 + $0x38] sm:$0xff]
        %v367 = vld [vmem:[%s275 + $0x40] sm:$0xff]
        %v368 = vld [vmem:[%s275 + $0x48] sm:$0xff]
        %v369 = vld [vmem:[%s275 + $0x50] sm:$0xff]
        %v370 = vld [vmem:[%s275 + $0x58] sm:$0xff]
        %v371 = vld [vmem:[%s275 + $0x60] sm:$0xff]
        %v372 = vld [vmem:[%s275 + $0x68] sm:$0xff]
        %v373 = vld [vmem:[%s275 + $0x70] sm:$0xff]
        %v374 = vld [vmem:[%s275 + $0x78] sm:$0xff]
        %v375 = vld [vmem:[%s275 + $0x80] sm:$0xff]
        %v376 = vld [vmem:[%s275 + $0x88] sm:$0xff]
        %v377 = vld [vmem:[%s275 + $0x90] sm:$0xff]
        %v378 = vld [vmem:[%s275 + $0x98] sm:$0xff]
        %v379 = vld [vmem:[%s275 + $0xa0] sm:$0xff]
        %v380 = vld [vmem:[%s275 + $0xa8] sm:$0xff]
        %v381 = vld [vmem:[%s275 + $0xb0] sm:$0xff]
        %v382 = vld [vmem:[%s275 + $0xb8] sm:$0xff]
        %v383 = vld [vmem:[%s275 + $0xc0] sm:$0xff]
        %v384 = vld [vmem:[%s275 + $0xc8] sm:$0xff]
        %v385 = vld [vmem:[%s275 + $0xd0] sm:$0xff]
        %v386 = vld [vmem:[%s275 + $0xd8] sm:$0xff]
        %v387 = vld [vmem:[%s275 + $0xe0] sm:$0xff]
        %v388 = vld [vmem:[%s275 + $0xe8] sm:$0xff]
        %v389 = vld [vmem:[%s275 + $0xf0] sm:$0xff]
        %v390 = vld [vmem:[%s275 + $0xf8] sm:$0xff]
        %v391 = vld [vmem:[#allocation6] sm:$0xff]
        %v392 = vld [vmem:[#allocation6 + $0x8] sm:$0xff]
        %v393 = vld [vmem:[#allocation6 + $0x10] sm:$0xff]
        %v394 = vld [vmem:[#allocation6 + $0x18] sm:$0xff]
        %v395 = vld [vmem:[#allocation6 + $0x20] sm:$0xff]
        %v396 = vld [vmem:[#allocation6 + $0x28] sm:$0xff]
        %v397 = vld [vmem:[#allocation6 + $0x30] sm:$0xff]
        %v398 = vld [vmem:[#allocation6 + $0x38] sm:$0xff]
        %v399 = vld [vmem:[#allocation6 + $0x40] sm:$0xff]
        %v400 = vld [vmem:[#allocation6 + $0x48] sm:$0xff]
        %v401 = vld [vmem:[#allocation6 + $0x50] sm:$0xff]
        %v402 = vld [vmem:[#allocation6 + $0x58] sm:$0xff]
        %v403 = vld [vmem:[#allocation6 + $0x60] sm:$0xff]
        %v404 = vld [vmem:[#allocation6 + $0x68] sm:$0xff]
        %v405 = vld [vmem:[#allocation6 + $0x70] sm:$0xff]
        %v406 = vld [vmem:[#allocation6 + $0x78] sm:$0xff]
        %v407 = vld [vmem:[#allocation6 + $0x80] sm:$0xff]
        %v408 = vld [vmem:[#allocation6 + $0x88] sm:$0xff]
        %v409 = vld [vmem:[#allocation6 + $0x90] sm:$0xff]
        %v410 = vld [vmem:[#allocation6 + $0x98] sm:$0xff]
        %v411 = vld [vmem:[#allocation6 + $0xa0] sm:$0xff]
        %v412 = vld [vmem:[#allocation6 + $0xa8] sm:$0xff]
        %v413 = vld [vmem:[#allocation6 + $0xb0] sm:$0xff]
        %v414 = vld [vmem:[#allocation6 + $0xb8] sm:$0xff]
        %v415 = vld [vmem:[#allocation6 + $0xc0] sm:$0xff]
        %v416 = vld [vmem:[#allocation6 + $0xc8] sm:$0xff]
        %v417 = vld [vmem:[#allocation6 + $0xd0] sm:$0xff]
        %v418 = vld [vmem:[#allocation6 + $0xd8] sm:$0xff]
        %v419 = vld [vmem:[#allocation6 + $0xe0] sm:$0xff]
        %v420 = vld [vmem:[#allocation6 + $0xe8] sm:$0xff]
        %v421 = vld [vmem:[#allocation6 + $0xf0] sm:$0xff]
        %v422 = vld [vmem:[#allocation6 + $0xf8] sm:$0xff]
        %v423 = vld [vmem:[%s319] sm:$0x3]
        %v425 = vlaneseq
        %v426 = vshrl.u32 %v425, 7
        %v427 = vsub.s32 0, %v426
        %v428 = vrot.slane %v423, %v427
        %v429 = vlaneseq
        %v430 = vshrl.u32 %v429, 7
        %v431 = vsub.s32 1, %v430
        %v432 = vrot.slane %v423, %v431
        %435 = vmatprep.subr.mxu0 %v422
        %436 = vmatpush1.msra.mxu0 %v421
        %437 = vmatprep.subr.mxu0 %v420
        %438 = vmatpush1.msra.mxu0 %v419
        %439 = vmatprep.subr.mxu0 %v418
        %440 = vmatpush1.msra.mxu0 %v417
        %441 = vmatprep.subr.mxu0 %v416
        %442 = vmatpush1.msra.mxu0 %v415
        %443 = vmatprep.subr.mxu0 %v414
        %444 = vmatpush1.msra.mxu0 %v413
        %445 = vmatprep.subr.mxu0 %v412
        %446 = vmatpush1.msra.mxu0 %v411
        %447 = vmatprep.subr.mxu0 %v410
        %448 = vmatpush1.msra.mxu0 %v409
        %449 = vmatprep.subr.mxu0 %v408
        %450 = vmatpush1.msra.mxu0 %v407
        %451 = vmatprep.subr.mxu0 %v406
        %452 = vmatpush1.msra.mxu0 %v405
        %453 = vmatprep.subr.mxu0 %v404
        %454 = vmatpush1.msra.mxu0 %v403
        %455 = vmatprep.subr.mxu0 %v402
        %456 = vmatpush1.msra.mxu0 %v401
        %457 = vmatprep.subr.mxu0 %v400
        %458 = vmatpush1.msra.mxu0 %v399
        %459 = vmatprep.subr.mxu0 %v398
        %460 = vmatpush1.msra.mxu0 %v397
        %461 = vmatprep.subr.mxu0 %v396
        %462 = vmatpush1.msra.mxu0 %v395
        %463 = vmatprep.subr.mxu0 %v394
        %464 = vmatpush1.msra.mxu0 %v393
        %465 = vmatprep.subr.mxu0 %v392
        %466 = vmatpush1.msra.mxu0 %v391
        %467 = vmatprep.subr.mxu0 0.0
        %468 = vmatpush2.msra.mxu0 0.0
        %469 = vmatprep.subr.mxu0 0.0
        %470 = vmatpush2.msra.mxu0 0.0
        %471 = vmatprep.subr.mxu0 0.0
        %472 = vmatpush2.msra.mxu0 0.0
        %473 = vmatprep.subr.mxu0 0.0
        %474 = vmatpush2.msra.mxu0 0.0
        %475 = vmatprep.subr.mxu0 0.0
        %476 = vmatpush2.msra.mxu0 0.0
        %477 = vmatprep.subr.mxu0 0.0
        %478 = vmatpush2.msra.mxu0 0.0
        %479 = vmatprep.subr.mxu0 0.0
        %480 = vmatpush2.msra.mxu0 0.0
        %481 = vmatprep.subr.mxu0 0.0
        %482 = vmatpush2.msra.mxu0 0.0
        %483 = vmatprep.subr.mxu0 0.0
        %484 = vmatpush2.msra.mxu0 0.0
        %485 = vmatprep.subr.mxu0 0.0
        %486 = vmatpush2.msra.mxu0 0.0
        %487 = vmatprep.subr.mxu0 0.0
        %488 = vmatpush2.msra.mxu0 0.0
        %489 = vmatprep.subr.mxu0 0.0
        %490 = vmatpush2.msra.mxu0 0.0
        %491 = vmatprep.subr.mxu0 0.0
        %492 = vmatpush2.msra.mxu0 0.0
        %493 = vmatprep.subr.mxu0 0.0
        %494 = vmatpush2.msra.mxu0 0.0
        %495 = vmatprep.subr.mxu0 0.0
        %496 = vmatpush2.msra.mxu0 0.0
        %497 = vmatprep.subr.mxu0 0.0
        %498 = vmatpush2.msra.mxu0 0.0
        %499 = vmatprep.mubr.f32.mxu0 0.0
        %500 = vmatmul.mubr.f32.gmra.mxu0 %v359
        %v501 = vpop.f32.mrf.mxu0
        %v502 = vadd.f32 %v428, %v501
        %v503 = vpop.f32.mrf.mxu0
        %v504 = vadd.f32 %v432, %v503
        %505 = vmatprep.mubr.f32.mxu0 0.0
        %506 = vmatmul.mubr.f32.gmra.mxu0 %v360
        %v507 = vpop.f32.mrf.mxu0
        %v508 = vadd.f32 %v428, %v507
        %v509 = vpop.f32.mrf.mxu0
        %v510 = vadd.f32 %v432, %v509
        %511 = vmatprep.mubr.f32.mxu0 0.0
        %512 = vmatmul.mubr.f32.gmra.mxu0 %v361
        %v513 = vpop.f32.mrf.mxu0
        %v514 = vadd.f32 %v428, %v513
        %v515 = vpop.f32.mrf.mxu0
        %v516 = vadd.f32 %v432, %v515
        %517 = vmatprep.mubr.f32.mxu0 0.0
        %518 = vmatmul.mubr.f32.gmra.mxu0 %v362
        %v519 = vpop.f32.mrf.mxu0
        %v520 = vadd.f32 %v428, %v519
        %v521 = vpop.f32.mrf.mxu0
        %v522 = vadd.f32 %v432, %v521
        %523 = vmatprep.mubr.f32.mxu0 0.0
        %524 = vmatmul.mubr.f32.gmra.mxu0 %v363
        %v525 = vpop.f32.mrf.mxu0
        %v526 = vadd.f32 %v428, %v525
        %v527 = vpop.f32.mrf.mxu0
        %v528 = vadd.f32 %v432, %v527
        %529 = vmatprep.mubr.f32.mxu0 0.0
        %530 = vmatmul.mubr.f32.gmra.mxu0 %v364
        %v531 = vpop.f32.mrf.mxu0
        %v532 = vadd.f32 %v428, %v531
        %v533 = vpop.f32.mrf.mxu0
        %v534 = vadd.f32 %v432, %v533
        %535 = vmatprep.mubr.f32.mxu0 0.0
        %536 = vmatmul.mubr.f32.gmra.mxu0 %v365
        %v537 = vpop.f32.mrf.mxu0
        %v538 = vadd.f32 %v428, %v537
        %v539 = vpop.f32.mrf.mxu0
        %v540 = vadd.f32 %v432, %v539
        %541 = vmatprep.mubr.f32.mxu0 0.0
        %542 = vmatmul.mubr.f32.gmra.mxu0 %v366
        %v543 = vpop.f32.mrf.mxu0
        %v544 = vadd.f32 %v428, %v543
        %v545 = vpop.f32.mrf.mxu0
        %v546 = vadd.f32 %v432, %v545
        %547 = vmatprep.mubr.f32.mxu0 0.0
        %548 = vmatmul.mubr.f32.gmra.mxu0 %v367
        %v549 = vpop.f32.mrf.mxu0
        %v550 = vadd.f32 %v428, %v549
        %v551 = vpop.f32.mrf.mxu0
        %v552 = vadd.f32 %v432, %v551
        %553 = vmatprep.mubr.f32.mxu0 0.0
        %554 = vmatmul.mubr.f32.gmra.mxu0 %v368
        %v555 = vpop.f32.mrf.mxu0
        %v556 = vadd.f32 %v428, %v555
        %v557 = vpop.f32.mrf.mxu0
        %v558 = vadd.f32 %v432, %v557
        %559 = vmatprep.mubr.f32.mxu0 0.0
        %560 = vmatmul.mubr.f32.gmra.mxu0 %v369
        %v561 = vpop.f32.mrf.mxu0
        %v562 = vadd.f32 %v428, %v561
        %v563 = vpop.f32.mrf.mxu0
        %v564 = vadd.f32 %v432, %v563
        %565 = vmatprep.mubr.f32.mxu0 0.0
        %566 = vmatmul.mubr.f32.gmra.mxu0 %v370
        %v567 = vpop.f32.mrf.mxu0
        %v568 = vadd.f32 %v428, %v567
        %v569 = vpop.f32.mrf.mxu0
        %v570 = vadd.f32 %v432, %v569
        %571 = vmatprep.mubr.f32.mxu0 0.0
        %572 = vmatmul.mubr.f32.gmra.mxu0 %v371
        %v573 = vpop.f32.mrf.mxu0
        %v574 = vadd.f32 %v428, %v573
        %v575 = vpop.f32.mrf.mxu0
        %v576 = vadd.f32 %v432, %v575
        %577 = vmatprep.mubr.f32.mxu0 0.0
        %578 = vmatmul.mubr.f32.gmra.mxu0 %v372
        %v579 = vpop.f32.mrf.mxu0
        %v580 = vadd.f32 %v428, %v579
        %v581 = vpop.f32.mrf.mxu0
        %v582 = vadd.f32 %v432, %v581
        %583 = vmatprep.mubr.f32.mxu0 0.0
        %584 = vmatmul.mubr.f32.gmra.mxu0 %v373
        %v585 = vpop.f32.mrf.mxu0
        %v586 = vadd.f32 %v428, %v585
        %v587 = vpop.f32.mrf.mxu0
        %v588 = vadd.f32 %v432, %v587
        %589 = vmatprep.mubr.f32.mxu0 0.0
        %590 = vmatmul.mubr.f32.gmra.mxu0 %v374
        %v591 = vpop.f32.mrf.mxu0
        %v592 = vadd.f32 %v428, %v591
        %v593 = vpop.f32.mrf.mxu0
        %v594 = vadd.f32 %v432, %v593
        %595 = vmatprep.mubr.f32.mxu0 0.0
        %596 = vmatmul.mubr.f32.gmra.mxu0 %v375
        %v597 = vpop.f32.mrf.mxu0
        %v598 = vadd.f32 %v428, %v597
        %v599 = vpop.f32.mrf.mxu0
        %v600 = vadd.f32 %v432, %v599
        %601 = vmatprep.mubr.f32.mxu0 0.0
        %602 = vmatmul.mubr.f32.gmra.mxu0 %v376
        %v603 = vpop.f32.mrf.mxu0
        %v604 = vadd.f32 %v428, %v603
        %v605 = vpop.f32.mrf.mxu0
        %v606 = vadd.f32 %v432, %v605
        %607 = vmatprep.mubr.f32.mxu0 0.0
        %608 = vmatmul.mubr.f32.gmra.mxu0 %v377
        %v609 = vpop.f32.mrf.mxu0
        %v610 = vadd.f32 %v428, %v609
        %v611 = vpop.f32.mrf.mxu0
        %v612 = vadd.f32 %v432, %v611
        %613 = vmatprep.mubr.f32.mxu0 0.0
        %614 = vmatmul.mubr.f32.gmra.mxu0 %v378
        %v615 = vpop.f32.mrf.mxu0
        %v616 = vadd.f32 %v428, %v615
        %v617 = vpop.f32.mrf.mxu0
        %v618 = vadd.f32 %v432, %v617
        %619 = vmatprep.mubr.f32.mxu0 0.0
        %620 = vmatmul.mubr.f32.gmra.mxu0 %v379
        %v621 = vpop.f32.mrf.mxu0
        %v622 = vadd.f32 %v428, %v621
        %v623 = vpop.f32.mrf.mxu0
        %v624 = vadd.f32 %v432, %v623
        %625 = vmatprep.mubr.f32.mxu0 0.0
        %626 = vmatmul.mubr.f32.gmra.mxu0 %v380
        %v627 = vpop.f32.mrf.mxu0
        %v628 = vadd.f32 %v428, %v627
        %v629 = vpop.f32.mrf.mxu0
        %v630 = vadd.f32 %v432, %v629
        %631 = vmatprep.mubr.f32.mxu0 0.0
        %632 = vmatmul.mubr.f32.gmra.mxu0 %v381
        %v633 = vpop.f32.mrf.mxu0
        %v634 = vadd.f32 %v428, %v633
        %v635 = vpop.f32.mrf.mxu0
        %v636 = vadd.f32 %v432, %v635
        %637 = vmatprep.mubr.f32.mxu0 0.0
        %638 = vmatmul.mubr.f32.gmra.mxu0 %v382
        %v639 = vpop.f32.mrf.mxu0
        %v640 = vadd.f32 %v428, %v639
        %v641 = vpop.f32.mrf.mxu0
        %v642 = vadd.f32 %v432, %v641
        %643 = vmatprep.mubr.f32.mxu0 0.0
        %644 = vmatmul.mubr.f32.gmra.mxu0 %v383
        %v645 = vpop.f32.mrf.mxu0
        %v646 = vadd.f32 %v428, %v645
        %v647 = vpop.f32.mrf.mxu0
        %v648 = vadd.f32 %v432, %v647
        %649 = vmatprep.mubr.f32.mxu0 0.0
        %650 = vmatmul.mubr.f32.gmra.mxu0 %v384
        %v651 = vpop.f32.mrf.mxu0
        %v652 = vadd.f32 %v428, %v651
        %v653 = vpop.f32.mrf.mxu0
        %v654 = vadd.f32 %v432, %v653
        %655 = vmatprep.mubr.f32.mxu0 0.0
        %656 = vmatmul.mubr.f32.gmra.mxu0 %v385
        %v657 = vpop.f32.mrf.mxu0
        %v658 = vadd.f32 %v428, %v657
        %v659 = vpop.f32.mrf.mxu0
        %v660 = vadd.f32 %v432, %v659
        %661 = vmatprep.mubr.f32.mxu0 0.0
        %662 = vmatmul.mubr.f32.gmra.mxu0 %v386
        %v663 = vpop.f32.mrf.mxu0
        %v664 = vadd.f32 %v428, %v663
        %v665 = vpop.f32.mrf.mxu0
        %v666 = vadd.f32 %v432, %v665
        %667 = vmatprep.mubr.f32.mxu0 0.0
        %668 = vmatmul.mubr.f32.gmra.mxu0 %v387
        %v669 = vpop.f32.mrf.mxu0
        %v670 = vadd.f32 %v428, %v669
        %v671 = vpop.f32.mrf.mxu0
        %v672 = vadd.f32 %v432, %v671
        %673 = vmatprep.mubr.f32.mxu0 0.0
        %674 = vmatmul.mubr.f32.gmra.mxu0 %v388
        %v675 = vpop.f32.mrf.mxu0
        %v676 = vadd.f32 %v428, %v675
        %v677 = vpop.f32.mrf.mxu0
        %v678 = vadd.f32 %v432, %v677
        %679 = vmatprep.mubr.f32.mxu0 0.0
        %680 = vmatmul.mubr.f32.gmra.mxu0 %v389
        %v681 = vpop.f32.mrf.mxu0
        %v682 = vadd.f32 %v428, %v681
        %v683 = vpop.f32.mrf.mxu0
        %v684 = vadd.f32 %v432, %v683
        %685 = vmatprep.mubr.f32.mxu0 0.0
        %686 = vmatmul.mubr.f32.gmra.mxu0 %v390
        %v687 = vpop.f32.mrf.mxu0
        %v688 = vadd.f32 %v428, %v687
        %v689 = vpop.f32.mrf.mxu0
        %v690 = vadd.f32 %v432, %v689
        %691 = vdwg.mxu0
        %v692 = vmul.f32 %v502, 0.5
        %v693 = vmul.f32 %v504, 0.5
        %v694 = vmul.f32 %v508, 0.5
        %v695 = vmul.f32 %v510, 0.5
        %v696 = vmul.f32 %v514, 0.5
        %v697 = vmul.f32 %v516, 0.5
        %v698 = vmul.f32 %v520, 0.5
        %v699 = vmul.f32 %v522, 0.5
        %v700 = vmul.f32 %v526, 0.5
        %v701 = vmul.f32 %v528, 0.5
        %v702 = vmul.f32 %v532, 0.5
        %v703 = vmul.f32 %v534, 0.5
        %v704 = vmul.f32 %v538, 0.5
        %v705 = vmul.f32 %v540, 0.5
        %v706 = vmul.f32 %v544, 0.5
        %v707 = vmul.f32 %v546, 0.5
        %v708 = vmul.f32 %v550, 0.5
        %v709 = vmul.f32 %v552, 0.5
        %v710 = vmul.f32 %v556, 0.5
        %v711 = vmul.f32 %v558, 0.5
        %v712 = vmul.f32 %v562, 0.5
        %v713 = vmul.f32 %v564, 0.5
        %v714 = vmul.f32 %v568, 0.5
        %v715 = vmul.f32 %v570, 0.5
        %v716 = vmul.f32 %v574, 0.5
        %v717 = vmul.f32 %v576, 0.5
        %v718 = vmul.f32 %v580, 0.5
        %v719 = vmul.f32 %v582, 0.5
        %v720 = vmul.f32 %v586, 0.5
        %v721 = vmul.f32 %v588, 0.5
        %v722 = vmul.f32 %v592, 0.5
        %v723 = vmul.f32 %v594, 0.5
        %v724 = vmul.f32 %v598, 0.5
        %v725 = vmul.f32 %v600, 0.5
        %v726 = vmul.f32 %v604, 0.5
        %v727 = vmul.f32 %v606, 0.5
        %v728 = vmul.f32 %v610, 0.5
        %v729 = vmul.f32 %v612, 0.5
        %v730 = vmul.f32 %v616, 0.5
        %v731 = vmul.f32 %v618, 0.5
        %v732 = vmul.f32 %v622, 0.5
        %v733 = vmul.f32 %v624, 0.5
        %v734 = vmul.f32 %v628, 0.5
        %v735 = vmul.f32 %v630, 0.5
        %v736 = vmul.f32 %v634, 0.5
        %v737 = vmul.f32 %v636, 0.5
        %v738 = vmul.f32 %v640, 0.5
        %v739 = vmul.f32 %v642, 0.5
        %v740 = vmul.f32 %v646, 0.5
        %v741 = vmul.f32 %v648, 0.5
        %v742 = vmul.f32 %v652, 0.5
        %v743 = vmul.f32 %v654, 0.5
        %v744 = vmul.f32 %v658, 0.5
        %v745 = vmul.f32 %v660, 0.5
        %v746 = vmul.f32 %v664, 0.5
        %v747 = vmul.f32 %v666, 0.5
        %v748 = vmul.f32 %v670, 0.5
        %v749 = vmul.f32 %v672, 0.5
        %v750 = vmul.f32 %v676, 0.5
        %v751 = vmul.f32 %v678, 0.5
        %v752 = vmul.f32 %v682, 0.5
        %v753 = vmul.f32 %v684, 0.5
        %v754 = vmul.f32 %v688, 0.5
        %v755 = vmul.f32 %v690, 0.5
        %v756 = vmul.f32 %v502, 0.70710677
        %v757 = vmul.f32 %v504, 0.70710677
        %v758 = vmul.f32 %v508, 0.70710677
        %v759 = vmul.f32 %v510, 0.70710677
        %v760 = vmul.f32 %v514, 0.70710677
        %v761 = vmul.f32 %v516, 0.70710677
        %v762 = vmul.f32 %v520, 0.70710677
        %v763 = vmul.f32 %v522, 0.70710677
        %v764 = vmul.f32 %v526, 0.70710677
        %v765 = vmul.f32 %v528, 0.70710677
        %v766 = vmul.f32 %v532, 0.70710677
        %v767 = vmul.f32 %v534, 0.70710677
        %v768 = vmul.f32 %v538, 0.70710677
        %v769 = vmul.f32 %v540, 0.70710677
        %v770 = vmul.f32 %v544, 0.70710677
        %v771 = vmul.f32 %v546, 0.70710677
        %v772 = vmul.f32 %v550, 0.70710677
        %v773 = vmul.f32 %v552, 0.70710677
        %v774 = vmul.f32 %v556, 0.70710677
        %v775 = vmul.f32 %v558, 0.70710677
        %v776 = vmul.f32 %v562, 0.70710677
        %v777 = vmul.f32 %v564, 0.70710677
        %v778 = vmul.f32 %v568, 0.70710677
        %v779 = vmul.f32 %v570, 0.70710677
        %v780 = vmul.f32 %v574, 0.70710677
        %v781 = vmul.f32 %v576, 0.70710677
        %v782 = vmul.f32 %v580, 0.70710677
        %v783 = vmul.f32 %v582, 0.70710677
        %v784 = vmul.f32 %v586, 0.70710677
        %v785 = vmul.f32 %v588, 0.70710677
        %v786 = vmul.f32 %v592, 0.70710677
        %v787 = vmul.f32 %v594, 0.70710677
        %v788 = vmul.f32 %v598, 0.70710677
        %v789 = vmul.f32 %v600, 0.70710677
        %v790 = vmul.f32 %v604, 0.70710677
        %v791 = vmul.f32 %v606, 0.70710677
        %v792 = vmul.f32 %v610, 0.70710677
        %v793 = vmul.f32 %v612, 0.70710677
        %v794 = vmul.f32 %v616, 0.70710677
        %v795 = vmul.f32 %v618, 0.70710677
        %v796 = vmul.f32 %v622, 0.70710677
        %v797 = vmul.f32 %v624, 0.70710677
        %v798 = vmul.f32 %v628, 0.70710677
        %v799 = vmul.f32 %v630, 0.70710677
        %v800 = vmul.f32 %v634, 0.70710677
        %v801 = vmul.f32 %v636, 0.70710677
        %v802 = vmul.f32 %v640, 0.70710677
        %v803 = vmul.f32 %v642, 0.70710677
        %v804 = vmul.f32 %v646, 0.70710677
        %v805 = vmul.f32 %v648, 0.70710677
        %v806 = vmul.f32 %v652, 0.70710677
        %v807 = vmul.f32 %v654, 0.70710677
        %v808 = vmul.f32 %v658, 0.70710677
        %v809 = vmul.f32 %v660, 0.70710677
        %v810 = vmul.f32 %v664, 0.70710677
        %v811 = vmul.f32 %v666, 0.70710677
        %v812 = vmul.f32 %v670, 0.70710677
        %v813 = vmul.f32 %v672, 0.70710677
        %v814 = vmul.f32 %v676, 0.70710677
        %v815 = vmul.f32 %v678, 0.70710677
        %v816 = vmul.f32 %v682, 0.70710677
        %v817 = vmul.f32 %v684, 0.70710677
        %v818 = vmul.f32 %v688, 0.70710677
        %v819 = vmul.f32 %v690, 0.70710677
        %v820 = vand.u32 2147483647, %v756
        %v821 = vand.u32 2147483647, %v757
        %v822 = vand.u32 2147483647, %v758
        %v823 = vand.u32 2147483647, %v759
        %v824 = vand.u32 2147483647, %v760
        %v825 = vand.u32 2147483647, %v761
        %v826 = vand.u32 2147483647, %v762
        %v827 = vand.u32 2147483647, %v763
        %v828 = vand.u32 2147483647, %v764
        %v829 = vand.u32 2147483647, %v765
        %v830 = vand.u32 2147483647, %v766
        %v831 = vand.u32 2147483647, %v767
        %v832 = vand.u32 2147483647, %v768
        %v833 = vand.u32 2147483647, %v769
        %v834 = vand.u32 2147483647, %v770
        %v835 = vand.u32 2147483647, %v771
        %v836 = vand.u32 2147483647, %v772
        %v837 = vand.u32 2147483647, %v773
        %v838 = vand.u32 2147483647, %v774
        %v839 = vand.u32 2147483647, %v775
        %v840 = vand.u32 2147483647, %v776
        %v841 = vand.u32 2147483647, %v777
        %v842 = vand.u32 2147483647, %v778
        %v843 = vand.u32 2147483647, %v779
        %v844 = vand.u32 2147483647, %v780
        %v845 = vand.u32 2147483647, %v781
        %v846 = vand.u32 2147483647, %v782
        %v847 = vand.u32 2147483647, %v783
        %v848 = vand.u32 2147483647, %v784
        %v849 = vand.u32 2147483647, %v785
        %v850 = vand.u32 2147483647, %v786
        %v851 = vand.u32 2147483647, %v787
        %v852 = vand.u32 2147483647, %v788
        %v853 = vand.u32 2147483647, %v789
        %v854 = vand.u32 2147483647, %v790
        %v855 = vand.u32 2147483647, %v791
        %v856 = vand.u32 2147483647, %v792
        %v857 = vand.u32 2147483647, %v793
        %v858 = vand.u32 2147483647, %v794
        %v859 = vand.u32 2147483647, %v795
        %v860 = vand.u32 2147483647, %v796
        %v861 = vand.u32 2147483647, %v797
        %v862 = vand.u32 2147483647, %v798
        %v863 = vand.u32 2147483647, %v799
        %v864 = vand.u32 2147483647, %v800
        %v865 = vand.u32 2147483647, %v801
        %v866 = vand.u32 2147483647, %v802
        %v867 = vand.u32 2147483647, %v803
        %v868 = vand.u32 2147483647, %v804
        %v869 = vand.u32 2147483647, %v805
        %v870 = vand.u32 2147483647, %v806
        %v871 = vand.u32 2147483647, %v807
        %v872 = vand.u32 2147483647, %v808
        %v873 = vand.u32 2147483647, %v809
        %v874 = vand.u32 2147483647, %v810
        %v875 = vand.u32 2147483647, %v811
        %v876 = vand.u32 2147483647, %v812
        %v877 = vand.u32 2147483647, %v813
        %v878 = vand.u32 2147483647, %v814
        %v879 = vand.u32 2147483647, %v815
        %v880 = vand.u32 2147483647, %v816
        %v881 = vand.u32 2147483647, %v817
        %v882 = vand.u32 2147483647, %v818
        %v883 = vand.u32 2147483647, %v819
        %v884 = vmul.f32 %v820, 0.3275911
        %v885 = vmul.f32 %v821, 0.3275911
        %v886 = vmul.f32 %v822, 0.3275911
        %v887 = vmul.f32 %v823, 0.3275911
        %v888 = vmul.f32 %v824, 0.3275911
        %v889 = vmul.f32 %v825, 0.3275911
        %v890 = vmul.f32 %v826, 0.3275911
        %v891 = vmul.f32 %v827, 0.3275911
        %v892 = vmul.f32 %v828, 0.3275911
        %v893 = vmul.f32 %v829, 0.3275911
        %v894 = vmul.f32 %v830, 0.3275911
        %v895 = vmul.f32 %v831, 0.3275911
        %v896 = vmul.f32 %v832, 0.3275911
        %v897 = vmul.f32 %v833, 0.3275911
        %v898 = vmul.f32 %v834, 0.3275911
        %v899 = vmul.f32 %v835, 0.3275911
        %v900 = vmul.f32 %v836, 0.3275911
        %v901 = vmul.f32 %v837, 0.3275911
        %v902 = vmul.f32 %v838, 0.3275911
        %v903 = vmul.f32 %v839, 0.3275911
        %v904 = vmul.f32 %v840, 0.3275911
        %v905 = vmul.f32 %v841, 0.3275911
        %v906 = vmul.f32 %v842, 0.3275911
        %v907 = vmul.f32 %v843, 0.3275911
        %v908 = vmul.f32 %v844, 0.3275911
        %v909 = vmul.f32 %v845, 0.3275911
        %v910 = vmul.f32 %v846, 0.3275911
        %v911 = vmul.f32 %v847, 0.3275911
        %v912 = vmul.f32 %v848, 0.3275911
        %v913 = vmul.f32 %v849, 0.3275911
        %v914 = vmul.f32 %v850, 0.3275911
        %v915 = vmul.f32 %v851, 0.3275911
        %v916 = vmul.f32 %v852, 0.3275911
        %v917 = vmul.f32 %v853, 0.3275911
        %v918 = vmul.f32 %v854, 0.3275911
        %v919 = vmul.f32 %v855, 0.3275911
        %v920 = vmul.f32 %v856, 0.3275911
        %v921 = vmul.f32 %v857, 0.3275911
        %v922 = vmul.f32 %v858, 0.3275911
        %v923 = vmul.f32 %v859, 0.3275911
        %v924 = vmul.f32 %v860, 0.3275911
        %v925 = vmul.f32 %v861, 0.3275911
        %v926 = vmul.f32 %v862, 0.3275911
        %v927 = vmul.f32 %v863, 0.3275911
        %v928 = vmul.f32 %v864, 0.3275911
        %v929 = vmul.f32 %v865, 0.3275911
        %v930 = vmul.f32 %v866, 0.3275911
        %v931 = vmul.f32 %v867, 0.3275911
        %v932 = vmul.f32 %v868, 0.3275911
        %v933 = vmul.f32 %v869, 0.3275911
        %v934 = vmul.f32 %v870, 0.3275911
        %v935 = vmul.f32 %v871, 0.3275911
        %v936 = vmul.f32 %v872, 0.3275911
        %v937 = vmul.f32 %v873, 0.3275911
        %v938 = vmul.f32 %v874, 0.3275911
        %v939 = vmul.f32 %v875, 0.3275911
        %v940 = vmul.f32 %v876, 0.3275911
        %v941 = vmul.f32 %v877, 0.3275911
        %v942 = vmul.f32 %v878, 0.3275911
        %v943 = vmul.f32 %v879, 0.3275911
        %v944 = vmul.f32 %v880, 0.3275911
        %v945 = vmul.f32 %v881, 0.3275911
        %v946 = vmul.f32 %v882, 0.3275911
        %v947 = vmul.f32 %v883, 0.3275911
        %v948 = vadd.f32 %v884, 1.0
        %v949 = vadd.f32 %v885, 1.0
        %v950 = vadd.f32 %v886, 1.0
        %v951 = vadd.f32 %v887, 1.0
        %v952 = vadd.f32 %v888, 1.0
        %v953 = vadd.f32 %v889, 1.0
        %v954 = vadd.f32 %v890, 1.0
        %v955 = vadd.f32 %v891, 1.0
        %v956 = vadd.f32 %v892, 1.0
        %v957 = vadd.f32 %v893, 1.0
        %v958 = vadd.f32 %v894, 1.0
        %v959 = vadd.f32 %v895, 1.0
        %v960 = vadd.f32 %v896, 1.0
        %v961 = vadd.f32 %v897, 1.0
        %v962 = vadd.f32 %v898, 1.0
        %v963 = vadd.f32 %v899, 1.0
        %v964 = vadd.f32 %v900, 1.0
        %v965 = vadd.f32 %v901, 1.0
        %v966 = vadd.f32 %v902, 1.0
        %v967 = vadd.f32 %v903, 1.0
        %v968 = vadd.f32 %v904, 1.0
        %v969 = vadd.f32 %v905, 1.0
        %v970 = vadd.f32 %v906, 1.0
        %v971 = vadd.f32 %v907, 1.0
        %v972 = vadd.f32 %v908, 1.0
        %v973 = vadd.f32 %v909, 1.0
        %v974 = vadd.f32 %v910, 1.0
        %v975 = vadd.f32 %v911, 1.0
        %v976 = vadd.f32 %v912, 1.0
        %v977 = vadd.f32 %v913, 1.0
        %v978 = vadd.f32 %v914, 1.0
        %v979 = vadd.f32 %v915, 1.0
        %v980 = vadd.f32 %v916, 1.0
        %v981 = vadd.f32 %v917, 1.0
        %v982 = vadd.f32 %v918, 1.0
        %v983 = vadd.f32 %v919, 1.0
        %v984 = vadd.f32 %v920, 1.0
        %v985 = vadd.f32 %v921, 1.0
        %v986 = vadd.f32 %v922, 1.0
        %v987 = vadd.f32 %v923, 1.0
        %v988 = vadd.f32 %v924, 1.0
        %v989 = vadd.f32 %v925, 1.0
        %v990 = vadd.f32 %v926, 1.0
        %v991 = vadd.f32 %v927, 1.0
        %v992 = vadd.f32 %v928, 1.0
        %v993 = vadd.f32 %v929, 1.0
        %v994 = vadd.f32 %v930, 1.0
        %v995 = vadd.f32 %v931, 1.0
        %v996 = vadd.f32 %v932, 1.0
        %v997 = vadd.f32 %v933, 1.0
        %v998 = vadd.f32 %v934, 1.0
        %v999 = vadd.f32 %v935, 1.0
        %v1000 = vadd.f32 %v936, 1.0
        %v1001 = vadd.f32 %v937, 1.0
        %v1002 = vadd.f32 %v938, 1.0
        %v1003 = vadd.f32 %v939, 1.0
        %v1004 = vadd.f32 %v940, 1.0
        %v1005 = vadd.f32 %v941, 1.0
        %v1006 = vadd.f32 %v942, 1.0
        %v1007 = vadd.f32 %v943, 1.0
        %v1008 = vadd.f32 %v944, 1.0
        %v1009 = vadd.f32 %v945, 1.0
        %v1010 = vadd.f32 %v946, 1.0
        %v1011 = vadd.f32 %v947, 1.0
        %v1012 = vrcp.pop %v948
        %v1013 = vmul.f32 1.0, %v1012
        %v1014 = vrcp.pop %v949
        %v1015 = vmul.f32 1.0, %v1014
        %v1016 = vrcp.pop %v950
        %v1017 = vmul.f32 1.0, %v1016
        %v1018 = vrcp.pop %v951
        %v1019 = vmul.f32 1.0, %v1018
        %v1020 = vrcp.pop %v952
        %v1021 = vmul.f32 1.0, %v1020
        %v1022 = vrcp.pop %v953
        %v1023 = vmul.f32 1.0, %v1022
        %v1024 = vrcp.pop %v954
        %v1025 = vmul.f32 1.0, %v1024
        %v1026 = vrcp.pop %v955
        %v1027 = vmul.f32 1.0, %v1026
        %v1028 = vrcp.pop %v956
        %v1029 = vmul.f32 1.0, %v1028
        %v1030 = vrcp.pop %v957
        %v1031 = vmul.f32 1.0, %v1030
        %v1032 = vrcp.pop %v958
        %v1033 = vmul.f32 1.0, %v1032
        %v1034 = vrcp.pop %v959
        %v1035 = vmul.f32 1.0, %v1034
        %v1036 = vrcp.pop %v960
        %v1037 = vmul.f32 1.0, %v1036
        %v1038 = vrcp.pop %v961
        %v1039 = vmul.f32 1.0, %v1038
        %v1040 = vrcp.pop %v962
        %v1041 = vmul.f32 1.0, %v1040
        %v1042 = vrcp.pop %v963
        %v1043 = vmul.f32 1.0, %v1042
        %v1044 = vrcp.pop %v964
        %v1045 = vmul.f32 1.0, %v1044
        %v1046 = vrcp.pop %v965
        %v1047 = vmul.f32 1.0, %v1046
        %v1048 = vrcp.pop %v966
        %v1049 = vmul.f32 1.0, %v1048
        %v1050 = vrcp.pop %v967
        %v1051 = vmul.f32 1.0, %v1050
        %v1052 = vrcp.pop %v968
        %v1053 = vmul.f32 1.0, %v1052
        %v1054 = vrcp.pop %v969
        %v1055 = vmul.f32 1.0, %v1054
        %v1056 = vrcp.pop %v970
        %v1057 = vmul.f32 1.0, %v1056
        %v1058 = vrcp.pop %v971
        %v1059 = vmul.f32 1.0, %v1058
        %v1060 = vrcp.pop %v972
        %v1061 = vmul.f32 1.0, %v1060
        %v1062 = vrcp.pop %v973
        %v1063 = vmul.f32 1.0, %v1062
        %v1064 = vrcp.pop %v974
        %v1065 = vmul.f32 1.0, %v1064
        %v1066 = vrcp.pop %v975
        %v1067 = vmul.f32 1.0, %v1066
        %v1068 = vrcp.pop %v976
        %v1069 = vmul.f32 1.0, %v1068
        %v1070 = vrcp.pop %v977
        %v1071 = vmul.f32 1.0, %v1070
        %v1072 = vrcp.pop %v978
        %v1073 = vmul.f32 1.0, %v1072
        %v1074 = vrcp.pop %v979
        %v1075 = vmul.f32 1.0, %v1074
        %v1076 = vrcp.pop %v980
        %v1077 = vmul.f32 1.0, %v1076
        %v1078 = vrcp.pop %v981
        %v1079 = vmul.f32 1.0, %v1078
        %v1080 = vrcp.pop %v982
        %v1081 = vmul.f32 1.0, %v1080
        %v1082 = vrcp.pop %v983
        %v1083 = vmul.f32 1.0, %v1082
        %v1084 = vrcp.pop %v984
        %v1085 = vmul.f32 1.0, %v1084
        %v1086 = vrcp.pop %v985
        %v1087 = vmul.f32 1.0, %v1086
        %v1088 = vrcp.pop %v986
        %v1089 = vmul.f32 1.0, %v1088
        %v1090 = vrcp.pop %v987
        %v1091 = vmul.f32 1.0, %v1090
        %v1092 = vrcp.pop %v988
        %v1093 = vmul.f32 1.0, %v1092
        %v1094 = vrcp.pop %v989
        %v1095 = vmul.f32 1.0, %v1094
        %v1096 = vrcp.pop %v990
        %v1097 = vmul.f32 1.0, %v1096
        %v1098 = vrcp.pop %v991
        %v1099 = vmul.f32 1.0, %v1098
        %v1100 = vrcp.pop %v992
        %v1101 = vmul.f32 1.0, %v1100
        %v1102 = vrcp.pop %v993
        %v1103 = vmul.f32 1.0, %v1102
        %v1104 = vrcp.pop %v994
        %v1105 = vmul.f32 1.0, %v1104
        %v1106 = vrcp.pop %v995
        %v1107 = vmul.f32 1.0, %v1106
        %v1108 = vrcp.pop %v996
        %v1109 = vmul.f32 1.0, %v1108
        %v1110 = vrcp.pop %v997
        %v1111 = vmul.f32 1.0, %v1110
        %v1112 = vrcp.pop %v998
        %v1113 = vmul.f32 1.0, %v1112
        %v1114 = vrcp.pop %v999
        %v1115 = vmul.f32 1.0, %v1114
        %v1116 = vrcp.pop %v1000
        %v1117 = vmul.f32 1.0, %v1116
        %v1118 = vrcp.pop %v1001
        %v1119 = vmul.f32 1.0, %v1118
        %v1120 = vrcp.pop %v1002
        %v1121 = vmul.f32 1.0, %v1120
        %v1122 = vrcp.pop %v1003
        %v1123 = vmul.f32 1.0, %v1122
        %v1124 = vrcp.pop %v1004
        %v1125 = vmul.f32 1.0, %v1124
        %v1126 = vrcp.pop %v1005
        %v1127 = vmul.f32 1.0, %v1126
        %v1128 = vrcp.pop %v1006
        %v1129 = vmul.f32 1.0, %v1128
        %v1130 = vrcp.pop %v1007
        %v1131 = vmul.f32 1.0, %v1130
        %v1132 = vrcp.pop %v1008
        %v1133 = vmul.f32 1.0, %v1132
        %v1134 = vrcp.pop %v1009
        %v1135 = vmul.f32 1.0, %v1134
        %v1136 = vrcp.pop %v1010
        %v1137 = vmul.f32 1.0, %v1136
        %v1138 = vrcp.pop %v1011
        %v1139 = vmul.f32 1.0, %v1138
        %v1140 = vmul.f32 %v1013, 1.0614054
        %v1141 = vmul.f32 %v1015, 1.0614054
        %v1142 = vmul.f32 %v1017, 1.0614054
        %v1143 = vmul.f32 %v1019, 1.0614054
        %v1144 = vmul.f32 %v1021, 1.0614054
        %v1145 = vmul.f32 %v1023, 1.0614054
        %v1146 = vmul.f32 %v1025, 1.0614054
        %v1147 = vmul.f32 %v1027, 1.0614054
        %v1148 = vmul.f32 %v1029, 1.0614054
        %v1149 = vmul.f32 %v1031, 1.0614054
        %v1150 = vmul.f32 %v1033, 1.0614054
        %v1151 = vmul.f32 %v1035, 1.0614054
        %v1152 = vmul.f32 %v1037, 1.0614054
        %v1153 = vmul.f32 %v1039, 1.0614054
        %v1154 = vmul.f32 %v1041, 1.0614054
        %v1155 = vmul.f32 %v1043, 1.0614054
        %v1156 = vmul.f32 %v1045, 1.0614054
        %v1157 = vmul.f32 %v1047, 1.0614054
        %v1158 = vmul.f32 %v1049, 1.0614054
        %v1159 = vmul.f32 %v1051, 1.0614054
        %v1160 = vmul.f32 %v1053, 1.0614054
        %v1161 = vmul.f32 %v1055, 1.0614054
        %v1162 = vmul.f32 %v1057, 1.0614054
        %v1163 = vmul.f32 %v1059, 1.0614054
        %v1164 = vmul.f32 %v1061, 1.0614054
        %v1165 = vmul.f32 %v1063, 1.0614054
        %v1166 = vmul.f32 %v1065, 1.0614054
        %v1167 = vmul.f32 %v1067, 1.0614054
        %v1168 = vmul.f32 %v1069, 1.0614054
        %v1169 = vmul.f32 %v1071, 1.0614054
        %v1170 = vmul.f32 %v1073, 1.0614054
        %v1171 = vmul.f32 %v1075, 1.0614054
        %v1172 = vmul.f32 %v1077, 1.0614054
        %v1173 = vmul.f32 %v1079, 1.0614054
        %v1174 = vmul.f32 %v1081, 1.0614054
        %v1175 = vmul.f32 %v1083, 1.0614054
        %v1176 = vmul.f32 %v1085, 1.0614054
        %v1177 = vmul.f32 %v1087, 1.0614054
        %v1178 = vmul.f32 %v1089, 1.0614054
        %v1179 = vmul.f32 %v1091, 1.0614054
        %v1180 = vmul.f32 %v1093, 1.0614054
        %v1181 = vmul.f32 %v1095, 1.0614054
        %v1182 = vmul.f32 %v1097, 1.0614054
        %v1183 = vmul.f32 %v1099, 1.0614054
        %v1184 = vmul.f32 %v1101, 1.0614054
        %v1185 = vmul.f32 %v1103, 1.0614054
        %v1186 = vmul.f32 %v1105, 1.0614054
        %v1187 = vmul.f32 %v1107, 1.0614054
        %v1188 = vmul.f32 %v1109, 1.0614054
        %v1189 = vmul.f32 %v1111, 1.0614054
        %v1190 = vmul.f32 %v1113, 1.0614054
        %v1191 = vmul.f32 %v1115, 1.0614054
        %v1192 = vmul.f32 %v1117, 1.0614054
        %v1193 = vmul.f32 %v1119, 1.0614054
        %v1194 = vmul.f32 %v1121, 1.0614054
        %v1195 = vmul.f32 %v1123, 1.0614054
        %v1196 = vmul.f32 %v1125, 1.0614054
        %v1197 = vmul.f32 %v1127, 1.0614054
        %v1198 = vmul.f32 %v1129, 1.0614054
        %v1199 = vmul.f32 %v1131, 1.0614054
        %v1200 = vmul.f32 %v1133, 1.0614054
        %v1201 = vmul.f32 %v1135, 1.0614054
        %v1202 = vmul.f32 %v1137, 1.0614054
        %v1203 = vmul.f32 %v1139, 1.0614054
        %v1204 = vadd.f32 %v1140, -1.4531521
        %v1205 = vadd.f32 %v1141, -1.4531521
        %v1206 = vadd.f32 %v1142, -1.4531521
        %v1207 = vadd.f32 %v1143, -1.4531521
        %v1208 = vadd.f32 %v1144, -1.4531521
        %v1209 = vadd.f32 %v1145, -1.4531521
        %v1210 = vadd.f32 %v1146, -1.4531521
        %v1211 = vadd.f32 %v1147, -1.4531521
        %v1212 = vadd.f32 %v1148, -1.4531521
        %v1213 = vadd.f32 %v1149, -1.4531521
        %v1214 = vadd.f32 %v1150, -1.4531521
        %v1215 = vadd.f32 %v1151, -1.4531521
        %v1216 = vadd.f32 %v1152, -1.4531521
        %v1217 = vadd.f32 %v1153, -1.4531521
        %v1218 = vadd.f32 %v1154, -1.4531521
        %v1219 = vadd.f32 %v1155, -1.4531521
        %v1220 = vadd.f32 %v1156, -1.4531521
        %v1221 = vadd.f32 %v1157, -1.4531521
        %v1222 = vadd.f32 %v1158, -1.4531521
        %v1223 = vadd.f32 %v1159, -1.4531521
        %v1224 = vadd.f32 %v1160, -1.4531521
        %v1225 = vadd.f32 %v1161, -1.4531521
        %v1226 = vadd.f32 %v1162, -1.4531521
        %v1227 = vadd.f32 %v1163, -1.4531521
        %v1228 = vadd.f32 %v1164, -1.4531521
        %v1229 = vadd.f32 %v1165, -1.4531521
        %v1230 = vadd.f32 %v1166, -1.4531521
        %v1231 = vadd.f32 %v1167, -1.4531521
        %v1232 = vadd.f32 %v1168, -1.4531521
        %v1233 = vadd.f32 %v1169, -1.4531521
        %v1234 = vadd.f32 %v1170, -1.4531521
        %v1235 = vadd.f32 %v1171, -1.4531521
        %v1236 = vadd.f32 %v1172, -1.4531521
        %v1237 = vadd.f32 %v1173, -1.4531521
        %v1238 = vadd.f32 %v1174, -1.4531521
        %v1239 = vadd.f32 %v1175, -1.4531521
        %v1240 = vadd.f32 %v1176, -1.4531521
        %v1241 = vadd.f32 %v1177, -1.4531521
        %v1242 = vadd.f32 %v1178, -1.4531521
        %v1243 = vadd.f32 %v1179, -1.4531521
        %v1244 = vadd.f32 %v1180, -1.4531521
        %v1245 = vadd.f32 %v1181, -1.4531521
        %v1246 = vadd.f32 %v1182, -1.4531521
        %v1247 = vadd.f32 %v1183, -1.4531521
        %v1248 = vadd.f32 %v1184, -1.4531521
        %v1249 = vadd.f32 %v1185, -1.4531521
        %v1250 = vadd.f32 %v1186, -1.4531521
        %v1251 = vadd.f32 %v1187, -1.4531521
        %v1252 = vadd.f32 %v1188, -1.4531521
        %v1253 = vadd.f32 %v1189, -1.4531521
        %v1254 = vadd.f32 %v1190, -1.4531521
        %v1255 = vadd.f32 %v1191, -1.4531521
        %v1256 = vadd.f32 %v1192, -1.4531521
        %v1257 = vadd.f32 %v1193, -1.4531521
        %v1258 = vadd.f32 %v1194, -1.4531521
        %v1259 = vadd.f32 %v1195, -1.4531521
        %v1260 = vadd.f32 %v1196, -1.4531521
        %v1261 = vadd.f32 %v1197, -1.4531521
        %v1262 = vadd.f32 %v1198, -1.4531521
        %v1263 = vadd.f32 %v1199, -1.4531521
        %v1264 = vadd.f32 %v1200, -1.4531521
        %v1265 = vadd.f32 %v1201, -1.4531521
        %v1266 = vadd.f32 %v1202, -1.4531521
        %v1267 = vadd.f32 %v1203, -1.4531521
        %v1268 = vmul.f32 %v1013, %v1204
        %v1269 = vmul.f32 %v1015, %v1205
        %v1270 = vmul.f32 %v1017, %v1206
        %v1271 = vmul.f32 %v1019, %v1207
        %v1272 = vmul.f32 %v1021, %v1208
        %v1273 = vmul.f32 %v1023, %v1209
        %v1274 = vmul.f32 %v1025, %v1210
        %v1275 = vmul.f32 %v1027, %v1211
        %v1276 = vmul.f32 %v1029, %v1212
        %v1277 = vmul.f32 %v1031, %v1213
        %v1278 = vmul.f32 %v1033, %v1214
        %v1279 = vmul.f32 %v1035, %v1215
        %v1280 = vmul.f32 %v1037, %v1216
        %v1281 = vmul.f32 %v1039, %v1217
        %v1282 = vmul.f32 %v1041, %v1218
        %v1283 = vmul.f32 %v1043, %v1219
        %v1284 = vmul.f32 %v1045, %v1220
        %v1285 = vmul.f32 %v1047, %v1221
        %v1286 = vmul.f32 %v1049, %v1222
        %v1287 = vmul.f32 %v1051, %v1223
        %v1288 = vmul.f32 %v1053, %v1224
        %v1289 = vmul.f32 %v1055, %v1225
        %v1290 = vmul.f32 %v1057, %v1226
        %v1291 = vmul.f32 %v1059, %v1227
        %v1292 = vmul.f32 %v1061, %v1228
        %v1293 = vmul.f32 %v1063, %v1229
        %v1294 = vmul.f32 %v1065, %v1230
        %v1295 = vmul.f32 %v1067, %v1231
        %v1296 = vmul.f32 %v1069, %v1232
        %v1297 = vmul.f32 %v1071, %v1233
        %v1298 = vmul.f32 %v1073, %v1234
        %v1299 = vmul.f32 %v1075, %v1235
        %v1300 = vmul.f32 %v1077, %v1236
        %v1301 = vmul.f32 %v1079, %v1237
        %v1302 = vmul.f32 %v1081, %v1238
        %v1303 = vmul.f32 %v1083, %v1239
        %v1304 = vmul.f32 %v1085, %v1240
        %v1305 = vmul.f32 %v1087, %v1241
        %v1306 = vmul.f32 %v1089, %v1242
        %v1307 = vmul.f32 %v1091, %v1243
        %v1308 = vmul.f32 %v1093, %v1244
        %v1309 = vmul.f32 %v1095, %v1245
        %v1310 = vmul.f32 %v1097, %v1246
        %v1311 = vmul.f32 %v1099, %v1247
        %v1312 = vmul.f32 %v1101, %v1248
        %v1313 = vmul.f32 %v1103, %v1249
        %v1314 = vmul.f32 %v1105, %v1250
        %v1315 = vmul.f32 %v1107, %v1251
        %v1316 = vmul.f32 %v1109, %v1252
        %v1317 = vmul.f32 %v1111, %v1253
        %v1318 = vmul.f32 %v1113, %v1254
        %v1319 = vmul.f32 %v1115, %v1255
        %v1320 = vmul.f32 %v1117, %v1256
        %v1321 = vmul.f32 %v1119, %v1257
        %v1322 = vmul.f32 %v1121, %v1258
        %v1323 = vmul.f32 %v1123, %v1259
        %v1324 = vmul.f32 %v1125, %v1260
        %v1325 = vmul.f32 %v1127, %v1261
        %v1326 = vmul.f32 %v1129, %v1262
        %v1327 = vmul.f32 %v1131, %v1263
        %v1328 = vmul.f32 %v1133, %v1264
        %v1329 = vmul.f32 %v1135, %v1265
        %v1330 = vmul.f32 %v1137, %v1266
        %v1331 = vmul.f32 %v1139, %v1267
        %v1332 = vadd.f32 %v1268, 1.4214138
        %v1333 = vadd.f32 %v1269, 1.4214138
        %v1334 = vadd.f32 %v1270, 1.4214138
        %v1335 = vadd.f32 %v1271, 1.4214138
        %v1336 = vadd.f32 %v1272, 1.4214138
        %v1337 = vadd.f32 %v1273, 1.4214138
        %v1338 = vadd.f32 %v1274, 1.4214138
        %v1339 = vadd.f32 %v1275, 1.4214138
        %v1340 = vadd.f32 %v1276, 1.4214138
        %v1341 = vadd.f32 %v1277, 1.4214138
        %v1342 = vadd.f32 %v1278, 1.4214138
        %v1343 = vadd.f32 %v1279, 1.4214138
        %v1344 = vadd.f32 %v1280, 1.4214138
        %v1345 = vadd.f32 %v1281, 1.4214138
        %v1346 = vadd.f32 %v1282, 1.4214138
        %v1347 = vadd.f32 %v1283, 1.4214138
        %v1348 = vadd.f32 %v1284, 1.4214138
        %v1349 = vadd.f32 %v1285, 1.4214138
        %v1350 = vadd.f32 %v1286, 1.4214138
        %v1351 = vadd.f32 %v1287, 1.4214138
        %v1352 = vadd.f32 %v1288, 1.4214138
        %v1353 = vadd.f32 %v1289, 1.4214138
        %v1354 = vadd.f32 %v1290, 1.4214138
        %v1355 = vadd.f32 %v1291, 1.4214138
        %v1356 = vadd.f32 %v1292, 1.4214138
        %v1357 = vadd.f32 %v1293, 1.4214138
        %v1358 = vadd.f32 %v1294, 1.4214138
        %v1359 = vadd.f32 %v1295, 1.4214138
        %v1360 = vadd.f32 %v1296, 1.4214138
        %v1361 = vadd.f32 %v1297, 1.4214138
        %v1362 = vadd.f32 %v1298, 1.4214138
        %v1363 = vadd.f32 %v1299, 1.4214138
        %v1364 = vadd.f32 %v1300, 1.4214138
        %v1365 = vadd.f32 %v1301, 1.4214138
        %v1366 = vadd.f32 %v1302, 1.4214138
        %v1367 = vadd.f32 %v1303, 1.4214138
        %v1368 = vadd.f32 %v1304, 1.4214138
        %v1369 = vadd.f32 %v1305, 1.4214138
        %v1370 = vadd.f32 %v1306, 1.4214138
        %v1371 = vadd.f32 %v1307, 1.4214138
        %v1372 = vadd.f32 %v1308, 1.4214138
        %v1373 = vadd.f32 %v1309, 1.4214138
        %v1374 = vadd.f32 %v1310, 1.4214138
        %v1375 = vadd.f32 %v1311, 1.4214138
        %v1376 = vadd.f32 %v1312, 1.4214138
        %v1377 = vadd.f32 %v1313, 1.4214138
        %v1378 = vadd.f32 %v1314, 1.4214138
        %v1379 = vadd.f32 %v1315, 1.4214138
        %v1380 = vadd.f32 %v1316, 1.4214138
        %v1381 = vadd.f32 %v1317, 1.4214138
        %v1382 = vadd.f32 %v1318, 1.4214138
        %v1383 = vadd.f32 %v1319, 1.4214138
        %v1384 = vadd.f32 %v1320, 1.4214138
        %v1385 = vadd.f32 %v1321, 1.4214138
        %v1386 = vadd.f32 %v1322, 1.4214138
        %v1387 = vadd.f32 %v1323, 1.4214138
        %v1388 = vadd.f32 %v1324, 1.4214138
        %v1389 = vadd.f32 %v1325, 1.4214138
        %v1390 = vadd.f32 %v1326, 1.4214138
        %v1391 = vadd.f32 %v1327, 1.4214138
        %v1392 = vadd.f32 %v1328, 1.4214138
        %v1393 = vadd.f32 %v1329, 1.4214138
        %v1394 = vadd.f32 %v1330, 1.4214138
        %v1395 = vadd.f32 %v1331, 1.4214138
        %v1396 = vmul.f32 %v1013, %v1332
        %v1397 = vmul.f32 %v1015, %v1333
        %v1398 = vmul.f32 %v1017, %v1334
        %v1399 = vmul.f32 %v1019, %v1335
        %v1400 = vmul.f32 %v1021, %v1336
        %v1401 = vmul.f32 %v1023, %v1337
        %v1402 = vmul.f32 %v1025, %v1338
        %v1403 = vmul.f32 %v1027, %v1339
        %v1404 = vmul.f32 %v1029, %v1340
        %v1405 = vmul.f32 %v1031, %v1341
        %v1406 = vmul.f32 %v1033, %v1342
        %v1407 = vmul.f32 %v1035, %v1343
        %v1408 = vmul.f32 %v1037, %v1344
        %v1409 = vmul.f32 %v1039, %v1345
        %v1410 = vmul.f32 %v1041, %v1346
        %v1411 = vmul.f32 %v1043, %v1347
        %v1412 = vmul.f32 %v1045, %v1348
        %v1413 = vmul.f32 %v1047, %v1349
        %v1414 = vmul.f32 %v1049, %v1350
        %v1415 = vmul.f32 %v1051, %v1351
        %v1416 = vmul.f32 %v1053, %v1352
        %v1417 = vmul.f32 %v1055, %v1353
        %v1418 = vmul.f32 %v1057, %v1354
        %v1419 = vmul.f32 %v1059, %v1355
        %v1420 = vmul.f32 %v1061, %v1356
        %v1421 = vmul.f32 %v1063, %v1357
        %v1422 = vmul.f32 %v1065, %v1358
        %v1423 = vmul.f32 %v1067, %v1359
        %v1424 = vmul.f32 %v1069, %v1360
        %v1425 = vmul.f32 %v1071, %v1361
        %v1426 = vmul.f32 %v1073, %v1362
        %v1427 = vmul.f32 %v1075, %v1363
        %v1428 = vmul.f32 %v1077, %v1364
        %v1429 = vmul.f32 %v1079, %v1365
        %v1430 = vmul.f32 %v1081, %v1366
        %v1431 = vmul.f32 %v1083, %v1367
        %v1432 = vmul.f32 %v1085, %v1368
        %v1433 = vmul.f32 %v1087, %v1369
        %v1434 = vmul.f32 %v1089, %v1370
        %v1435 = vmul.f32 %v1091, %v1371
        %v1436 = vmul.f32 %v1093, %v1372
        %v1437 = vmul.f32 %v1095, %v1373
        %v1438 = vmul.f32 %v1097, %v1374
        %v1439 = vmul.f32 %v1099, %v1375
        %v1440 = vmul.f32 %v1101, %v1376
        %v1441 = vmul.f32 %v1103, %v1377
        %v1442 = vmul.f32 %v1105, %v1378
        %v1443 = vmul.f32 %v1107, %v1379
        %v1444 = vmul.f32 %v1109, %v1380
        %v1445 = vmul.f32 %v1111, %v1381
        %v1446 = vmul.f32 %v1113, %v1382
        %v1447 = vmul.f32 %v1115, %v1383
        %v1448 = vmul.f32 %v1117, %v1384
        %v1449 = vmul.f32 %v1119, %v1385
        %v1450 = vmul.f32 %v1121, %v1386
        %v1451 = vmul.f32 %v1123, %v1387
        %v1452 = vmul.f32 %v1125, %v1388
        %v1453 = vmul.f32 %v1127, %v1389
        %v1454 = vmul.f32 %v1129, %v1390
        %v1455 = vmul.f32 %v1131, %v1391
        %v1456 = vmul.f32 %v1133, %v1392
        %v1457 = vmul.f32 %v1135, %v1393
        %v1458 = vmul.f32 %v1137, %v1394
        %v1459 = vmul.f32 %v1139, %v1395
        %v1460 = vadd.f32 %v1396, -0.28449672
        %v1461 = vadd.f32 %v1397, -0.28449672
        %v1462 = vadd.f32 %v1398, -0.28449672
        %v1463 = vadd.f32 %v1399, -0.28449672
        %v1464 = vadd.f32 %v1400, -0.28449672
        %v1465 = vadd.f32 %v1401, -0.28449672
        %v1466 = vadd.f32 %v1402, -0.28449672
        %v1467 = vadd.f32 %v1403, -0.28449672
        %v1468 = vadd.f32 %v1404, -0.28449672
        %v1469 = vadd.f32 %v1405, -0.28449672
        %v1470 = vadd.f32 %v1406, -0.28449672
        %v1471 = vadd.f32 %v1407, -0.28449672
        %v1472 = vadd.f32 %v1408, -0.28449672
        %v1473 = vadd.f32 %v1409, -0.28449672
        %v1474 = vadd.f32 %v1410, -0.28449672
        %v1475 = vadd.f32 %v1411, -0.28449672
        %v1476 = vadd.f32 %v1412, -0.28449672
        %v1477 = vadd.f32 %v1413, -0.28449672
        %v1478 = vadd.f32 %v1414, -0.28449672
        %v1479 = vadd.f32 %v1415, -0.28449672
        %v1480 = vadd.f32 %v1416, -0.28449672
        %v1481 = vadd.f32 %v1417, -0.28449672
        %v1482 = vadd.f32 %v1418, -0.28449672
        %v1483 = vadd.f32 %v1419, -0.28449672
        %v1484 = vadd.f32 %v1420, -0.28449672
        %v1485 = vadd.f32 %v1421, -0.28449672
        %v1486 = vadd.f32 %v1422, -0.28449672
        %v1487 = vadd.f32 %v1423, -0.28449672
        %v1488 = vadd.f32 %v1424, -0.28449672
        %v1489 = vadd.f32 %v1425, -0.28449672
        %v1490 = vadd.f32 %v1426, -0.28449672
        %v1491 = vadd.f32 %v1427, -0.28449672
        %v1492 = vadd.f32 %v1428, -0.28449672
        %v1493 = vadd.f32 %v1429, -0.28449672
        %v1494 = vadd.f32 %v1430, -0.28449672
        %v1495 = vadd.f32 %v1431, -0.28449672
        %v1496 = vadd.f32 %v1432, -0.28449672
        %v1497 = vadd.f32 %v1433, -0.28449672
        %v1498 = vadd.f32 %v1434, -0.28449672
        %v1499 = vadd.f32 %v1435, -0.28449672
        %v1500 = vadd.f32 %v1436, -0.28449672
        %v1501 = vadd.f32 %v1437, -0.28449672
        %v1502 = vadd.f32 %v1438, -0.28449672
        %v1503 = vadd.f32 %v1439, -0.28449672
        %v1504 = vadd.f32 %v1440, -0.28449672
        %v1505 = vadd.f32 %v1441, -0.28449672
        %v1506 = vadd.f32 %v1442, -0.28449672
        %v1507 = vadd.f32 %v1443, -0.28449672
        %v1508 = vadd.f32 %v1444, -0.28449672
        %v1509 = vadd.f32 %v1445, -0.28449672
        %v1510 = vadd.f32 %v1446, -0.28449672
        %v1511 = vadd.f32 %v1447, -0.28449672
        %v1512 = vadd.f32 %v1448, -0.28449672
        %v1513 = vadd.f32 %v1449, -0.28449672
        %v1514 = vadd.f32 %v1450, -0.28449672
        %v1515 = vadd.f32 %v1451, -0.28449672
        %v1516 = vadd.f32 %v1452, -0.28449672
        %v1517 = vadd.f32 %v1453, -0.28449672
        %v1518 = vadd.f32 %v1454, -0.28449672
        %v1519 = vadd.f32 %v1455, -0.28449672
        %v1520 = vadd.f32 %v1456, -0.28449672
        %v1521 = vadd.f32 %v1457, -0.28449672
        %v1522 = vadd.f32 %v1458, -0.28449672
        %v1523 = vadd.f32 %v1459, -0.28449672
        %v1524 = vmul.f32 %v1013, %v1460
        %v1525 = vmul.f32 %v1015, %v1461
        %v1526 = vmul.f32 %v1017, %v1462
        %v1527 = vmul.f32 %v1019, %v1463
        %v1528 = vmul.f32 %v1021, %v1464
        %v1529 = vmul.f32 %v1023, %v1465
        %v1530 = vmul.f32 %v1025, %v1466
        %v1531 = vmul.f32 %v1027, %v1467
        %v1532 = vmul.f32 %v1029, %v1468
        %v1533 = vmul.f32 %v1031, %v1469
        %v1534 = vmul.f32 %v1033, %v1470
        %v1535 = vmul.f32 %v1035, %v1471
        %v1536 = vmul.f32 %v1037, %v1472
        %v1537 = vmul.f32 %v1039, %v1473
        %v1538 = vmul.f32 %v1041, %v1474
        %v1539 = vmul.f32 %v1043, %v1475
        %v1540 = vmul.f32 %v1045, %v1476
        %v1541 = vmul.f32 %v1047, %v1477
        %v1542 = vmul.f32 %v1049, %v1478
        %v1543 = vmul.f32 %v1051, %v1479
        %v1544 = vmul.f32 %v1053, %v1480
        %v1545 = vmul.f32 %v1055, %v1481
        %v1546 = vmul.f32 %v1057, %v1482
        %v1547 = vmul.f32 %v1059, %v1483
        %v1548 = vmul.f32 %v1061, %v1484
        %v1549 = vmul.f32 %v1063, %v1485
        %v1550 = vmul.f32 %v1065, %v1486
        %v1551 = vmul.f32 %v1067, %v1487
        %v1552 = vmul.f32 %v1069, %v1488
        %v1553 = vmul.f32 %v1071, %v1489
        %v1554 = vmul.f32 %v1073, %v1490
        %v1555 = vmul.f32 %v1075, %v1491
        %v1556 = vmul.f32 %v1077, %v1492
        %v1557 = vmul.f32 %v1079, %v1493
        %v1558 = vmul.f32 %v1081, %v1494
        %v1559 = vmul.f32 %v1083, %v1495
        %v1560 = vmul.f32 %v1085, %v1496
        %v1561 = vmul.f32 %v1087, %v1497
        %v1562 = vmul.f32 %v1089, %v1498
        %v1563 = vmul.f32 %v1091, %v1499
        %v1564 = vmul.f32 %v1093, %v1500
        %v1565 = vmul.f32 %v1095, %v1501
        %v1566 = vmul.f32 %v1097, %v1502
        %v1567 = vmul.f32 %v1099, %v1503
        %v1568 = vmul.f32 %v1101, %v1504
        %v1569 = vmul.f32 %v1103, %v1505
        %v1570 = vmul.f32 %v1105, %v1506
        %v1571 = vmul.f32 %v1107, %v1507
        %v1572 = vmul.f32 %v1109, %v1508
        %v1573 = vmul.f32 %v1111, %v1509
        %v1574 = vmul.f32 %v1113, %v1510
        %v1575 = vmul.f32 %v1115, %v1511
        %v1576 = vmul.f32 %v1117, %v1512
        %v1577 = vmul.f32 %v1119, %v1513
        %v1578 = vmul.f32 %v1121, %v1514
        %v1579 = vmul.f32 %v1123, %v1515
        %v1580 = vmul.f32 %v1125, %v1516
        %v1581 = vmul.f32 %v1127, %v1517
        %v1582 = vmul.f32 %v1129, %v1518
        %v1583 = vmul.f32 %v1131, %v1519
        %v1584 = vmul.f32 %v1133, %v1520
        %v1585 = vmul.f32 %v1135, %v1521
        %v1586 = vmul.f32 %v1137, %v1522
        %v1587 = vmul.f32 %v1139, %v1523
        %v1588 = vadd.f32 %v1524, 0.2548296
        %v1589 = vadd.f32 %v1525, 0.2548296
        %v1590 = vadd.f32 %v1526, 0.2548296
        %v1591 = vadd.f32 %v1527, 0.2548296
        %v1592 = vadd.f32 %v1528, 0.2548296
        %v1593 = vadd.f32 %v1529, 0.2548296
        %v1594 = vadd.f32 %v1530, 0.2548296
        %v1595 = vadd.f32 %v1531, 0.2548296
        %v1596 = vadd.f32 %v1532, 0.2548296
        %v1597 = vadd.f32 %v1533, 0.2548296
        %v1598 = vadd.f32 %v1534, 0.2548296
        %v1599 = vadd.f32 %v1535, 0.2548296
        %v1600 = vadd.f32 %v1536, 0.2548296
        %v1601 = vadd.f32 %v1537, 0.2548296
        %v1602 = vadd.f32 %v1538, 0.2548296
        %v1603 = vadd.f32 %v1539, 0.2548296
        %v1604 = vadd.f32 %v1540, 0.2548296
        %v1605 = vadd.f32 %v1541, 0.2548296
        %v1606 = vadd.f32 %v1542, 0.2548296
        %v1607 = vadd.f32 %v1543, 0.2548296
        %v1608 = vadd.f32 %v1544, 0.2548296
        %v1609 = vadd.f32 %v1545, 0.2548296
        %v1610 = vadd.f32 %v1546, 0.2548296
        %v1611 = vadd.f32 %v1547, 0.2548296
        %v1612 = vadd.f32 %v1548, 0.2548296
        %v1613 = vadd.f32 %v1549, 0.2548296
        %v1614 = vadd.f32 %v1550, 0.2548296
        %v1615 = vadd.f32 %v1551, 0.2548296
        %v1616 = vadd.f32 %v1552, 0.2548296
        %v1617 = vadd.f32 %v1553, 0.2548296
        %v1618 = vadd.f32 %v1554, 0.2548296
        %v1619 = vadd.f32 %v1555, 0.2548296
        %v1620 = vadd.f32 %v1556, 0.2548296
        %v1621 = vadd.f32 %v1557, 0.2548296
        %v1622 = vadd.f32 %v1558, 0.2548296
        %v1623 = vadd.f32 %v1559, 0.2548296
        %v1624 = vadd.f32 %v1560, 0.2548296
        %v1625 = vadd.f32 %v1561, 0.2548296
        %v1626 = vadd.f32 %v1562, 0.2548296
        %v1627 = vadd.f32 %v1563, 0.2548296
        %v1628 = vadd.f32 %v1564, 0.2548296
        %v1629 = vadd.f32 %v1565, 0.2548296
        %v1630 = vadd.f32 %v1566, 0.2548296
        %v1631 = vadd.f32 %v1567, 0.2548296
        %v1632 = vadd.f32 %v1568, 0.2548296
        %v1633 = vadd.f32 %v1569, 0.2548296
        %v1634 = vadd.f32 %v1570, 0.2548296
        %v1635 = vadd.f32 %v1571, 0.2548296
        %v1636 = vadd.f32 %v1572, 0.2548296
        %v1637 = vadd.f32 %v1573, 0.2548296
        %v1638 = vadd.f32 %v1574, 0.2548296
        %v1639 = vadd.f32 %v1575, 0.2548296
        %v1640 = vadd.f32 %v1576, 0.2548296
        %v1641 = vadd.f32 %v1577, 0.2548296
        %v1642 = vadd.f32 %v1578, 0.2548296
        %v1643 = vadd.f32 %v1579, 0.2548296
        %v1644 = vadd.f32 %v1580, 0.2548296
        %v1645 = vadd.f32 %v1581, 0.2548296
        %v1646 = vadd.f32 %v1582, 0.2548296
        %v1647 = vadd.f32 %v1583, 0.2548296
        %v1648 = vadd.f32 %v1584, 0.2548296
        %v1649 = vadd.f32 %v1585, 0.2548296
        %v1650 = vadd.f32 %v1586, 0.2548296
        %v1651 = vadd.f32 %v1587, 0.2548296
        %v1652 = vmul.f32 %v1013, %v1588
        %v1653 = vmul.f32 %v1015, %v1589
        %v1654 = vmul.f32 %v1017, %v1590
        %v1655 = vmul.f32 %v1019, %v1591
        %v1656 = vmul.f32 %v1021, %v1592
        %v1657 = vmul.f32 %v1023, %v1593
        %v1658 = vmul.f32 %v1025, %v1594
        %v1659 = vmul.f32 %v1027, %v1595
        %v1660 = vmul.f32 %v1029, %v1596
        %v1661 = vmul.f32 %v1031, %v1597
        %v1662 = vmul.f32 %v1033, %v1598
        %v1663 = vmul.f32 %v1035, %v1599
        %v1664 = vmul.f32 %v1037, %v1600
        %v1665 = vmul.f32 %v1039, %v1601
        %v1666 = vmul.f32 %v1041, %v1602
        %v1667 = vmul.f32 %v1043, %v1603
        %v1668 = vmul.f32 %v1045, %v1604
        %v1669 = vmul.f32 %v1047, %v1605
        %v1670 = vmul.f32 %v1049, %v1606
        %v1671 = vmul.f32 %v1051, %v1607
        %v1672 = vmul.f32 %v1053, %v1608
        %v1673 = vmul.f32 %v1055, %v1609
        %v1674 = vmul.f32 %v1057, %v1610
        %v1675 = vmul.f32 %v1059, %v1611
        %v1676 = vmul.f32 %v1061, %v1612
        %v1677 = vmul.f32 %v1063, %v1613
        %v1678 = vmul.f32 %v1065, %v1614
        %v1679 = vmul.f32 %v1067, %v1615
        %v1680 = vmul.f32 %v1069, %v1616
        %v1681 = vmul.f32 %v1071, %v1617
        %v1682 = vmul.f32 %v1073, %v1618
        %v1683 = vmul.f32 %v1075, %v1619
        %v1684 = vmul.f32 %v1077, %v1620
        %v1685 = vmul.f32 %v1079, %v1621
        %v1686 = vmul.f32 %v1081, %v1622
        %v1687 = vmul.f32 %v1083, %v1623
        %v1688 = vmul.f32 %v1085, %v1624
        %v1689 = vmul.f32 %v1087, %v1625
        %v1690 = vmul.f32 %v1089, %v1626
        %v1691 = vmul.f32 %v1091, %v1627
        %v1692 = vmul.f32 %v1093, %v1628
        %v1693 = vmul.f32 %v1095, %v1629
        %v1694 = vmul.f32 %v1097, %v1630
        %v1695 = vmul.f32 %v1099, %v1631
        %v1696 = vmul.f32 %v1101, %v1632
        %v1697 = vmul.f32 %v1103, %v1633
        %v1698 = vmul.f32 %v1105, %v1634
        %v1699 = vmul.f32 %v1107, %v1635
        %v1700 = vmul.f32 %v1109, %v1636
        %v1701 = vmul.f32 %v1111, %v1637
        %v1702 = vmul.f32 %v1113, %v1638
        %v1703 = vmul.f32 %v1115, %v1639
        %v1704 = vmul.f32 %v1117, %v1640
        %v1705 = vmul.f32 %v1119, %v1641
        %v1706 = vmul.f32 %v1121, %v1642
        %v1707 = vmul.f32 %v1123, %v1643
        %v1708 = vmul.f32 %v1125, %v1644
        %v1709 = vmul.f32 %v1127, %v1645
        %v1710 = vmul.f32 %v1129, %v1646
        %v1711 = vmul.f32 %v1131, %v1647
        %v1712 = vmul.f32 %v1133, %v1648
        %v1713 = vmul.f32 %v1135, %v1649
        %v1714 = vmul.f32 %v1137, %v1650
        %v1715 = vmul.f32 %v1139, %v1651
        %v1716 = vmul.f32 %v820, %v820
        %v1717 = vmul.f32 %v821, %v821
        %v1718 = vmul.f32 %v822, %v822
        %v1719 = vmul.f32 %v823, %v823
        %v1720 = vmul.f32 %v824, %v824
        %v1721 = vmul.f32 %v825, %v825
        %v1722 = vmul.f32 %v826, %v826
        %v1723 = vmul.f32 %v827, %v827
        %v1724 = vmul.f32 %v828, %v828
        %v1725 = vmul.f32 %v829, %v829
        %v1726 = vmul.f32 %v830, %v830
        %v1727 = vmul.f32 %v831, %v831
        %v1728 = vmul.f32 %v832, %v832
        %v1729 = vmul.f32 %v833, %v833
        %v1730 = vmul.f32 %v834, %v834
        %v1731 = vmul.f32 %v835, %v835
        %v1732 = vmul.f32 %v836, %v836
        %v1733 = vmul.f32 %v837, %v837
        %v1734 = vmul.f32 %v838, %v838
        %v1735 = vmul.f32 %v839, %v839
        %v1736 = vmul.f32 %v840, %v840
        %v1737 = vmul.f32 %v841, %v841
        %v1738 = vmul.f32 %v842, %v842
        %v1739 = vmul.f32 %v843, %v843
        %v1740 = vmul.f32 %v844, %v844
        %v1741 = vmul.f32 %v845, %v845
        %v1742 = vmul.f32 %v846, %v846
        %v1743 = vmul.f32 %v847, %v847
        %v1744 = vmul.f32 %v848, %v848
        %v1745 = vmul.f32 %v849, %v849
        %v1746 = vmul.f32 %v850, %v850
        %v1747 = vmul.f32 %v851, %v851
        %v1748 = vmul.f32 %v852, %v852
        %v1749 = vmul.f32 %v853, %v853
        %v1750 = vmul.f32 %v854, %v854
        %v1751 = vmul.f32 %v855, %v855
        %v1752 = vmul.f32 %v856, %v856
        %v1753 = vmul.f32 %v857, %v857
        %v1754 = vmul.f32 %v858, %v858
        %v1755 = vmul.f32 %v859, %v859
        %v1756 = vmul.f32 %v860, %v860
        %v1757 = vmul.f32 %v861, %v861
        %v1758 = vmul.f32 %v862, %v862
        %v1759 = vmul.f32 %v863, %v863
        %v1760 = vmul.f32 %v864, %v864
        %v1761 = vmul.f32 %v865, %v865
        %v1762 = vmul.f32 %v866, %v866
        %v1763 = vmul.f32 %v867, %v867
        %v1764 = vmul.f32 %v868, %v868
        %v1765 = vmul.f32 %v869, %v869
        %v1766 = vmul.f32 %v870, %v870
        %v1767 = vmul.f32 %v871, %v871
        %v1768 = vmul.f32 %v872, %v872
        %v1769 = vmul.f32 %v873, %v873
        %v1770 = vmul.f32 %v874, %v874
        %v1771 = vmul.f32 %v875, %v875
        %v1772 = vmul.f32 %v876, %v876
        %v1773 = vmul.f32 %v877, %v877
        %v1774 = vmul.f32 %v878, %v878
        %v1775 = vmul.f32 %v879, %v879
        %v1776 = vmul.f32 %v880, %v880
        %v1777 = vmul.f32 %v881, %v881
        %v1778 = vmul.f32 %v882, %v882
        %v1779 = vmul.f32 %v883, %v883
        %v1780 = vsub.f32 0.0, %v1716
        %v1781 = vsub.f32 0.0, %v1717
        %v1782 = vsub.f32 0.0, %v1718
        %v1783 = vsub.f32 0.0, %v1719
        %v1784 = vsub.f32 0.0, %v1720
        %v1785 = vsub.f32 0.0, %v1721
        %v1786 = vsub.f32 0.0, %v1722
        %v1787 = vsub.f32 0.0, %v1723
        %v1788 = vsub.f32 0.0, %v1724
        %v1789 = vsub.f32 0.0, %v1725
        %v1790 = vsub.f32 0.0, %v1726
        %v1791 = vsub.f32 0.0, %v1727
        %v1792 = vsub.f32 0.0, %v1728
        %v1793 = vsub.f32 0.0, %v1729
        %v1794 = vsub.f32 0.0, %v1730
        %v1795 = vsub.f32 0.0, %v1731
        %v1796 = vsub.f32 0.0, %v1732
        %v1797 = vsub.f32 0.0, %v1733
        %v1798 = vsub.f32 0.0, %v1734
        %v1799 = vsub.f32 0.0, %v1735
        %v1800 = vsub.f32 0.0, %v1736
        %v1801 = vsub.f32 0.0, %v1737
        %v1802 = vsub.f32 0.0, %v1738
        %v1803 = vsub.f32 0.0, %v1739
        %v1804 = vsub.f32 0.0, %v1740
        %v1805 = vsub.f32 0.0, %v1741
        %v1806 = vsub.f32 0.0, %v1742
        %v1807 = vsub.f32 0.0, %v1743
        %v1808 = vsub.f32 0.0, %v1744
        %v1809 = vsub.f32 0.0, %v1745
        %v1810 = vsub.f32 0.0, %v1746
        %v1811 = vsub.f32 0.0, %v1747
        %v1812 = vsub.f32 0.0, %v1748
        %v1813 = vsub.f32 0.0, %v1749
        %v1814 = vsub.f32 0.0, %v1750
        %v1815 = vsub.f32 0.0, %v1751
        %v1816 = vsub.f32 0.0, %v1752
        %v1817 = vsub.f32 0.0, %v1753
        %v1818 = vsub.f32 0.0, %v1754
        %v1819 = vsub.f32 0.0, %v1755
        %v1820 = vsub.f32 0.0, %v1756
        %v1821 = vsub.f32 0.0, %v1757
        %v1822 = vsub.f32 0.0, %v1758
        %v1823 = vsub.f32 0.0, %v1759
        %v1824 = vsub.f32 0.0, %v1760
        %v1825 = vsub.f32 0.0, %v1761
        %v1826 = vsub.f32 0.0, %v1762
        %v1827 = vsub.f32 0.0, %v1763
        %v1828 = vsub.f32 0.0, %v1764
        %v1829 = vsub.f32 0.0, %v1765
        %v1830 = vsub.f32 0.0, %v1766
        %v1831 = vsub.f32 0.0, %v1767
        %v1832 = vsub.f32 0.0, %v1768
        %v1833 = vsub.f32 0.0, %v1769
        %v1834 = vsub.f32 0.0, %v1770
        %v1835 = vsub.f32 0.0, %v1771
        %v1836 = vsub.f32 0.0, %v1772
        %v1837 = vsub.f32 0.0, %v1773
        %v1838 = vsub.f32 0.0, %v1774
        %v1839 = vsub.f32 0.0, %v1775
        %v1840 = vsub.f32 0.0, %v1776
        %v1841 = vsub.f32 0.0, %v1777
        %v1842 = vsub.f32 0.0, %v1778
        %v1843 = vsub.f32 0.0, %v1779
        %v1844 = vmul.f32 %v1780, 1.442695
        %v1845 = vpow.pop %v1844
        %v1846 = vmul.f32 %v1781, 1.442695
        %v1847 = vpow.pop %v1846
        %v1848 = vmul.f32 %v1782, 1.442695
        %v1849 = vpow.pop %v1848
        %v1850 = vmul.f32 %v1783, 1.442695
        %v1851 = vpow.pop %v1850
        %v1852 = vmul.f32 %v1784, 1.442695
        %v1853 = vpow.pop %v1852
        %v1854 = vmul.f32 %v1785, 1.442695
        %v1855 = vpow.pop %v1854
        %v1856 = vmul.f32 %v1786, 1.442695
        %v1857 = vpow.pop %v1856
        %v1858 = vmul.f32 %v1787, 1.442695
        %v1859 = vpow.pop %v1858
        %v1860 = vmul.f32 %v1788, 1.442695
        %v1861 = vpow.pop %v1860
        %v1862 = vmul.f32 %v1789, 1.442695
        %v1863 = vpow.pop %v1862
        %v1864 = vmul.f32 %v1790, 1.442695
        %v1865 = vpow.pop %v1864
        %v1866 = vmul.f32 %v1791, 1.442695
        %v1867 = vpow.pop %v1866
        %v1868 = vmul.f32 %v1792, 1.442695
        %v1869 = vpow.pop %v1868
        %v1870 = vmul.f32 %v1793, 1.442695
        %v1871 = vpow.pop %v1870
        %v1872 = vmul.f32 %v1794, 1.442695
        %v1873 = vpow.pop %v1872
        %v1874 = vmul.f32 %v1795, 1.442695
        %v1875 = vpow.pop %v1874
        %v1876 = vmul.f32 %v1796, 1.442695
        %v1877 = vpow.pop %v1876
        %v1878 = vmul.f32 %v1797, 1.442695
        %v1879 = vpow.pop %v1878
        %v1880 = vmul.f32 %v1798, 1.442695
        %v1881 = vpow.pop %v1880
        %v1882 = vmul.f32 %v1799, 1.442695
        %v1883 = vpow.pop %v1882
        %v1884 = vmul.f32 %v1800, 1.442695
        %v1885 = vpow.pop %v1884
        %v1886 = vmul.f32 %v1801, 1.442695
        %v1887 = vpow.pop %v1886
        %v1888 = vmul.f32 %v1802, 1.442695
        %v1889 = vpow.pop %v1888
        %v1890 = vmul.f32 %v1803, 1.442695
        %v1891 = vpow.pop %v1890
        %v1892 = vmul.f32 %v1804, 1.442695
        %v1893 = vpow.pop %v1892
        %v1894 = vmul.f32 %v1805, 1.442695
        %v1895 = vpow.pop %v1894
        %v1896 = vmul.f32 %v1806, 1.442695
        %v1897 = vpow.pop %v1896
        %v1898 = vmul.f32 %v1807, 1.442695
        %v1899 = vpow.pop %v1898
        %v1900 = vmul.f32 %v1808, 1.442695
        %v1901 = vpow.pop %v1900
        %v1902 = vmul.f32 %v1809, 1.442695
        %v1903 = vpow.pop %v1902
        %v1904 = vmul.f32 %v1810, 1.442695
        %v1905 = vpow.pop %v1904
        %v1906 = vmul.f32 %v1811, 1.442695
        %v1907 = vpow.pop %v1906
        %v1908 = vmul.f32 %v1812, 1.442695
        %v1909 = vpow.pop %v1908
        %v1910 = vmul.f32 %v1813, 1.442695
        %v1911 = vpow.pop %v1910
        %v1912 = vmul.f32 %v1814, 1.442695
        %v1913 = vpow.pop %v1912
        %v1914 = vmul.f32 %v1815, 1.442695
        %v1915 = vpow.pop %v1914
        %v1916 = vmul.f32 %v1816, 1.442695
        %v1917 = vpow.pop %v1916
        %v1918 = vmul.f32 %v1817, 1.442695
        %v1919 = vpow.pop %v1918
        %v1920 = vmul.f32 %v1818, 1.442695
        %v1921 = vpow.pop %v1920
        %v1922 = vmul.f32 %v1819, 1.442695
        %v1923 = vpow.pop %v1922
        %v1924 = vmul.f32 %v1820, 1.442695
        %v1925 = vpow.pop %v1924
        %v1926 = vmul.f32 %v1821, 1.442695
        %v1927 = vpow.pop %v1926
        %v1928 = vmul.f32 %v1822, 1.442695
        %v1929 = vpow.pop %v1928
        %v1930 = vmul.f32 %v1823, 1.442695
        %v1931 = vpow.pop %v1930
        %v1932 = vmul.f32 %v1824, 1.442695
        %v1933 = vpow.pop %v1932
        %v1934 = vmul.f32 %v1825, 1.442695
        %v1935 = vpow.pop %v1934
        %v1936 = vmul.f32 %v1826, 1.442695
        %v1937 = vpow.pop %v1936
        %v1938 = vmul.f32 %v1827, 1.442695
        %v1939 = vpow.pop %v1938
        %v1940 = vmul.f32 %v1828, 1.442695
        %v1941 = vpow.pop %v1940
        %v1942 = vmul.f32 %v1829, 1.442695
        %v1943 = vpow.pop %v1942
        %v1944 = vmul.f32 %v1830, 1.442695
        %v1945 = vpow.pop %v1944
        %v1946 = vmul.f32 %v1831, 1.442695
        %v1947 = vpow.pop %v1946
        %v1948 = vmul.f32 %v1832, 1.442695
        %v1949 = vpow.pop %v1948
        %v1950 = vmul.f32 %v1833, 1.442695
        %v1951 = vpow.pop %v1950
        %v1952 = vmul.f32 %v1834, 1.442695
        %v1953 = vpow.pop %v1952
        %v1954 = vmul.f32 %v1835, 1.442695
        %v1955 = vpow.pop %v1954
        %v1956 = vmul.f32 %v1836, 1.442695
        %v1957 = vpow.pop %v1956
        %v1958 = vmul.f32 %v1837, 1.442695
        %v1959 = vpow.pop %v1958
        %v1960 = vmul.f32 %v1838, 1.442695
        %v1961 = vpow.pop %v1960
        %v1962 = vmul.f32 %v1839, 1.442695
        %v1963 = vpow.pop %v1962
        %v1964 = vmul.f32 %v1840, 1.442695
        %v1965 = vpow.pop %v1964
        %v1966 = vmul.f32 %v1841, 1.442695
        %v1967 = vpow.pop %v1966
        %v1968 = vmul.f32 %v1842, 1.442695
        %v1969 = vpow.pop %v1968
        %v1970 = vmul.f32 %v1843, 1.442695
        %v1971 = vpow.pop %v1970
        %v1972 = vmul.f32 %v1652, %v1845
        %v1973 = vmul.f32 %v1653, %v1847
        %v1974 = vmul.f32 %v1654, %v1849
        %v1975 = vmul.f32 %v1655, %v1851
        %v1976 = vmul.f32 %v1656, %v1853
        %v1977 = vmul.f32 %v1657, %v1855
        %v1978 = vmul.f32 %v1658, %v1857
        %v1979 = vmul.f32 %v1659, %v1859
        %v1980 = vmul.f32 %v1660, %v1861
        %v1981 = vmul.f32 %v1661, %v1863
        %v1982 = vmul.f32 %v1662, %v1865
        %v1983 = vmul.f32 %v1663, %v1867
        %v1984 = vmul.f32 %v1664, %v1869
        %v1985 = vmul.f32 %v1665, %v1871
        %v1986 = vmul.f32 %v1666, %v1873
        %v1987 = vmul.f32 %v1667, %v1875
        %v1988 = vmul.f32 %v1668, %v1877
        %v1989 = vmul.f32 %v1669, %v1879
        %v1990 = vmul.f32 %v1670, %v1881
        %v1991 = vmul.f32 %v1671, %v1883
        %v1992 = vmul.f32 %v1672, %v1885
        %v1993 = vmul.f32 %v1673, %v1887
        %v1994 = vmul.f32 %v1674, %v1889
        %v1995 = vmul.f32 %v1675, %v1891
        %v1996 = vmul.f32 %v1676, %v1893
        %v1997 = vmul.f32 %v1677, %v1895
        %v1998 = vmul.f32 %v1678, %v1897
        %v1999 = vmul.f32 %v1679, %v1899
        %v2000 = vmul.f32 %v1680, %v1901
        %v2001 = vmul.f32 %v1681, %v1903
        %v2002 = vmul.f32 %v1682, %v1905
        %v2003 = vmul.f32 %v1683, %v1907
        %v2004 = vmul.f32 %v1684, %v1909
        %v2005 = vmul.f32 %v1685, %v1911
        %v2006 = vmul.f32 %v1686, %v1913
        %v2007 = vmul.f32 %v1687, %v1915
        %v2008 = vmul.f32 %v1688, %v1917
        %v2009 = vmul.f32 %v1689, %v1919
        %v2010 = vmul.f32 %v1690, %v1921
        %v2011 = vmul.f32 %v1691, %v1923
        %v2012 = vmul.f32 %v1692, %v1925
        %v2013 = vmul.f32 %v1693, %v1927
        %v2014 = vmul.f32 %v1694, %v1929
        %v2015 = vmul.f32 %v1695, %v1931
        %v2016 = vmul.f32 %v1696, %v1933
        %v2017 = vmul.f32 %v1697, %v1935
        %v2018 = vmul.f32 %v1698, %v1937
        %v2019 = vmul.f32 %v1699, %v1939
        %v2020 = vmul.f32 %v1700, %v1941
        %v2021 = vmul.f32 %v1701, %v1943
        %v2022 = vmul.f32 %v1702, %v1945
        %v2023 = vmul.f32 %v1703, %v1947
        %v2024 = vmul.f32 %v1704, %v1949
        %v2025 = vmul.f32 %v1705, %v1951
        %v2026 = vmul.f32 %v1706, %v1953
        %v2027 = vmul.f32 %v1707, %v1955
        %v2028 = vmul.f32 %v1708, %v1957
        %v2029 = vmul.f32 %v1709, %v1959
        %v2030 = vmul.f32 %v1710, %v1961
        %v2031 = vmul.f32 %v1711, %v1963
        %v2032 = vmul.f32 %v1712, %v1965
        %v2033 = vmul.f32 %v1713, %v1967
        %v2034 = vmul.f32 %v1714, %v1969
        %v2035 = vmul.f32 %v1715, %v1971
        %v2036 = vsub.f32 1.0, %v1972
        %v2037 = vsub.f32 1.0, %v1973
        %v2038 = vsub.f32 1.0, %v1974
        %v2039 = vsub.f32 1.0, %v1975
        %v2040 = vsub.f32 1.0, %v1976
        %v2041 = vsub.f32 1.0, %v1977
        %v2042 = vsub.f32 1.0, %v1978
        %v2043 = vsub.f32 1.0, %v1979
        %v2044 = vsub.f32 1.0, %v1980
        %v2045 = vsub.f32 1.0, %v1981
        %v2046 = vsub.f32 1.0, %v1982
        %v2047 = vsub.f32 1.0, %v1983
        %v2048 = vsub.f32 1.0, %v1984
        %v2049 = vsub.f32 1.0, %v1985
        %v2050 = vsub.f32 1.0, %v1986
        %v2051 = vsub.f32 1.0, %v1987
        %v2052 = vsub.f32 1.0, %v1988
        %v2053 = vsub.f32 1.0, %v1989
        %v2054 = vsub.f32 1.0, %v1990
        %v2055 = vsub.f32 1.0, %v1991
        %v2056 = vsub.f32 1.0, %v1992
        %v2057 = vsub.f32 1.0, %v1993
        %v2058 = vsub.f32 1.0, %v1994
        %v2059 = vsub.f32 1.0, %v1995
        %v2060 = vsub.f32 1.0, %v1996
        %v2061 = vsub.f32 1.0, %v1997
        %v2062 = vsub.f32 1.0, %v1998
        %v2063 = vsub.f32 1.0, %v1999
        %v2064 = vsub.f32 1.0, %v2000
        %v2065 = vsub.f32 1.0, %v2001
        %v2066 = vsub.f32 1.0, %v2002
        %v2067 = vsub.f32 1.0, %v2003
        %v2068 = vsub.f32 1.0, %v2004
        %v2069 = vsub.f32 1.0, %v2005
        %v2070 = vsub.f32 1.0, %v2006
        %v2071 = vsub.f32 1.0, %v2007
        %v2072 = vsub.f32 1.0, %v2008
        %v2073 = vsub.f32 1.0, %v2009
        %v2074 = vsub.f32 1.0, %v2010
        %v2075 = vsub.f32 1.0, %v2011
        %v2076 = vsub.f32 1.0, %v2012
        %v2077 = vsub.f32 1.0, %v2013
        %v2078 = vsub.f32 1.0, %v2014
        %v2079 = vsub.f32 1.0, %v2015
        %v2080 = vsub.f32 1.0, %v2016
        %v2081 = vsub.f32 1.0, %v2017
        %v2082 = vsub.f32 1.0, %v2018
        %v2083 = vsub.f32 1.0, %v2019
        %v2084 = vsub.f32 1.0, %v2020
        %v2085 = vsub.f32 1.0, %v2021
        %v2086 = vsub.f32 1.0, %v2022
        %v2087 = vsub.f32 1.0, %v2023
        %v2088 = vsub.f32 1.0, %v2024
        %v2089 = vsub.f32 1.0, %v2025
        %v2090 = vsub.f32 1.0, %v2026
        %v2091 = vsub.f32 1.0, %v2027
        %v2092 = vsub.f32 1.0, %v2028
        %v2093 = vsub.f32 1.0, %v2029
        %v2094 = vsub.f32 1.0, %v2030
        %v2095 = vsub.f32 1.0, %v2031
        %v2096 = vsub.f32 1.0, %v2032
        %v2097 = vsub.f32 1.0, %v2033
        %v2098 = vsub.f32 1.0, %v2034
        %v2099 = vsub.f32 1.0, %v2035
        %vm2100 = vcmp.lt.f32.partialorder %v756, 0.0
        %vm2101 = vcmp.lt.f32.partialorder %v757, 0.0
        %vm2102 = vcmp.lt.f32.partialorder %v758, 0.0
        %vm2103 = vcmp.lt.f32.partialorder %v759, 0.0
        %vm2104 = vcmp.lt.f32.partialorder %v760, 0.0
        %vm2105 = vcmp.lt.f32.partialorder %v761, 0.0
        %vm2106 = vcmp.lt.f32.partialorder %v762, 0.0
        %vm2107 = vcmp.lt.f32.partialorder %v763, 0.0
        %vm2108 = vcmp.lt.f32.partialorder %v764, 0.0
        %vm2109 = vcmp.lt.f32.partialorder %v765, 0.0
        %vm2110 = vcmp.lt.f32.partialorder %v766, 0.0
        %vm2111 = vcmp.lt.f32.partialorder %v767, 0.0
        %vm2112 = vcmp.lt.f32.partialorder %v768, 0.0
        %vm2113 = vcmp.lt.f32.partialorder %v769, 0.0
        %vm2114 = vcmp.lt.f32.partialorder %v770, 0.0
        %vm2115 = vcmp.lt.f32.partialorder %v771, 0.0
        %vm2116 = vcmp.lt.f32.partialorder %v772, 0.0
        %vm2117 = vcmp.lt.f32.partialorder %v773, 0.0
        %vm2118 = vcmp.lt.f32.partialorder %v774, 0.0
        %vm2119 = vcmp.lt.f32.partialorder %v775, 0.0
        %vm2120 = vcmp.lt.f32.partialorder %v776, 0.0
        %vm2121 = vcmp.lt.f32.partialorder %v777, 0.0
        %vm2122 = vcmp.lt.f32.partialorder %v778, 0.0
        %vm2123 = vcmp.lt.f32.partialorder %v779, 0.0
        %vm2124 = vcmp.lt.f32.partialorder %v780, 0.0
        %vm2125 = vcmp.lt.f32.partialorder %v781, 0.0
        %vm2126 = vcmp.lt.f32.partialorder %v782, 0.0
        %vm2127 = vcmp.lt.f32.partialorder %v783, 0.0
        %vm2128 = vcmp.lt.f32.partialorder %v784, 0.0
        %vm2129 = vcmp.lt.f32.partialorder %v785, 0.0
        %vm2130 = vcmp.lt.f32.partialorder %v786, 0.0
        %vm2131 = vcmp.lt.f32.partialorder %v787, 0.0
        %vm2132 = vcmp.lt.f32.partialorder %v788, 0.0
        %vm2133 = vcmp.lt.f32.partialorder %v789, 0.0
        %vm2134 = vcmp.lt.f32.partialorder %v790, 0.0
        %vm2135 = vcmp.lt.f32.partialorder %v791, 0.0
        %vm2136 = vcmp.lt.f32.partialorder %v792, 0.0
        %vm2137 = vcmp.lt.f32.partialorder %v793, 0.0
        %vm2138 = vcmp.lt.f32.partialorder %v794, 0.0
        %vm2139 = vcmp.lt.f32.partialorder %v795, 0.0
        %vm2140 = vcmp.lt.f32.partialorder %v796, 0.0
        %vm2141 = vcmp.lt.f32.partialorder %v797, 0.0
        %vm2142 = vcmp.lt.f32.partialorder %v798, 0.0
        %vm2143 = vcmp.lt.f32.partialorder %v799, 0.0
        %vm2144 = vcmp.lt.f32.partialorder %v800, 0.0
        %vm2145 = vcmp.lt.f32.partialorder %v801, 0.0
        %vm2146 = vcmp.lt.f32.partialorder %v802, 0.0
        %vm2147 = vcmp.lt.f32.partialorder %v803, 0.0
        %vm2148 = vcmp.lt.f32.partialorder %v804, 0.0
        %vm2149 = vcmp.lt.f32.partialorder %v805, 0.0
        %vm2150 = vcmp.lt.f32.partialorder %v806, 0.0
        %vm2151 = vcmp.lt.f32.partialorder %v807, 0.0
        %vm2152 = vcmp.lt.f32.partialorder %v808, 0.0
        %vm2153 = vcmp.lt.f32.partialorder %v809, 0.0
        %vm2154 = vcmp.lt.f32.partialorder %v810, 0.0
        %vm2155 = vcmp.lt.f32.partialorder %v811, 0.0
        %vm2156 = vcmp.lt.f32.partialorder %v812, 0.0
        %vm2157 = vcmp.lt.f32.partialorder %v813, 0.0
        %vm2158 = vcmp.lt.f32.partialorder %v814, 0.0
        %vm2159 = vcmp.lt.f32.partialorder %v815, 0.0
        %vm2160 = vcmp.lt.f32.partialorder %v816, 0.0
        %vm2161 = vcmp.lt.f32.partialorder %v817, 0.0
        %vm2162 = vcmp.lt.f32.partialorder %v818, 0.0
        %vm2163 = vcmp.lt.f32.partialorder %v819, 0.0
        %v2164 = vsub.f32 0.0, %v2036
        %v2165 = vsub.f32 0.0, %v2037
        %v2166 = vsub.f32 0.0, %v2038
        %v2167 = vsub.f32 0.0, %v2039
        %v2168 = vsub.f32 0.0, %v2040
        %v2169 = vsub.f32 0.0, %v2041
        %v2170 = vsub.f32 0.0, %v2042
        %v2171 = vsub.f32 0.0, %v2043
        %v2172 = vsub.f32 0.0, %v2044
        %v2173 = vsub.f32 0.0, %v2045
        %v2174 = vsub.f32 0.0, %v2046
        %v2175 = vsub.f32 0.0, %v2047
        %v2176 = vsub.f32 0.0, %v2048
        %v2177 = vsub.f32 0.0, %v2049
        %v2178 = vsub.f32 0.0, %v2050
        %v2179 = vsub.f32 0.0, %v2051
        %v2180 = vsub.f32 0.0, %v2052
        %v2181 = vsub.f32 0.0, %v2053
        %v2182 = vsub.f32 0.0, %v2054
        %v2183 = vsub.f32 0.0, %v2055
        %v2184 = vsub.f32 0.0, %v2056
        %v2185 = vsub.f32 0.0, %v2057
        %v2186 = vsub.f32 0.0, %v2058
        %v2187 = vsub.f32 0.0, %v2059
        %v2188 = vsub.f32 0.0, %v2060
        %v2189 = vsub.f32 0.0, %v2061
        %v2190 = vsub.f32 0.0, %v2062
        %v2191 = vsub.f32 0.0, %v2063
        %v2192 = vsub.f32 0.0, %v2064
        %v2193 = vsub.f32 0.0, %v2065
        %v2194 = vsub.f32 0.0, %v2066
        %v2195 = vsub.f32 0.0, %v2067
        %v2196 = vsub.f32 0.0, %v2068
        %v2197 = vsub.f32 0.0, %v2069
        %v2198 = vsub.f32 0.0, %v2070
        %v2199 = vsub.f32 0.0, %v2071
        %v2200 = vsub.f32 0.0, %v2072
        %v2201 = vsub.f32 0.0, %v2073
        %v2202 = vsub.f32 0.0, %v2074
        %v2203 = vsub.f32 0.0, %v2075
        %v2204 = vsub.f32 0.0, %v2076
        %v2205 = vsub.f32 0.0, %v2077
        %v2206 = vsub.f32 0.0, %v2078
        %v2207 = vsub.f32 0.0, %v2079
        %v2208 = vsub.f32 0.0, %v2080
        %v2209 = vsub.f32 0.0, %v2081
        %v2210 = vsub.f32 0.0, %v2082
        %v2211 = vsub.f32 0.0, %v2083
        %v2212 = vsub.f32 0.0, %v2084
        %v2213 = vsub.f32 0.0, %v2085
        %v2214 = vsub.f32 0.0, %v2086
        %v2215 = vsub.f32 0.0, %v2087
        %v2216 = vsub.f32 0.0, %v2088
        %v2217 = vsub.f32 0.0, %v2089
        %v2218 = vsub.f32 0.0, %v2090
        %v2219 = vsub.f32 0.0, %v2091
        %v2220 = vsub.f32 0.0, %v2092
        %v2221 = vsub.f32 0.0, %v2093
        %v2222 = vsub.f32 0.0, %v2094
        %v2223 = vsub.f32 0.0, %v2095
        %v2224 = vsub.f32 0.0, %v2096
        %v2225 = vsub.f32 0.0, %v2097
        %v2226 = vsub.f32 0.0, %v2098
        %v2227 = vsub.f32 0.0, %v2099
        %v2228 = vsel %vm2100, %v2164, %v2036
        %v2229 = vsel %vm2101, %v2165, %v2037
        %v2230 = vsel %vm2102, %v2166, %v2038
        %v2231 = vsel %vm2103, %v2167, %v2039
        %v2232 = vsel %vm2104, %v2168, %v2040
        %v2233 = vsel %vm2105, %v2169, %v2041
        %v2234 = vsel %vm2106, %v2170, %v2042
        %v2235 = vsel %vm2107, %v2171, %v2043
        %v2236 = vsel %vm2108, %v2172, %v2044
        %v2237 = vsel %vm2109, %v2173, %v2045
        %v2238 = vsel %vm2110, %v2174, %v2046
        %v2239 = vsel %vm2111, %v2175, %v2047
        %v2240 = vsel %vm2112, %v2176, %v2048
        %v2241 = vsel %vm2113, %v2177, %v2049
        %v2242 = vsel %vm2114, %v2178, %v2050
        %v2243 = vsel %vm2115, %v2179, %v2051
        %v2244 = vsel %vm2116, %v2180, %v2052
        %v2245 = vsel %vm2117, %v2181, %v2053
        %v2246 = vsel %vm2118, %v2182, %v2054
        %v2247 = vsel %vm2119, %v2183, %v2055
        %v2248 = vsel %vm2120, %v2184, %v2056
        %v2249 = vsel %vm2121, %v2185, %v2057
        %v2250 = vsel %vm2122, %v2186, %v2058
        %v2251 = vsel %vm2123, %v2187, %v2059
        %v2252 = vsel %vm2124, %v2188, %v2060
        %v2253 = vsel %vm2125, %v2189, %v2061
        %v2254 = vsel %vm2126, %v2190, %v2062
        %v2255 = vsel %vm2127, %v2191, %v2063
        %v2256 = vsel %vm2128, %v2192, %v2064
        %v2257 = vsel %vm2129, %v2193, %v2065
        %v2258 = vsel %vm2130, %v2194, %v2066
        %v2259 = vsel %vm2131, %v2195, %v2067
        %v2260 = vsel %vm2132, %v2196, %v2068
        %v2261 = vsel %vm2133, %v2197, %v2069
        %v2262 = vsel %vm2134, %v2198, %v2070
        %v2263 = vsel %vm2135, %v2199, %v2071
        %v2264 = vsel %vm2136, %v2200, %v2072
        %v2265 = vsel %vm2137, %v2201, %v2073
        %v2266 = vsel %vm2138, %v2202, %v2074
        %v2267 = vsel %vm2139, %v2203, %v2075
        %v2268 = vsel %vm2140, %v2204, %v2076
        %v2269 = vsel %vm2141, %v2205, %v2077
        %v2270 = vsel %vm2142, %v2206, %v2078
        %v2271 = vsel %vm2143, %v2207, %v2079
        %v2272 = vsel %vm2144, %v2208, %v2080
        %v2273 = vsel %vm2145, %v2209, %v2081
        %v2274 = vsel %vm2146, %v2210, %v2082
        %v2275 = vsel %vm2147, %v2211, %v2083
        %v2276 = vsel %vm2148, %v2212, %v2084
        %v2277 = vsel %vm2149, %v2213, %v2085
        %v2278 = vsel %vm2150, %v2214, %v2086
        %v2279 = vsel %vm2151, %v2215, %v2087
        %v2280 = vsel %vm2152, %v2216, %v2088
        %v2281 = vsel %vm2153, %v2217, %v2089
        %v2282 = vsel %vm2154, %v2218, %v2090
        %v2283 = vsel %vm2155, %v2219, %v2091
        %v2284 = vsel %vm2156, %v2220, %v2092
        %v2285 = vsel %vm2157, %v2221, %v2093
        %v2286 = vsel %vm2158, %v2222, %v2094
        %v2287 = vsel %vm2159, %v2223, %v2095
        %v2288 = vsel %vm2160, %v2224, %v2096
        %v2289 = vsel %vm2161, %v2225, %v2097
        %v2290 = vsel %vm2162, %v2226, %v2098
        %v2291 = vsel %vm2163, %v2227, %v2099
        %v2292 = vadd.f32 %v2228, 1.0
        %v2293 = vadd.f32 %v2229, 1.0
        %v2294 = vadd.f32 %v2230, 1.0
        %v2295 = vadd.f32 %v2231, 1.0
        %v2296 = vadd.f32 %v2232, 1.0
        %v2297 = vadd.f32 %v2233, 1.0
        %v2298 = vadd.f32 %v2234, 1.0
        %v2299 = vadd.f32 %v2235, 1.0
        %v2300 = vadd.f32 %v2236, 1.0
        %v2301 = vadd.f32 %v2237, 1.0
        %v2302 = vadd.f32 %v2238, 1.0
        %v2303 = vadd.f32 %v2239, 1.0
        %v2304 = vadd.f32 %v2240, 1.0
        %v2305 = vadd.f32 %v2241, 1.0
        %v2306 = vadd.f32 %v2242, 1.0
        %v2307 = vadd.f32 %v2243, 1.0
        %v2308 = vadd.f32 %v2244, 1.0
        %v2309 = vadd.f32 %v2245, 1.0
        %v2310 = vadd.f32 %v2246, 1.0
        %v2311 = vadd.f32 %v2247, 1.0
        %v2312 = vadd.f32 %v2248, 1.0
        %v2313 = vadd.f32 %v2249, 1.0
        %v2314 = vadd.f32 %v2250, 1.0
        %v2315 = vadd.f32 %v2251, 1.0
        %v2316 = vadd.f32 %v2252, 1.0
        %v2317 = vadd.f32 %v2253, 1.0
        %v2318 = vadd.f32 %v2254, 1.0
        %v2319 = vadd.f32 %v2255, 1.0
        %v2320 = vadd.f32 %v2256, 1.0
        %v2321 = vadd.f32 %v2257, 1.0
        %v2322 = vadd.f32 %v2258, 1.0
        %v2323 = vadd.f32 %v2259, 1.0
        %v2324 = vadd.f32 %v2260, 1.0
        %v2325 = vadd.f32 %v2261, 1.0
        %v2326 = vadd.f32 %v2262, 1.0
        %v2327 = vadd.f32 %v2263, 1.0
        %v2328 = vadd.f32 %v2264, 1.0
        %v2329 = vadd.f32 %v2265, 1.0
        %v2330 = vadd.f32 %v2266, 1.0
        %v2331 = vadd.f32 %v2267, 1.0
        %v2332 = vadd.f32 %v2268, 1.0
        %v2333 = vadd.f32 %v2269, 1.0
        %v2334 = vadd.f32 %v2270, 1.0
        %v2335 = vadd.f32 %v2271, 1.0
        %v2336 = vadd.f32 %v2272, 1.0
        %v2337 = vadd.f32 %v2273, 1.0
        %v2338 = vadd.f32 %v2274, 1.0
        %v2339 = vadd.f32 %v2275, 1.0
        %v2340 = vadd.f32 %v2276, 1.0
        %v2341 = vadd.f32 %v2277, 1.0
        %v2342 = vadd.f32 %v2278, 1.0
        %v2343 = vadd.f32 %v2279, 1.0
        %v2344 = vadd.f32 %v2280, 1.0
        %v2345 = vadd.f32 %v2281, 1.0
        %v2346 = vadd.f32 %v2282, 1.0
        %v2347 = vadd.f32 %v2283, 1.0
        %v2348 = vadd.f32 %v2284, 1.0
        %v2349 = vadd.f32 %v2285, 1.0
        %v2350 = vadd.f32 %v2286, 1.0
        %v2351 = vadd.f32 %v2287, 1.0
        %v2352 = vadd.f32 %v2288, 1.0
        %v2353 = vadd.f32 %v2289, 1.0
        %v2354 = vadd.f32 %v2290, 1.0
        %v2355 = vadd.f32 %v2291, 1.0
        %v2356 = vmul.f32 %v692, %v2292
        %v2357 = vmul.f32 %v693, %v2293
        %v2358 = vmul.f32 %v694, %v2294
        %v2359 = vmul.f32 %v695, %v2295
        %v2360 = vmul.f32 %v696, %v2296
        %v2361 = vmul.f32 %v697, %v2297
        %v2362 = vmul.f32 %v698, %v2298
        %v2363 = vmul.f32 %v699, %v2299
        %v2364 = vmul.f32 %v700, %v2300
        %v2365 = vmul.f32 %v701, %v2301
        %v2366 = vmul.f32 %v702, %v2302
        %v2367 = vmul.f32 %v703, %v2303
        %v2368 = vmul.f32 %v704, %v2304
        %v2369 = vmul.f32 %v705, %v2305
        %v2370 = vmul.f32 %v706, %v2306
        %v2371 = vmul.f32 %v707, %v2307
        %v2372 = vmul.f32 %v708, %v2308
        %v2373 = vmul.f32 %v709, %v2309
        %v2374 = vmul.f32 %v710, %v2310
        %v2375 = vmul.f32 %v711, %v2311
        %v2376 = vmul.f32 %v712, %v2312
        %v2377 = vmul.f32 %v713, %v2313
        %v2378 = vmul.f32 %v714, %v2314
        %v2379 = vmul.f32 %v715, %v2315
        %v2380 = vmul.f32 %v716, %v2316
        %v2381 = vmul.f32 %v717, %v2317
        %v2382 = vmul.f32 %v718, %v2318
        %v2383 = vmul.f32 %v719, %v2319
        %v2384 = vmul.f32 %v720, %v2320
        %v2385 = vmul.f32 %v721, %v2321
        %v2386 = vmul.f32 %v722, %v2322
        %v2387 = vmul.f32 %v723, %v2323
        %v2388 = vmul.f32 %v724, %v2324
        %v2389 = vmul.f32 %v725, %v2325
        %v2390 = vmul.f32 %v726, %v2326
        %v2391 = vmul.f32 %v727, %v2327
        %v2392 = vmul.f32 %v728, %v2328
        %v2393 = vmul.f32 %v729, %v2329
        %v2394 = vmul.f32 %v730, %v2330
        %v2395 = vmul.f32 %v731, %v2331
        %v2396 = vmul.f32 %v732, %v2332
        %v2397 = vmul.f32 %v733, %v2333
        %v2398 = vmul.f32 %v734, %v2334
        %v2399 = vmul.f32 %v735, %v2335
        %v2400 = vmul.f32 %v736, %v2336
        %v2401 = vmul.f32 %v737, %v2337
        %v2402 = vmul.f32 %v738, %v2338
        %v2403 = vmul.f32 %v739, %v2339
        %v2404 = vmul.f32 %v740, %v2340
        %v2405 = vmul.f32 %v741, %v2341
        %v2406 = vmul.f32 %v742, %v2342
        %v2407 = vmul.f32 %v743, %v2343
        %v2408 = vmul.f32 %v744, %v2344
        %v2409 = vmul.f32 %v745, %v2345
        %v2410 = vmul.f32 %v746, %v2346
        %v2411 = vmul.f32 %v747, %v2347
        %v2412 = vmul.f32 %v748, %v2348
        %v2413 = vmul.f32 %v749, %v2349
        %v2414 = vmul.f32 %v750, %v2350
        %v2415 = vmul.f32 %v751, %v2351
        %v2416 = vmul.f32 %v752, %v2352
        %v2417 = vmul.f32 %v753, %v2353
        %v2418 = vmul.f32 %v754, %v2354
        %v2419 = vmul.f32 %v755, %v2355
        %v2420 = vld [vmem:[#allocation2] sm:$0xff]
        %v2421 = vld [vmem:[#allocation2 + $0x8] sm:$0xff]
        %v2422 = vld [vmem:[#allocation2 + $0x10] sm:$0xff]
        %v2423 = vld [vmem:[#allocation2 + $0x18] sm:$0xff]
        %v2424 = vld [vmem:[#allocation2 + $0x20] sm:$0xff]
        %v2425 = vld [vmem:[#allocation2 + $0x28] sm:$0xff]
        %v2426 = vld [vmem:[#allocation2 + $0x30] sm:$0xff]
        %v2427 = vld [vmem:[#allocation2 + $0x38] sm:$0xff]
        %v2428 = vld [vmem:[#allocation2 + $0x40] sm:$0xff]
        %v2429 = vld [vmem:[#allocation2 + $0x48] sm:$0xff]
        %v2430 = vld [vmem:[#allocation2 + $0x50] sm:$0xff]
        %v2431 = vld [vmem:[#allocation2 + $0x58] sm:$0xff]
        %v2432 = vld [vmem:[#allocation2 + $0x60] sm:$0xff]
        %v2433 = vld [vmem:[#allocation2 + $0x68] sm:$0xff]
        %v2434 = vld [vmem:[#allocation2 + $0x70] sm:$0xff]
        %v2435 = vld [vmem:[#allocation2 + $0x78] sm:$0xff]
        %v2436 = vld [vmem:[#allocation2 + $0x80] sm:$0xff]
        %v2437 = vld [vmem:[#allocation2 + $0x88] sm:$0xff]
        %v2438 = vld [vmem:[#allocation2 + $0x90] sm:$0xff]
        %v2439 = vld [vmem:[#allocation2 + $0x98] sm:$0xff]
        %v2440 = vld [vmem:[#allocation2 + $0xa0] sm:$0xff]
        %v2441 = vld [vmem:[#allocation2 + $0xa8] sm:$0xff]
        %v2442 = vld [vmem:[#allocation2 + $0xb0] sm:$0xff]
        %v2443 = vld [vmem:[#allocation2 + $0xb8] sm:$0xff]
        %v2444 = vld [vmem:[#allocation2 + $0xc0] sm:$0xff]
        %v2445 = vld [vmem:[#allocation2 + $0xc8] sm:$0xff]
        %v2446 = vld [vmem:[#allocation2 + $0xd0] sm:$0xff]
        %v2447 = vld [vmem:[#allocation2 + $0xd8] sm:$0xff]
        %v2448 = vld [vmem:[#allocation2 + $0xe0] sm:$0xff]
        %v2449 = vld [vmem:[#allocation2 + $0xe8] sm:$0xff]
        %v2450 = vld [vmem:[#allocation2 + $0xf0] sm:$0xff]
        %v2451 = vld [vmem:[#allocation2 + $0xf8] sm:$0xff]
        %v2452 = vld [vmem:[#allocation8] sm:$0xff]
        %v2453 = vld [vmem:[#allocation8 + $0x8] sm:$0xff]
        %v2454 = vld [vmem:[#allocation8 + $0x10] sm:$0xff]
        %v2455 = vld [vmem:[#allocation8 + $0x18] sm:$0xff]
        %v2456 = vld [vmem:[#allocation8 + $0x20] sm:$0xff]
        %v2457 = vld [vmem:[#allocation8 + $0x28] sm:$0xff]
        %v2458 = vld [vmem:[#allocation8 + $0x30] sm:$0xff]
        %v2459 = vld [vmem:[#allocation8 + $0x38] sm:$0xff]
        %v2460 = vld [vmem:[#allocation8 + $0x40] sm:$0xff]
        %v2461 = vld [vmem:[#allocation8 + $0x48] sm:$0xff]
        %v2462 = vld [vmem:[#allocation8 + $0x50] sm:$0xff]
        %v2463 = vld [vmem:[#allocation8 + $0x58] sm:$0xff]
        %v2464 = vld [vmem:[#allocation8 + $0x60] sm:$0xff]
        %v2465 = vld [vmem:[#allocation8 + $0x68] sm:$0xff]
        %v2466 = vld [vmem:[#allocation8 + $0x70] sm:$0xff]
        %v2467 = vld [vmem:[#allocation8 + $0x78] sm:$0xff]
        %v2468 = vld [vmem:[#allocation8 + $0x80] sm:$0xff]
        %v2469 = vld [vmem:[#allocation8 + $0x88] sm:$0xff]
        %v2470 = vld [vmem:[#allocation8 + $0x90] sm:$0xff]
        %v2471 = vld [vmem:[#allocation8 + $0x98] sm:$0xff]
        %v2472 = vld [vmem:[#allocation8 + $0xa0] sm:$0xff]
        %v2473 = vld [vmem:[#allocation8 + $0xa8] sm:$0xff]
        %v2474 = vld [vmem:[#allocation8 + $0xb0] sm:$0xff]
        %v2475 = vld [vmem:[#allocation8 + $0xb8] sm:$0xff]
        %v2476 = vld [vmem:[#allocation8 + $0xc0] sm:$0xff]
        %v2477 = vld [vmem:[#allocation8 + $0xc8] sm:$0xff]
        %v2478 = vld [vmem:[#allocation8 + $0xd0] sm:$0xff]
        %v2479 = vld [vmem:[#allocation8 + $0xd8] sm:$0xff]
        %v2480 = vld [vmem:[#allocation8 + $0xe0] sm:$0xff]
        %v2481 = vld [vmem:[#allocation8 + $0xe8] sm:$0xff]
        %v2482 = vld [vmem:[#allocation8 + $0xf0] sm:$0xff]
        %v2483 = vld [vmem:[#allocation8 + $0xf8] sm:$0xff]
        %2484 = vmatprep.subr.mxu0 0.0
        %2485 = vmatpush1.msra.mxu0 %v2467
        %2486 = vmatprep.subr.mxu0 0.0
        %2487 = vmatpush1.msra.mxu0 %v2466
        %2488 = vmatprep.subr.mxu0 0.0
        %2489 = vmatpush1.msra.mxu0 %v2465
        %2490 = vmatprep.subr.mxu0 0.0
        %2491 = vmatpush1.msra.mxu0 %v2464
        %2492 = vmatprep.subr.mxu0 0.0
        %2493 = vmatpush1.msra.mxu0 %v2463
        %2494 = vmatprep.subr.mxu0 0.0
        %2495 = vmatpush1.msra.mxu0 %v2462
        %2496 = vmatprep.subr.mxu0 0.0
        %2497 = vmatpush1.msra.mxu0 %v2461
        %2498 = vmatprep.subr.mxu0 0.0
        %2499 = vmatpush1.msra.mxu0 %v2460
        %2500 = vmatprep.subr.mxu0 0.0
        %2501 = vmatpush1.msra.mxu0 %v2459
        %2502 = vmatprep.subr.mxu0 0.0
        %2503 = vmatpush1.msra.mxu0 %v2458
        %2504 = vmatprep.subr.mxu0 0.0
        %2505 = vmatpush1.msra.mxu0 %v2457
        %2506 = vmatprep.subr.mxu0 0.0
        %2507 = vmatpush1.msra.mxu0 %v2456
        %2508 = vmatprep.subr.mxu0 0.0
        %2509 = vmatpush1.msra.mxu0 %v2455
        %2510 = vmatprep.subr.mxu0 0.0
        %2511 = vmatpush1.msra.mxu0 %v2454
        %2512 = vmatprep.subr.mxu0 0.0
        %2513 = vmatpush1.msra.mxu0 %v2453
        %2514 = vmatprep.subr.mxu0 0.0
        %2515 = vmatpush1.msra.mxu0 %v2452
        %2516 = vmatprep.subr.mxu0 0.0
        %2517 = vmatpush2.msra.mxu0 %v2483
        %2518 = vmatprep.subr.mxu0 0.0
        %2519 = vmatpush2.msra.mxu0 %v2482
        %2520 = vmatprep.subr.mxu0 0.0
        %2521 = vmatpush2.msra.mxu0 %v2481
        %2522 = vmatprep.subr.mxu0 0.0
        %2523 = vmatpush2.msra.mxu0 %v2480
        %2524 = vmatprep.subr.mxu0 0.0
        %2525 = vmatpush2.msra.mxu0 %v2479
        %2526 = vmatprep.subr.mxu0 0.0
        %2527 = vmatpush2.msra.mxu0 %v2478
        %2528 = vmatprep.subr.mxu0 0.0
        %2529 = vmatpush2.msra.mxu0 %v2477
        %2530 = vmatprep.subr.mxu0 0.0
        %2531 = vmatpush2.msra.mxu0 %v2476
        %2532 = vmatprep.subr.mxu0 0.0
        %2533 = vmatpush2.msra.mxu0 %v2475
        %2534 = vmatprep.subr.mxu0 0.0
        %2535 = vmatpush2.msra.mxu0 %v2474
        %2536 = vmatprep.subr.mxu0 0.0
        %2537 = vmatpush2.msra.mxu0 %v2473
        %2538 = vmatprep.subr.mxu0 0.0
        %2539 = vmatpush2.msra.mxu0 %v2472
        %2540 = vmatprep.subr.mxu0 0.0
        %2541 = vmatpush2.msra.mxu0 %v2471
        %2542 = vmatprep.subr.mxu0 0.0
        %2543 = vmatpush2.msra.mxu0 %v2470
        %2544 = vmatprep.subr.mxu0 0.0
        %2545 = vmatpush2.msra.mxu0 %v2469
        %2546 = vmatprep.subr.mxu0 0.0
        %2547 = vmatpush2.msra.mxu0 %v2468
        %2548 = vmatprep.mubr.f32.mxu0 %v2357
        %2549 = vmatmul.mubr.f32.gmra.mxu0 %v2356
        %v2550 = vpop.f32.mrf.mxu0
        %v2551 = vadd.f32 0.0, %v2550
        %v2552 = vpop.f32.mrf.mxu0
        %2553 = vmatprep.mubr.f32.mxu0 %v2359
        %2554 = vmatmul.mubr.f32.gmra.mxu0 %v2358
        %v2555 = vpop.f32.mrf.mxu0
        %v2556 = vadd.f32 0.0, %v2555
        %v2557 = vpop.f32.mrf.mxu0
        %2558 = vmatprep.mubr.f32.mxu0 %v2361
        %2559 = vmatmul.mubr.f32.gmra.mxu0 %v2360
        %v2560 = vpop.f32.mrf.mxu0
        %v2561 = vadd.f32 0.0, %v2560
        %v2562 = vpop.f32.mrf.mxu0
        %2563 = vmatprep.mubr.f32.mxu0 %v2363
        %2564 = vmatmul.mubr.f32.gmra.mxu0 %v2362
        %v2565 = vpop.f32.mrf.mxu0
        %v2566 = vadd.f32 0.0, %v2565
        %v2567 = vpop.f32.mrf.mxu0
        %2568 = vmatprep.mubr.f32.mxu0 %v2365
        %2569 = vmatmul.mubr.f32.gmra.mxu0 %v2364
        %v2570 = vpop.f32.mrf.mxu0
        %v2571 = vadd.f32 0.0, %v2570
        %v2572 = vpop.f32.mrf.mxu0
        %2573 = vmatprep.mubr.f32.mxu0 %v2367
        %2574 = vmatmul.mubr.f32.gmra.mxu0 %v2366
        %v2575 = vpop.f32.mrf.mxu0
        %v2576 = vadd.f32 0.0, %v2575
        %v2577 = vpop.f32.mrf.mxu0
        %2578 = vmatprep.mubr.f32.mxu0 %v2369
        %2579 = vmatmul.mubr.f32.gmra.mxu0 %v2368
        %v2580 = vpop.f32.mrf.mxu0
        %v2581 = vadd.f32 0.0, %v2580
        %v2582 = vpop.f32.mrf.mxu0
        %2583 = vmatprep.mubr.f32.mxu0 %v2371
        %2584 = vmatmul.mubr.f32.gmra.mxu0 %v2370
        %v2585 = vpop.f32.mrf.mxu0
        %v2586 = vadd.f32 0.0, %v2585
        %v2587 = vpop.f32.mrf.mxu0
        %2588 = vmatprep.mubr.f32.mxu0 %v2373
        %2589 = vmatmul.mubr.f32.gmra.mxu0 %v2372
        %v2590 = vpop.f32.mrf.mxu0
        %v2591 = vadd.f32 0.0, %v2590
        %v2592 = vpop.f32.mrf.mxu0
        %2593 = vmatprep.mubr.f32.mxu0 %v2375
        %2594 = vmatmul.mubr.f32.gmra.mxu0 %v2374
        %v2595 = vpop.f32.mrf.mxu0
        %v2596 = vadd.f32 0.0, %v2595
        %v2597 = vpop.f32.mrf.mxu0
        %2598 = vmatprep.mubr.f32.mxu0 %v2377
        %2599 = vmatmul.mubr.f32.gmra.mxu0 %v2376
        %v2600 = vpop.f32.mrf.mxu0
        %v2601 = vadd.f32 0.0, %v2600
        %v2602 = vpop.f32.mrf.mxu0
        %2603 = vmatprep.mubr.f32.mxu0 %v2379
        %2604 = vmatmul.mubr.f32.gmra.mxu0 %v2378
        %v2605 = vpop.f32.mrf.mxu0
        %v2606 = vadd.f32 0.0, %v2605
        %v2607 = vpop.f32.mrf.mxu0
        %2608 = vmatprep.mubr.f32.mxu0 %v2381
        %2609 = vmatmul.mubr.f32.gmra.mxu0 %v2380
        %v2610 = vpop.f32.mrf.mxu0
        %v2611 = vadd.f32 0.0, %v2610
        %v2612 = vpop.f32.mrf.mxu0
        %2613 = vmatprep.mubr.f32.mxu0 %v2383
        %2614 = vmatmul.mubr.f32.gmra.mxu0 %v2382
        %v2615 = vpop.f32.mrf.mxu0
        %v2616 = vadd.f32 0.0, %v2615
        %v2617 = vpop.f32.mrf.mxu0
        %2618 = vmatprep.mubr.f32.mxu0 %v2385
        %2619 = vmatmul.mubr.f32.gmra.mxu0 %v2384
        %v2620 = vpop.f32.mrf.mxu0
        %v2621 = vadd.f32 0.0, %v2620
        %v2622 = vpop.f32.mrf.mxu0
        %2623 = vmatprep.mubr.f32.mxu0 %v2387
        %2624 = vmatmul.mubr.f32.gmra.mxu0 %v2386
        %v2625 = vpop.f32.mrf.mxu0
        %v2626 = vadd.f32 0.0, %v2625
        %v2627 = vpop.f32.mrf.mxu0
        %2628 = vmatprep.mubr.f32.mxu0 %v2389
        %2629 = vmatmul.mubr.f32.gmra.mxu0 %v2388
        %v2630 = vpop.f32.mrf.mxu0
        %v2631 = vadd.f32 0.0, %v2630
        %v2632 = vpop.f32.mrf.mxu0
        %2633 = vmatprep.mubr.f32.mxu0 %v2391
        %2634 = vmatmul.mubr.f32.gmra.mxu0 %v2390
        %v2635 = vpop.f32.mrf.mxu0
        %v2636 = vadd.f32 0.0, %v2635
        %v2637 = vpop.f32.mrf.mxu0
        %2638 = vmatprep.mubr.f32.mxu0 %v2393
        %2639 = vmatmul.mubr.f32.gmra.mxu0 %v2392
        %v2640 = vpop.f32.mrf.mxu0
        %v2641 = vadd.f32 0.0, %v2640
        %v2642 = vpop.f32.mrf.mxu0
        %2643 = vmatprep.mubr.f32.mxu0 %v2395
        %2644 = vmatmul.mubr.f32.gmra.mxu0 %v2394
        %v2645 = vpop.f32.mrf.mxu0
        %v2646 = vadd.f32 0.0, %v2645
        %v2647 = vpop.f32.mrf.mxu0
        %2648 = vmatprep.mubr.f32.mxu0 %v2397
        %2649 = vmatmul.mubr.f32.gmra.mxu0 %v2396
        %v2650 = vpop.f32.mrf.mxu0
        %v2651 = vadd.f32 0.0, %v2650
        %v2652 = vpop.f32.mrf.mxu0
        %2653 = vmatprep.mubr.f32.mxu0 %v2399
        %2654 = vmatmul.mubr.f32.gmra.mxu0 %v2398
        %v2655 = vpop.f32.mrf.mxu0
        %v2656 = vadd.f32 0.0, %v2655
        %v2657 = vpop.f32.mrf.mxu0
        %2658 = vmatprep.mubr.f32.mxu0 %v2401
        %2659 = vmatmul.mubr.f32.gmra.mxu0 %v2400
        %v2660 = vpop.f32.mrf.mxu0
        %v2661 = vadd.f32 0.0, %v2660
        %v2662 = vpop.f32.mrf.mxu0
        %2663 = vmatprep.mubr.f32.mxu0 %v2403
        %2664 = vmatmul.mubr.f32.gmra.mxu0 %v2402
        %v2665 = vpop.f32.mrf.mxu0
        %v2666 = vadd.f32 0.0, %v2665
        %v2667 = vpop.f32.mrf.mxu0
        %2668 = vmatprep.mubr.f32.mxu0 %v2405
        %2669 = vmatmul.mubr.f32.gmra.mxu0 %v2404
        %v2670 = vpop.f32.mrf.mxu0
        %v2671 = vadd.f32 0.0, %v2670
        %v2672 = vpop.f32.mrf.mxu0
        %2673 = vmatprep.mubr.f32.mxu0 %v2407
        %2674 = vmatmul.mubr.f32.gmra.mxu0 %v2406
        %v2675 = vpop.f32.mrf.mxu0
        %v2676 = vadd.f32 0.0, %v2675
        %v2677 = vpop.f32.mrf.mxu0
        %2678 = vmatprep.mubr.f32.mxu0 %v2409
        %2679 = vmatmul.mubr.f32.gmra.mxu0 %v2408
        %v2680 = vpop.f32.mrf.mxu0
        %v2681 = vadd.f32 0.0, %v2680
        %v2682 = vpop.f32.mrf.mxu0
        %2683 = vmatprep.mubr.f32.mxu0 %v2411
        %2684 = vmatmul.mubr.f32.gmra.mxu0 %v2410
        %v2685 = vpop.f32.mrf.mxu0
        %v2686 = vadd.f32 0.0, %v2685
        %v2687 = vpop.f32.mrf.mxu0
        %2688 = vmatprep.mubr.f32.mxu0 %v2413
        %2689 = vmatmul.mubr.f32.gmra.mxu0 %v2412
        %v2690 = vpop.f32.mrf.mxu0
        %v2691 = vadd.f32 0.0, %v2690
        %v2692 = vpop.f32.mrf.mxu0
        %2693 = vmatprep.mubr.f32.mxu0 %v2415
        %2694 = vmatmul.mubr.f32.gmra.mxu0 %v2414
        %v2695 = vpop.f32.mrf.mxu0
        %v2696 = vadd.f32 0.0, %v2695
        %v2697 = vpop.f32.mrf.mxu0
        %2698 = vmatprep.mubr.f32.mxu0 %v2417
        %2699 = vmatmul.mubr.f32.gmra.mxu0 %v2416
        %v2700 = vpop.f32.mrf.mxu0
        %v2701 = vadd.f32 0.0, %v2700
        %v2702 = vpop.f32.mrf.mxu0
        %2703 = vmatprep.mubr.f32.mxu0 %v2419
        %2704 = vmatmul.mubr.f32.gmra.mxu0 %v2418
        %v2705 = vpop.f32.mrf.mxu0
        %v2706 = vadd.f32 0.0, %v2705
        %v2707 = vpop.f32.mrf.mxu0
        %2708 = vdwg.mxu0
        %v2709 = vadd.f32 %v2420, %v2551
        %v2710 = vadd.f32 %v2421, %v2556
        %v2711 = vadd.f32 %v2422, %v2561
        %v2712 = vadd.f32 %v2423, %v2566
        %v2713 = vadd.f32 %v2424, %v2571
        %v2714 = vadd.f32 %v2425, %v2576
        %v2715 = vadd.f32 %v2426, %v2581
        %v2716 = vadd.f32 %v2427, %v2586
        %v2717 = vadd.f32 %v2428, %v2591
        %v2718 = vadd.f32 %v2429, %v2596
        %v2719 = vadd.f32 %v2430, %v2601
        %v2720 = vadd.f32 %v2431, %v2606
        %v2721 = vadd.f32 %v2432, %v2611
        %v2722 = vadd.f32 %v2433, %v2616
        %v2723 = vadd.f32 %v2434, %v2621
        %v2724 = vadd.f32 %v2435, %v2626
        %v2725 = vadd.f32 %v2436, %v2631
        %v2726 = vadd.f32 %v2437, %v2636
        %v2727 = vadd.f32 %v2438, %v2641
        %v2728 = vadd.f32 %v2439, %v2646
        %v2729 = vadd.f32 %v2440, %v2651
        %v2730 = vadd.f32 %v2441, %v2656
        %v2731 = vadd.f32 %v2442, %v2661
        %v2732 = vadd.f32 %v2443, %v2666
        %v2733 = vadd.f32 %v2444, %v2671
        %v2734 = vadd.f32 %v2445, %v2676
        %v2735 = vadd.f32 %v2446, %v2681
        %v2736 = vadd.f32 %v2447, %v2686
        %v2737 = vadd.f32 %v2448, %v2691
        %v2738 = vadd.f32 %v2449, %v2696
        %v2739 = vadd.f32 %v2450, %v2701
        %v2740 = vadd.f32 %v2451, %v2706
        %2741 = vst [vmem:[#allocation2] sm:$0xff] %v2709
        %2742 = vst [vmem:[#allocation2 + $0x8] sm:$0xff] %v2710
        %2743 = vst [vmem:[#allocation2 + $0x10] sm:$0xff] %v2711
        %2744 = vst [vmem:[#allocation2 + $0x18] sm:$0xff] %v2712
        %2745 = vst [vmem:[#allocation2 + $0x20] sm:$0xff] %v2713
        %2746 = vst [vmem:[#allocation2 + $0x28] sm:$0xff] %v2714
        %2747 = vst [vmem:[#allocation2 + $0x30] sm:$0xff] %v2715
        %2748 = vst [vmem:[#allocation2 + $0x38] sm:$0xff] %v2716
        %2749 = vst [vmem:[#allocation2 + $0x40] sm:$0xff] %v2717
        %2750 = vst [vmem:[#allocation2 + $0x48] sm:$0xff] %v2718
        %2751 = vst [vmem:[#allocation2 + $0x50] sm:$0xff] %v2719
        %2752 = vst [vmem:[#allocation2 + $0x58] sm:$0xff] %v2720
        %2753 = vst [vmem:[#allocation2 + $0x60] sm:$0xff] %v2721
        %2754 = vst [vmem:[#allocation2 + $0x68] sm:$0xff] %v2722
        %2755 = vst [vmem:[#allocation2 + $0x70] sm:$0xff] %v2723
        %2756 = vst [vmem:[#allocation2 + $0x78] sm:$0xff] %v2724
        %2757 = vst [vmem:[#allocation2 + $0x80] sm:$0xff] %v2725
        %2758 = vst [vmem:[#allocation2 + $0x88] sm:$0xff] %v2726
        %2759 = vst [vmem:[#allocation2 + $0x90] sm:$0xff] %v2727
        %2760 = vst [vmem:[#allocation2 + $0x98] sm:$0xff] %v2728
        %2761 = vst [vmem:[#allocation2 + $0xa0] sm:$0xff] %v2729
        %2762 = vst [vmem:[#allocation2 + $0xa8] sm:$0xff] %v2730
        %2763 = vst [vmem:[#allocation2 + $0xb0] sm:$0xff] %v2731
        %2764 = vst [vmem:[#allocation2 + $0xb8] sm:$0xff] %v2732
        %2765 = vst [vmem:[#allocation2 + $0xc0] sm:$0xff] %v2733
        %2766 = vst [vmem:[#allocation2 + $0xc8] sm:$0xff] %v2734
        %2767 = vst [vmem:[#allocation2 + $0xd0] sm:$0xff] %v2735
        %2768 = vst [vmem:[#allocation2 + $0xd8] sm:$0xff] %v2736
        %2769 = vst [vmem:[#allocation2 + $0xe0] sm:$0xff] %v2737
        %2770 = vst [vmem:[#allocation2 + $0xe8] sm:$0xff] %v2738
        %2771 = vst [vmem:[#allocation2 + $0xf0] sm:$0xff] %v2739
        %2772 = vst [vmem:[#allocation2 + $0xf8] sm:$0xff] %v2740
        // Predicated region
        $region57: #{tpu_custom_call.1} parent=39 // pred_check
          %p2773 = pneg %p323
        $region58: #{tpu_custom_call.1} parent=39 // pred_check_branch
          %2775 = sbr.rel (%p2773) target = $region60
        $region59: #{tpu_custom_call.1} parent=39 // pred_region
          %v2776 = vld [vmem:[#allocation2] sm:$0xff]
          %v2777 = vld [vmem:[#allocation2 + $0x8] sm:$0xff]
          %v2778 = vld [vmem:[#allocation2 + $0x10] sm:$0xff]
          %v2779 = vld [vmem:[#allocation2 + $0x18] sm:$0xff]
          %v2780 = vld [vmem:[#allocation2 + $0x20] sm:$0xff]
          %v2781 = vld [vmem:[#allocation2 + $0x28] sm:$0xff]
          %v2782 = vld [vmem:[#allocation2 + $0x30] sm:$0xff]
          %v2783 = vld [vmem:[#allocation2 + $0x38] sm:$0xff]
          %v2784 = vld [vmem:[#allocation2 + $0x40] sm:$0xff]
          %v2785 = vld [vmem:[#allocation2 + $0x48] sm:$0xff]
          %v2786 = vld [vmem:[#allocation2 + $0x50] sm:$0xff]
          %v2787 = vld [vmem:[#allocation2 + $0x58] sm:$0xff]
          %v2788 = vld [vmem:[#allocation2 + $0x60] sm:$0xff]
          %v2789 = vld [vmem:[#allocation2 + $0x68] sm:$0xff]
          %v2790 = vld [vmem:[#allocation2 + $0x70] sm:$0xff]
          %v2791 = vld [vmem:[#allocation2 + $0x78] sm:$0xff]
          %v2792 = vld [vmem:[#allocation2 + $0x80] sm:$0xff]
          %v2793 = vld [vmem:[#allocation2 + $0x88] sm:$0xff]
          %v2794 = vld [vmem:[#allocation2 + $0x90] sm:$0xff]
          %v2795 = vld [vmem:[#allocation2 + $0x98] sm:$0xff]
          %v2796 = vld [vmem:[#allocation2 + $0xa0] sm:$0xff]
          %v2797 = vld [vmem:[#allocation2 + $0xa8] sm:$0xff]
          %v2798 = vld [vmem:[#allocation2 + $0xb0] sm:$0xff]
          %v2799 = vld [vmem:[#allocation2 + $0xb8] sm:$0xff]
          %v2800 = vld [vmem:[#allocation2 + $0xc0] sm:$0xff]
          %v2801 = vld [vmem:[#allocation2 + $0xc8] sm:$0xff]
          %v2802 = vld [vmem:[#allocation2 + $0xd0] sm:$0xff]
          %v2803 = vld [vmem:[#allocation2 + $0xd8] sm:$0xff]
          %v2804 = vld [vmem:[#allocation2 + $0xe0] sm:$0xff]
          %v2805 = vld [vmem:[#allocation2 + $0xe8] sm:$0xff]
          %v2806 = vld [vmem:[#allocation2 + $0xf0] sm:$0xff]
          %v2807 = vld [vmem:[#allocation2 + $0xf8] sm:$0xff]
          %v2808 = vld [vmem:[%s4] sm:$0x1]
          %v2810 = vlaneseq
          %v2811 = vshrl.u32 %v2810, 7
          %v2812 = vsub.s32 0, %v2811
          %v2813 = vrot.slane %v2808, %v2812
          %v2815 = vadd.f32 %v2776, %v2813
          %v2816 = vadd.f32 %v2777, %v2813
          %v2817 = vadd.f32 %v2778, %v2813
          %v2818 = vadd.f32 %v2779, %v2813
          %v2819 = vadd.f32 %v2780, %v2813
          %v2820 = vadd.f32 %v2781, %v2813
          %v2821 = vadd.f32 %v2782, %v2813
          %v2822 = vadd.f32 %v2783, %v2813
          %v2823 = vadd.f32 %v2784, %v2813
          %v2824 = vadd.f32 %v2785, %v2813
          %v2825 = vadd.f32 %v2786, %v2813
          %v2826 = vadd.f32 %v2787, %v2813
          %v2827 = vadd.f32 %v2788, %v2813
          %v2828 = vadd.f32 %v2789, %v2813
          %v2829 = vadd.f32 %v2790, %v2813
          %v2830 = vadd.f32 %v2791, %v2813
          %v2831 = vadd.f32 %v2792, %v2813
          %v2832 = vadd.f32 %v2793, %v2813
          %v2833 = vadd.f32 %v2794, %v2813
          %v2834 = vadd.f32 %v2795, %v2813
          %v2835 = vadd.f32 %v2796, %v2813
          %v2836 = vadd.f32 %v2797, %v2813
          %v2837 = vadd.f32 %v2798, %v2813
          %v2838 = vadd.f32 %v2799, %v2813
          %v2839 = vadd.f32 %v2800, %v2813
          %v2840 = vadd.f32 %v2801, %v2813
          %v2841 = vadd.f32 %v2802, %v2813
          %v2842 = vadd.f32 %v2803, %v2813
          %v2843 = vadd.f32 %v2804, %v2813
          %v2844 = vadd.f32 %v2805, %v2813
          %v2845 = vadd.f32 %v2806, %v2813
          %v2846 = vadd.f32 %v2807, %v2813
          %2847 = vst [vmem:[%s313] sm:$0xff] %v2815
          %2848 = vst [vmem:[%s313 + $0x8] sm:$0xff] %v2816
          %2849 = vst [vmem:[%s313 + $0x10] sm:$0xff] %v2817
          %2850 = vst [vmem:[%s313 + $0x18] sm:$0xff] %v2818
          %2851 = vst [vmem:[%s313 + $0x20] sm:$0xff] %v2819
          %2852 = vst [vmem:[%s313 + $0x28] sm:$0xff] %v2820
          %2853 = vst [vmem:[%s313 + $0x30] sm:$0xff] %v2821
          %2854 = vst [vmem:[%s313 + $0x38] sm:$0xff] %v2822
          %2855 = vst [vmem:[%s313 + $0x40] sm:$0xff] %v2823
          %2856 = vst [vmem:[%s313 + $0x48] sm:$0xff] %v2824
          %2857 = vst [vmem:[%s313 + $0x50] sm:$0xff] %v2825
          %2858 = vst [vmem:[%s313 + $0x58] sm:$0xff] %v2826
          %2859 = vst [vmem:[%s313 + $0x60] sm:$0xff] %v2827
          %2860 = vst [vmem:[%s313 + $0x68] sm:$0xff] %v2828
          %2861 = vst [vmem:[%s313 + $0x70] sm:$0xff] %v2829
          %2862 = vst [vmem:[%s313 + $0x78] sm:$0xff] %v2830
          %2863 = vst [vmem:[%s313 + $0x80] sm:$0xff] %v2831
          %2864 = vst [vmem:[%s313 + $0x88] sm:$0xff] %v2832
          %2865 = vst [vmem:[%s313 + $0x90] sm:$0xff] %v2833
          %2866 = vst [vmem:[%s313 + $0x98] sm:$0xff] %v2834
          %2867 = vst [vmem:[%s313 + $0xa0] sm:$0xff] %v2835
          %2868 = vst [vmem:[%s313 + $0xa8] sm:$0xff] %v2836
          %2869 = vst [vmem:[%s313 + $0xb0] sm:$0xff] %v2837
          %2870 = vst [vmem:[%s313 + $0xb8] sm:$0xff] %v2838
          %2871 = vst [vmem:[%s313 + $0xc0] sm:$0xff] %v2839
          %2872 = vst [vmem:[%s313 + $0xc8] sm:$0xff] %v2840
          %2873 = vst [vmem:[%s313 + $0xd0] sm:$0xff] %v2841
          %2874 = vst [vmem:[%s313 + $0xd8] sm:$0xff] %v2842
          %2875 = vst [vmem:[%s313 + $0xe0] sm:$0xff] %v2843
          %2876 = vst [vmem:[%s313 + $0xe8] sm:$0xff] %v2844
          %2877 = vst [vmem:[%s313 + $0xf0] sm:$0xff] %v2845
          %2878 = vst [vmem:[%s313 + $0xf8] sm:$0xff] %v2846
        $region60: #{tpu_custom_call.1} parent=39 // pred_fallthru
          _
        %s2879 = sand.u32 %s168, 1
        %s2880 = scalar_lea.sflag [#allocation5], %s2879
        %s2881 = sand.u32 %s168, 1
        %s2882 = smul.addr %s2881, 256
        %s2883 = scalar_lea.vmem [#allocation9], %s2882
        // Predicated region
        $region61: #{tpu_custom_call.1} parent=39 // pred_check
          %p2884 = pneg %p178
        $region62: #{tpu_custom_call.1} parent=39 // pred_check_branch
          %2886 = sbr.rel (%p2884) target = $region64
        $region63: #{tpu_custom_call.1} parent=39 // pred_region
          %s2887 = smul.u32 32, %s27
          %s2889 = ssub.s32 4096, 4096
          %2890 = vsyncadd %s2880, %s2889
          %s2891 = smul.addr %s2887, 128
          %s2892 = scalar_lea.hbm %s5, %s2891
          %s2893 = sshll.u32 %s2883, 4
          %s2894 = int_to_ptr.vmem [resolvable:$true] %s2893
          %2899 = dma.vmem_to_hbm [thread:$0]  %s2894, 4096, %s2892, %s2880, 128, 128, 8
        $region64: #{tpu_custom_call.1} parent=39 // pred_fallthru
          _
      $region40: #{tpu_custom_call.1} parent=5 // pred_fallthru
        _
      %p2900 = scmp.le.s32.totalorder 2, %s18
      // Predicated region
      $region65: #{tpu_custom_call.1} parent=5 // pred_check
        %p2901 = pneg %p2900
      $region66: #{tpu_custom_call.1} parent=5 // pred_check_branch
        %2903 = sbr.rel (%p2901) target = $region68
      $region67: #{tpu_custom_call.1} parent=5 // pred_region
        %s2904 = ssub.s32 %s18, 2
        // Predicated region
        $region69: #{tpu_custom_call.1} parent=67 // pred_check
          %p2905 = pneg %p184
        $region70: #{tpu_custom_call.1} parent=67 // pred_check_branch
          %2907 = sbr.rel (%p2905) target = $region72
        $region71: #{tpu_custom_call.1} parent=67 // pred_region
          %s2908 = sand.u32 %s169, 1
          %s2909 = scalar_lea.sflag [#allocation5], %s2908
          %s2910 = sand.u32 %s169, 1
          %s2911 = smul.addr %s2910, 256
          %s2912 = scalar_lea.vmem [#allocation9], %s2911
          %2913 = dma.done %s2909, 4096
        $region72: #{tpu_custom_call.1} parent=67 // pred_fallthru
          _
      $region68: #{tpu_custom_call.1} parent=5 // pred_fallthru
        _
    $region6: #{tpu_custom_call.1} parent=1 // loop_footer
      %s22 = sadd.s32 1, %s18
    $region7: #{tpu_custom_call.1} parent=1 // loop_footer_branch
      %17 = sbr.rel target = $region3
    $region8: #{tpu_custom_call.1} parent=1 // loop_exit
      _
    %2914 = vsyncpa [#allocation4], 1
    %s2915 = scalar_lea.sflag [#allocation4], 1
    %2916 = vsyncpa %s2915, 1
    %2917 = vsyncpa [#allocation7], 1
    %2918 = vsyncpa [#allocation5], 1
    %s2919 = scalar_lea.sflag [#allocation5], 1
    %2920 = vsyncpa %s2919, 1

</llo_original>
